<compile_context>
chip_gen: v7x
topology: tpu7x:2x2x1
jax: 0.10.0
libtpu: 0.0.40
codegen_flags: <defaults>
</compile_context>

<pallas_src>
import functools

import jax
import jax.numpy as jnp
from jax.experimental import pallas as pl
from jax.experimental.pallas import tpu as pltpu

# ------------------------- config -------------------------
VOCAB = 64
HIDDEN = 32
N_LAYERS = 2
N_HEADS = 4
HEAD_DIM = HIDDEN // N_HEADS
INTERMEDIATE = 4 * HIDDEN
MAX_POS = 16
TYPE_VOCAB = 2
LN_EPS = 1e-12
BATCH = 2
SEQ = 8
LANE = 128  # lane-dense padding for the classifier output

_INV_SQRT2 = 0.7071067811865475


# ------------------------- in-kernel helpers -------------------------
def _layer_norm(h, g, b):
    """LayerNorm with biased variance, eps inside rsqrt (matches HF BERT)."""
    mu = jnp.mean(h, axis=-1, keepdims=True)
    var = jnp.mean(jnp.square(h - mu), axis=-1, keepdims=True)
    return (h - mu) * jax.lax.rsqrt(var + LN_EPS) * g + b


def _gelu(y):
    """Exact (erf) GELU, as in HF BERT."""
    return 0.5 * y * (1.0 + jax.lax.erf(y * _INV_SQRT2))


# ------------------------- fused kernel -------------------------
def _bert_fused_kernel(
    emb_ref, mask_ref,
    emb_ln_g_ref, emb_ln_b_ref,
    wqkv_ref, bqkv_ref, wo_ref, bo_ref, ln1_g_ref, ln1_b_ref,
    wi_ref, bi_ref, wo2_ref, bo2_ref, ln2_g_ref, ln2_b_ref,
    wp_ref, bp_ref, wfc_ref, bfc_ref,
    out_ref,
    ctx_ref,                      # VMEM scratch (B*S, HIDDEN) f32
    *, batch, seq,
):
    # ---- embeddings LayerNorm (no dummy residual) ----
    x = _layer_norm(emb_ref[...], emb_ln_g_ref[...], emb_ln_b_ref[...])
    mask = mask_ref[...]          # (B, S) additive mask (0 or -10000)

    # ---- encoder layers (static unroll; weights are VMEM-resident) ----
    for l in range(N_LAYERS):
        # Fused QKV projection; Q already pre-scaled by 1/sqrt(head_dim).
        qkv = jnp.dot(x, wqkv_ref[l], preferred_element_type=jnp.float32) + bqkv_ref[l]

        # Self-attention: static per-(batch, head) loop on small VMEM tiles.
        # TODO(synk): at real BERT shapes, give this a "parallel" row-tile grid axis
        # (v7x 2-TC sharding) and lane-pack heads; irrelevant at B*S=16.
        for b in range(batch):
            r0 = b * seq
            m_b = mask[b:b + 1, :]                                   # (1, S)
            for h in range(N_HEADS):
                c0 = h * HEAD_DIM
                q_bh = qkv[r0:r0 + seq, c0:c0 + HEAD_DIM]            # (S, d)
                k_bh = qkv[r0:r0 + seq, HIDDEN + c0:HIDDEN + c0 + HEAD_DIM]
                v_bh = qkv[r0:r0 + seq, 2 * HIDDEN + c0:2 * HIDDEN + c0 + HEAD_DIM]
                s = jnp.dot(q_bh, k_bh.T, preferred_element_type=jnp.float32) + m_b
                s = s - jnp.max(s, axis=-1, keepdims=True)
                p = jnp.exp(s)
                p = p * pl.reciprocal(jnp.sum(p, axis=-1, keepdims=True), approx=True)
                ctx_ref[pl.ds(r0, seq), pl.ds(c0, HEAD_DIM)] = jnp.dot(
                    p, v_bh, preferred_element_type=jnp.float32)

        ctx = ctx_ref[...]                                           # (B*S, H)
        attn_out = jnp.dot(ctx, wo_ref[l], preferred_element_type=jnp.float32) + bo_ref[l]
        x = _layer_norm(attn_out + x, ln1_g_ref[l], ln1_b_ref[l])

        inter = jnp.dot(x, wi_ref[l], preferred_element_type=jnp.float32) + bi_ref[l]
        inter = _gelu(inter)
        ffn = jnp.dot(inter, wo2_ref[l], preferred_element_type=jnp.float32) + bo2_ref[l]
        x = _layer_norm(ffn + x, ln2_g_ref[l], ln2_b_ref[l])

    # ---- pooler (tanh dense on CLS tokens) + classifier epilogue ----
    cls = jnp.concatenate([x[b * seq:b * seq + 1, :] for b in range(batch)], axis=0)  # (B, H)
    pooled = jnp.tanh(
        jnp.dot(cls, wp_ref[...], preferred_element_type=jnp.float32) + bp_ref[...])
    logits = jnp.dot(pooled, wfc_ref[...], preferred_element_type=jnp.float32) + bfc_ref[...]
    out_ref[...] = logits.astype(out_ref.dtype)                      # lane-dense (B, 128)


# ------------------------- params -------------------------
def init_params(key):
    keys = iter(jax.random.split(key, 128))

    def nrm(shape):
        return 0.02 * jax.random.normal(next(keys), shape, dtype=jnp.float32)

    p = {
        "word_emb": nrm((VOCAB, HIDDEN)),
        "pos_emb": nrm((MAX_POS, HIDDEN)),
        "type_emb": nrm((TYPE_VOCAB, HIDDEN)),
        "emb_ln_g": jnp.ones((HIDDEN,), jnp.float32),
        "emb_ln_b": jnp.zeros((HIDDEN,), jnp.float32),
        "layers": [],
        "wp": nrm((HIDDEN, HIDDEN)), "bp": jnp.zeros((HIDDEN,), jnp.float32),
        "w_fc": nrm((HIDDEN, 1)), "b_fc": jnp.zeros((1,), jnp.float32),
    }
    for _ in range(N_LAYERS):
        p["layers"].append({
            "wq": nrm((HIDDEN, HIDDEN)), "bq": jnp.zeros((HIDDEN,), jnp.float32),
            "wk": nrm((HIDDEN, HIDDEN)), "bk": jnp.zeros((HIDDEN,), jnp.float32),
            "wv": nrm((HIDDEN, HIDDEN)), "bv": jnp.zeros((HIDDEN,), jnp.float32),
            "wo": nrm((HIDDEN, HIDDEN)), "bo": jnp.zeros((HIDDEN,), jnp.float32),
            "ln1_g": jnp.ones((HIDDEN,), jnp.float32),
            "ln1_b": jnp.zeros((HIDDEN,), jnp.float32),
            "wi": nrm((HIDDEN, INTERMEDIATE)),
            "bi": jnp.zeros((INTERMEDIATE,), jnp.float32),
            "wo2": nrm((INTERMEDIATE, HIDDEN)),
            "bo2": jnp.zeros((HIDDEN,), jnp.float32),
            "ln2_g": jnp.ones((HIDDEN,), jnp.float32),
            "ln2_b": jnp.zeros((HIDDEN,), jnp.float32),
        })
    return p


def _pack_params(params):
    """Stack per-layer weights along a leading layer axis; fuse QKV; fold attention scale;
    lane-pad the (HIDDEN, 1) classifier to (HIDDEN, LANE)."""
    scale = 1.0 / (HEAD_DIM ** 0.5)
    wqkv, bqkv, wo, bo, ln1g, ln1b = [], [], [], [], [], []
    wi, bi, wo2, bo2, ln2g, ln2b = [], [], [], [], [], []
    for L in params["layers"]:
        wqkv.append(jnp.concatenate([L["wq"] * scale, L["wk"], L["wv"]], axis=1))
        bqkv.append(jnp.concatenate([L["bq"] * scale, L["bk"], L["bv"]])[None, :])
        wo.append(L["wo"]);   bo.append(L["bo"][None, :])
        ln1g.append(L["ln1_g"][None, :]); ln1b.append(L["ln1_b"][None, :])
        wi.append(L["wi"]);   bi.append(L["bi"][None, :])
        wo2.append(L["wo2"]); bo2.append(L["bo2"][None, :])
        ln2g.append(L["ln2_g"][None, :]); ln2b.append(L["ln2_b"][None, :])
    stack = lambda xs: jnp.stack(xs, axis=0)

    wfc_pad = jnp.zeros((HIDDEN, LANE), jnp.float32).at[:, :1].set(params["w_fc"])
    bfc_pad = jnp.zeros((1, LANE), jnp.float32).at[:, :1].set(params["b_fc"][None, :])
    return (
        params["emb_ln_g"][None, :], params["emb_ln_b"][None, :],
        stack(wqkv), stack(bqkv), stack(wo), stack(bo), stack(ln1g), stack(ln1b),
        stack(wi), stack(bi), stack(wo2), stack(bo2), stack(ln2g), stack(ln2b),
        params["wp"], params["bp"][None, :],
        wfc_pad, bfc_pad,
    )


# ------------------------- forward -------------------------
def bert_classifier_forward(params, input_ids, attention_mask):
    """Mirrors BertModel(...)[1] (pooled output) -> nn.Linear(hidden, 1). Dropout = identity."""
    B, S = input_ids.shape

    # Embedding gathers stay in plain JAX (table lookups), everything after is one kernel.
    positions = jnp.arange(S, dtype=jnp.int32)
    token_type = jnp.zeros((B, S), jnp.int32)
    emb = (params["word_emb"][input_ids]
           + params["pos_emb"][positions][None, :, :]
           + params["type_emb"][token_type]).reshape(B * S, HIDDEN)

    # HF extended attention mask: (1 - mask) * -10000, per (batch, key).
    add_mask = (1.0 - attention_mask.astype(jnp.float32)) * -10000.0   # (B, S)

    packed = _pack_params(params)
    kernel = functools.partial(_bert_fused_kernel, batch=B, seq=S)

    out = pl.pallas_call(
        kernel,
        out_shape=jax.ShapeDtypeStruct((B, LANE), jnp.float32),
        scratch_shapes=[pltpu.VMEM((B * S, HIDDEN), jnp.float32)],
    )(emb, add_mask, *packed)

    return out[:, :1]                                                 # (B, 1) logits


# ------------------------- main -------------------------
if __name__ == "__main__":
    key = jax.random.PRNGKey(0)
    pkey, ikey = jax.random.split(key)
    params = init_params(pkey)

    input_ids = jax.random.randint(ikey, (BATCH, SEQ), 0, VOCAB, dtype=jnp.int32)
    # attention mask: 1 = real token, 0 = padding (pad last 2 tokens of sample 1)
    mask = jnp.ones((BATCH, SEQ), jnp.int32).at[1, SEQ - 2:].set(0)

    out = jax.jit(bert_classifier_forward)(params, input_ids, mask)
    out = jax.block_until_ready(out)
    assert out.shape == (BATCH, 1) and out.dtype == jnp.float32
    print("KERNEL_OK")
</pallas_src>

<mosaic_0001>
module attributes {stable_mosaic.version = 11 : i64} {
  func.func @_bert_fused_kernel(%arg0: memref<16x32xf32, #tpu.memory_space<vmem>>, %arg1: memref<2x8xf32, #tpu.memory_space<vmem>>, %arg2: memref<1x32xf32, #tpu.memory_space<vmem>>, %arg3: memref<1x32xf32, #tpu.memory_space<vmem>>, %arg4: memref<2x32x96xf32, #tpu.memory_space<vmem>>, %arg5: memref<2x1x96xf32, #tpu.memory_space<vmem>>, %arg6: memref<2x32x32xf32, #tpu.memory_space<vmem>>, %arg7: memref<2x1x32xf32, #tpu.memory_space<vmem>>, %arg8: memref<2x1x32xf32, #tpu.memory_space<vmem>>, %arg9: memref<2x1x32xf32, #tpu.memory_space<vmem>>, %arg10: memref<2x32x128xf32, #tpu.memory_space<vmem>>, %arg11: memref<2x1x128xf32, #tpu.memory_space<vmem>>, %arg12: memref<2x128x32xf32, #tpu.memory_space<vmem>>, %arg13: memref<2x1x32xf32, #tpu.memory_space<vmem>>, %arg14: memref<2x1x32xf32, #tpu.memory_space<vmem>>, %arg15: memref<2x1x32xf32, #tpu.memory_space<vmem>>, %arg16: memref<32x32xf32, #tpu.memory_space<vmem>>, %arg17: memref<1x32xf32, #tpu.memory_space<vmem>>, %arg18: memref<32x128xf32, #tpu.memory_space<vmem>>, %arg19: memref<1x128xf32, #tpu.memory_space<vmem>>, %arg20: memref<2x128xf32, #tpu.memory_space<vmem>>, %arg21: memref<16x32xf32, #tpu.memory_space<vmem>>) attributes {dimension_semantics = [], scalar_prefetch = 0 : i64, scratch_operands = 1 : i64, tpu.core_type = #tpu.core_type<tc>} {
    %c0 = arith.constant 0 : index
    %c0_0 = arith.constant 0 : index
    %0 = vector.load %arg0[%c0, %c0_0] : memref<16x32xf32, #tpu.memory_space<vmem>>, vector<16x32xf32>
    %c0_1 = arith.constant 0 : index
    %c0_2 = arith.constant 0 : index
    %1 = vector.load %arg2[%c0_1, %c0_2] : memref<1x32xf32, #tpu.memory_space<vmem>>, vector<1x32xf32>
    %c0_3 = arith.constant 0 : index
    %c0_4 = arith.constant 0 : index
    %2 = vector.load %arg3[%c0_3, %c0_4] : memref<1x32xf32, #tpu.memory_space<vmem>>, vector<1x32xf32>
    %cst = arith.constant dense<0.000000e+00> : vector<16xf32>
    %3 = vector.multi_reduction <add>, %0, %cst [1] : vector<16x32xf32> to vector<16xf32>
    %4 = vector.shape_cast %3 : vector<16xf32> to vector<16x1xf32>
    %cst_5 = arith.constant 3.200000e+01 : f32
    %5 = vector.broadcast %cst_5 : f32 to vector<16x1xf32>
    %6 = arith.divf %4, %5 : vector<16x1xf32>
    %7 = vector.broadcast %6 : vector<16x1xf32> to vector<16x32xf32>
    %8 = arith.subf %0, %7 : vector<16x32xf32>
    %9 = arith.mulf %8, %8 : vector<16x32xf32>
    %cst_6 = arith.constant dense<0.000000e+00> : vector<16xf32>
    %10 = vector.multi_reduction <add>, %9, %cst_6 [1] : vector<16x32xf32> to vector<16xf32>
    %11 = vector.shape_cast %10 : vector<16xf32> to vector<16x1xf32>
    %cst_7 = arith.constant 3.200000e+01 : f32
    %12 = vector.broadcast %cst_7 : f32 to vector<16x1xf32>
    %13 = arith.divf %11, %12 : vector<16x1xf32>
    %14 = vector.broadcast %6 : vector<16x1xf32> to vector<16x32xf32>
    %15 = arith.subf %0, %14 : vector<16x32xf32>
    %cst_8 = arith.constant 9.99999996E-13 : f32
    %16 = vector.broadcast %cst_8 : f32 to vector<16x1xf32>
    %17 = arith.addf %13, %16 : vector<16x1xf32>
    %18 = math.rsqrt %17 : vector<16x1xf32>
    %19 = vector.broadcast %18 : vector<16x1xf32> to vector<16x32xf32>
    %20 = arith.mulf %15, %19 : vector<16x32xf32>
    %21 = vector.broadcast %1 : vector<1x32xf32> to vector<16x32xf32>
    %22 = arith.mulf %20, %21 : vector<16x32xf32>
    %23 = vector.broadcast %2 : vector<1x32xf32> to vector<16x32xf32>
    %24 = arith.addf %22, %23 : vector<16x32xf32>
    %c0_9 = arith.constant 0 : index
    %c0_10 = arith.constant 0 : index
    %25 = vector.load %arg1[%c0_9, %c0_10] : memref<2x8xf32, #tpu.memory_space<vmem>>, vector<2x8xf32>
    %c0_11 = arith.constant 0 : index
    %c0_12 = arith.constant 0 : index
    %c0_13 = arith.constant 0 : index
    %26 = vector.load %arg4[%c0_11, %c0_12, %c0_13] : memref<2x32x96xf32, #tpu.memory_space<vmem>>, vector<1x32x96xf32>
    %27 = vector.shape_cast %26 : vector<1x32x96xf32> to vector<32x96xf32>
    %cst_14 = arith.constant dense<0.000000e+00> : vector<16x96xf32>
    %28 = tpu.matmul %24, %27, %cst_14 {dimension_numbers = #tpu.dot_dimension_numbers<[1], [0], [0], [1], [0, 0, 1, 1], [], []>} : vector<16x32xf32>, vector<32x96xf32>, vector<16x96xf32> -> vector<16x96xf32>
    %c0_15 = arith.constant 0 : index
    %c0_16 = arith.constant 0 : index
    %c0_17 = arith.constant 0 : index
    %29 = vector.load %arg5[%c0_15, %c0_16, %c0_17] : memref<2x1x96xf32, #tpu.memory_space<vmem>>, vector<1x1x96xf32>
    %30 = vector.shape_cast %29 : vector<1x1x96xf32> to vector<1x96xf32>
    %31 = vector.broadcast %30 : vector<1x96xf32> to vector<16x96xf32>
    %32 = arith.addf %28, %31 : vector<16x96xf32>
    %33 = vector.extract_strided_slice %25 {offsets = [0, 0], sizes = [1, 8], strides = [1, 1]} : vector<2x8xf32> to vector<1x8xf32>
    %34 = vector.extract_strided_slice %32 {offsets = [0, 0], sizes = [8, 8], strides = [1, 1]} : vector<16x96xf32> to vector<8x8xf32>
    %35 = vector.extract_strided_slice %32 {offsets = [0, 32], sizes = [8, 8], strides = [1, 1]} : vector<16x96xf32> to vector<8x8xf32>
    %36 = vector.extract_strided_slice %32 {offsets = [0, 64], sizes = [8, 8], strides = [1, 1]} : vector<16x96xf32> to vector<8x8xf32>
    %37 = tpu.transpose %35, [1, 0] : vector<8x8xf32> -> vector<8x8xf32>
    %cst_18 = arith.constant dense<0.000000e+00> : vector<8x8xf32>
    %38 = tpu.matmul %34, %37, %cst_18 {dimension_numbers = #tpu.dot_dimension_numbers<[1], [0], [0], [1], [0, 0, 1, 1], [], []>} : vector<8x8xf32>, vector<8x8xf32>, vector<8x8xf32> -> vector<8x8xf32>
    %39 = vector.broadcast %33 : vector<1x8xf32> to vector<8x8xf32>
    %40 = arith.addf %38, %39 : vector<8x8xf32>
    %cst_19 = arith.constant dense<0xFF800000> : vector<8xf32>
    %41 = vector.multi_reduction <maximumf>, %40, %cst_19 [1] : vector<8x8xf32> to vector<8xf32>
    %42 = vector.shape_cast %41 : vector<8xf32> to vector<8x1xf32>
    %43 = vector.broadcast %42 : vector<8x1xf32> to vector<8x8xf32>
    %44 = arith.subf %40, %43 : vector<8x8xf32>
    %45 = math.exp %44 : vector<8x8xf32>
    %cst_20 = arith.constant dense<0.000000e+00> : vector<8xf32>
    %46 = vector.multi_reduction <add>, %45, %cst_20 [1] : vector<8x8xf32> to vector<8xf32>
    %47 = vector.shape_cast %46 : vector<8xf32> to vector<8x1xf32>
    %48 = tpu.reciprocal %47 {approx = true} : vector<8x1xf32> -> vector<8x1xf32>
    %49 = vector.broadcast %48 : vector<8x1xf32> to vector<8x8xf32>
    %50 = arith.mulf %45, %49 : vector<8x8xf32>
    %cst_21 = arith.constant dense<0.000000e+00> : vector<8x8xf32>
    %51 = tpu.matmul %50, %36, %cst_21 {dimension_numbers = #tpu.dot_dimension_numbers<[1], [0], [0], [1], [0, 0, 1, 1], [], []>} : vector<8x8xf32>, vector<8x8xf32>, vector<8x8xf32> -> vector<8x8xf32>
    %c0_22 = arith.constant 0 : index
    %c0_23 = arith.constant 0 : index
    %52 = vector.load %arg21[%c0_22, %c0_23] : memref<16x32xf32, #tpu.memory_space<vmem>>, vector<8x8xf32>
    tpu.vector_store %arg21[%c0_22, %c0_23], %51 {strides = array<i32>} : memref<16x32xf32, #tpu.memory_space<vmem>>, vector<8x8xf32>,
    %53 = vector.extract_strided_slice %32 {offsets = [0, 8], sizes = [8, 8], strides = [1, 1]} : vector<16x96xf32> to vector<8x8xf32>
    %54 = vector.extract_strided_slice %32 {offsets = [0, 40], sizes = [8, 8], strides = [1, 1]} : vector<16x96xf32> to vector<8x8xf32>
    %55 = vector.extract_strided_slice %32 {offsets = [0, 72], sizes = [8, 8], strides = [1, 1]} : vector<16x96xf32> to vector<8x8xf32>
    %56 = tpu.transpose %54, [1, 0] : vector<8x8xf32> -> vector<8x8xf32>
    %cst_24 = arith.constant dense<0.000000e+00> : vector<8x8xf32>
    %57 = tpu.matmul %53, %56, %cst_24 {dimension_numbers = #tpu.dot_dimension_numbers<[1], [0], [0], [1], [0, 0, 1, 1], [], []>} : vector<8x8xf32>, vector<8x8xf32>, vector<8x8xf32> -> vector<8x8xf32>
    %58 = vector.broadcast %33 : vector<1x8xf32> to vector<8x8xf32>
    %59 = arith.addf %57, %58 : vector<8x8xf32>
    %cst_25 = arith.constant dense<0xFF800000> : vector<8xf32>
    %60 = vector.multi_reduction <maximumf>, %59, %cst_25 [1] : vector<8x8xf32> to vector<8xf32>
    %61 = vector.shape_cast %60 : vector<8xf32> to vector<8x1xf32>
    %62 = vector.broadcast %61 : vector<8x1xf32> to vector<8x8xf32>
    %63 = arith.subf %59, %62 : vector<8x8xf32>
    %64 = math.exp %63 : vector<8x8xf32>
    %cst_26 = arith.constant dense<0.000000e+00> : vector<8xf32>
    %65 = vector.multi_reduction <add>, %64, %cst_26 [1] : vector<8x8xf32> to vector<8xf32>
    %66 = vector.shape_cast %65 : vector<8xf32> to vector<8x1xf32>
    %67 = tpu.reciprocal %66 {approx = true} : vector<8x1xf32> -> vector<8x1xf32>
    %68 = vector.broadcast %67 : vector<8x1xf32> to vector<8x8xf32>
    %69 = arith.mulf %64, %68 : vector<8x8xf32>
    %cst_27 = arith.constant dense<0.000000e+00> : vector<8x8xf32>
    %70 = tpu.matmul %69, %55, %cst_27 {dimension_numbers = #tpu.dot_dimension_numbers<[1], [0], [0], [1], [0, 0, 1, 1], [], []>} : vector<8x8xf32>, vector<8x8xf32>, vector<8x8xf32> -> vector<8x8xf32>
    %c0_28 = arith.constant 0 : index
    %c8 = arith.constant 8 : index
    %71 = vector.load %arg21[%c0_28, %c8] : memref<16x32xf32, #tpu.memory_space<vmem>>, vector<8x8xf32>
    tpu.vector_store %arg21[%c0_28, %c8], %70 {strides = array<i32>} : memref<16x32xf32, #tpu.memory_space<vmem>>, vector<8x8xf32>,
    %72 = vector.extract_strided_slice %32 {offsets = [0, 16], sizes = [8, 8], strides = [1, 1]} : vector<16x96xf32> to vector<8x8xf32>
    %73 = vector.extract_strided_slice %32 {offsets = [0, 48], sizes = [8, 8], strides = [1, 1]} : vector<16x96xf32> to vector<8x8xf32>
    %74 = vector.extract_strided_slice %32 {offsets = [0, 80], sizes = [8, 8], strides = [1, 1]} : vector<16x96xf32> to vector<8x8xf32>
    %75 = tpu.transpose %73, [1, 0] : vector<8x8xf32> -> vector<8x8xf32>
    %cst_29 = arith.constant dense<0.000000e+00> : vector<8x8xf32>
    %76 = tpu.matmul %72, %75, %cst_29 {dimension_numbers = #tpu.dot_dimension_numbers<[1], [0], [0], [1], [0, 0, 1, 1], [], []>} : vector<8x8xf32>, vector<8x8xf32>, vector<8x8xf32> -> vector<8x8xf32>
    %77 = vector.broadcast %33 : vector<1x8xf32> to vector<8x8xf32>
    %78 = arith.addf %76, %77 : vector<8x8xf32>
    %cst_30 = arith.constant dense<0xFF800000> : vector<8xf32>
    %79 = vector.multi_reduction <maximumf>, %78, %cst_30 [1] : vector<8x8xf32> to vector<8xf32>
    %80 = vector.shape_cast %79 : vector<8xf32> to vector<8x1xf32>
    %81 = vector.broadcast %80 : vector<8x1xf32> to vector<8x8xf32>
    %82 = arith.subf %78, %81 : vector<8x8xf32>
    %83 = math.exp %82 : vector<8x8xf32>
    %cst_31 = arith.constant dense<0.000000e+00> : vector<8xf32>
    %84 = vector.multi_reduction <add>, %83, %cst_31 [1] : vector<8x8xf32> to vector<8xf32>
    %85 = vector.shape_cast %84 : vector<8xf32> to vector<8x1xf32>
    %86 = tpu.reciprocal %85 {approx = true} : vector<8x1xf32> -> vector<8x1xf32>
    %87 = vector.broadcast %86 : vector<8x1xf32> to vector<8x8xf32>
    %88 = arith.mulf %83, %87 : vector<8x8xf32>
    %cst_32 = arith.constant dense<0.000000e+00> : vector<8x8xf32>
    %89 = tpu.matmul %88, %74, %cst_32 {dimension_numbers = #tpu.dot_dimension_numbers<[1], [0], [0], [1], [0, 0, 1, 1], [], []>} : vector<8x8xf32>, vector<8x8xf32>, vector<8x8xf32> -> vector<8x8xf32>
    %c0_33 = arith.constant 0 : index
    %c16 = arith.constant 16 : index
    %90 = vector.load %arg21[%c0_33, %c16] : memref<16x32xf32, #tpu.memory_space<vmem>>, vector<8x8xf32>
    tpu.vector_store %arg21[%c0_33, %c16], %89 {strides = array<i32>} : memref<16x32xf32, #tpu.memory_space<vmem>>, vector<8x8xf32>,
    %91 = vector.extract_strided_slice %32 {offsets = [0, 24], sizes = [8, 8], strides = [1, 1]} : vector<16x96xf32> to vector<8x8xf32>
    %92 = vector.extract_strided_slice %32 {offsets = [0, 56], sizes = [8, 8], strides = [1, 1]} : vector<16x96xf32> to vector<8x8xf32>
    %93 = vector.extract_strided_slice %32 {offsets = [0, 88], sizes = [8, 8], strides = [1, 1]} : vector<16x96xf32> to vector<8x8xf32>
    %94 = tpu.transpose %92, [1, 0] : vector<8x8xf32> -> vector<8x8xf32>
    %cst_34 = arith.constant dense<0.000000e+00> : vector<8x8xf32>
    %95 = tpu.matmul %91, %94, %cst_34 {dimension_numbers = #tpu.dot_dimension_numbers<[1], [0], [0], [1], [0, 0, 1, 1], [], []>} : vector<8x8xf32>, vector<8x8xf32>, vector<8x8xf32> -> vector<8x8xf32>
    %96 = vector.broadcast %33 : vector<1x8xf32> to vector<8x8xf32>
    %97 = arith.addf %95, %96 : vector<8x8xf32>
    %cst_35 = arith.constant dense<0xFF800000> : vector<8xf32>
    %98 = vector.multi_reduction <maximumf>, %97, %cst_35 [1] : vector<8x8xf32> to vector<8xf32>
    %99 = vector.shape_cast %98 : vector<8xf32> to vector<8x1xf32>
    %100 = vector.broadcast %99 : vector<8x1xf32> to vector<8x8xf32>
    %101 = arith.subf %97, %100 : vector<8x8xf32>
    %102 = math.exp %101 : vector<8x8xf32>
    %cst_36 = arith.constant dense<0.000000e+00> : vector<8xf32>
    %103 = vector.multi_reduction <add>, %102, %cst_36 [1] : vector<8x8xf32> to vector<8xf32>
    %104 = vector.shape_cast %103 : vector<8xf32> to vector<8x1xf32>
    %105 = tpu.reciprocal %104 {approx = true} : vector<8x1xf32> -> vector<8x1xf32>
    %106 = vector.broadcast %105 : vector<8x1xf32> to vector<8x8xf32>
    %107 = arith.mulf %102, %106 : vector<8x8xf32>
    %cst_37 = arith.constant dense<0.000000e+00> : vector<8x8xf32>
    %108 = tpu.matmul %107, %93, %cst_37 {dimension_numbers = #tpu.dot_dimension_numbers<[1], [0], [0], [1], [0, 0, 1, 1], [], []>} : vector<8x8xf32>, vector<8x8xf32>, vector<8x8xf32> -> vector<8x8xf32>
    %c0_38 = arith.constant 0 : index
    %c24 = arith.constant 24 : index
    %109 = vector.load %arg21[%c0_38, %c24] : memref<16x32xf32, #tpu.memory_space<vmem>>, vector<8x8xf32>
    tpu.vector_store %arg21[%c0_38, %c24], %108 {strides = array<i32>} : memref<16x32xf32, #tpu.memory_space<vmem>>, vector<8x8xf32>,
    %110 = vector.extract_strided_slice %25 {offsets = [1, 0], sizes = [1, 8], strides = [1, 1]} : vector<2x8xf32> to vector<1x8xf32>
    %111 = vector.extract_strided_slice %32 {offsets = [8, 0], sizes = [8, 8], strides = [1, 1]} : vector<16x96xf32> to vector<8x8xf32>
    %112 = vector.extract_strided_slice %32 {offsets = [8, 32], sizes = [8, 8], strides = [1, 1]} : vector<16x96xf32> to vector<8x8xf32>
    %113 = vector.extract_strided_slice %32 {offsets = [8, 64], sizes = [8, 8], strides = [1, 1]} : vector<16x96xf32> to vector<8x8xf32>
    %114 = tpu.transpose %112, [1, 0] : vector<8x8xf32> -> vector<8x8xf32>
    %cst_39 = arith.constant dense<0.000000e+00> : vector<8x8xf32>
    %115 = tpu.matmul %111, %114, %cst_39 {dimension_numbers = #tpu.dot_dimension_numbers<[1], [0], [0], [1], [0, 0, 1, 1], [], []>} : vector<8x8xf32>, vector<8x8xf32>, vector<8x8xf32> -> vector<8x8xf32>
    %116 = vector.broadcast %110 : vector<1x8xf32> to vector<8x8xf32>
    %117 = arith.addf %115, %116 : vector<8x8xf32>
    %cst_40 = arith.constant dense<0xFF800000> : vector<8xf32>
    %118 = vector.multi_reduction <maximumf>, %117, %cst_40 [1] : vector<8x8xf32> to vector<8xf32>
    %119 = vector.shape_cast %118 : vector<8xf32> to vector<8x1xf32>
    %120 = vector.broadcast %119 : vector<8x1xf32> to vector<8x8xf32>
    %121 = arith.subf %117, %120 : vector<8x8xf32>
    %122 = math.exp %121 : vector<8x8xf32>
    %cst_41 = arith.constant dense<0.000000e+00> : vector<8xf32>
    %123 = vector.multi_reduction <add>, %122, %cst_41 [1] : vector<8x8xf32> to vector<8xf32>
    %124 = vector.shape_cast %123 : vector<8xf32> to vector<8x1xf32>
    %125 = tpu.reciprocal %124 {approx = true} : vector<8x1xf32> -> vector<8x1xf32>
    %126 = vector.broadcast %125 : vector<8x1xf32> to vector<8x8xf32>
    %127 = arith.mulf %122, %126 : vector<8x8xf32>
    %cst_42 = arith.constant dense<0.000000e+00> : vector<8x8xf32>
    %128 = tpu.matmul %127, %113, %cst_42 {dimension_numbers = #tpu.dot_dimension_numbers<[1], [0], [0], [1], [0, 0, 1, 1], [], []>} : vector<8x8xf32>, vector<8x8xf32>, vector<8x8xf32> -> vector<8x8xf32>
    %c8_43 = arith.constant 8 : index
    %c0_44 = arith.constant 0 : index
    %129 = vector.load %arg21[%c8_43, %c0_44] : memref<16x32xf32, #tpu.memory_space<vmem>>, vector<8x8xf32>
    tpu.vector_store %arg21[%c8_43, %c0_44], %128 {strides = array<i32>} : memref<16x32xf32, #tpu.memory_space<vmem>>, vector<8x8xf32>,
    %130 = vector.extract_strided_slice %32 {offsets = [8, 8], sizes = [8, 8], strides = [1, 1]} : vector<16x96xf32> to vector<8x8xf32>
    %131 = vector.extract_strided_slice %32 {offsets = [8, 40], sizes = [8, 8], strides = [1, 1]} : vector<16x96xf32> to vector<8x8xf32>
    %132 = vector.extract_strided_slice %32 {offsets = [8, 72], sizes = [8, 8], strides = [1, 1]} : vector<16x96xf32> to vector<8x8xf32>
    %133 = tpu.transpose %131, [1, 0] : vector<8x8xf32> -> vector<8x8xf32>
    %cst_45 = arith.constant dense<0.000000e+00> : vector<8x8xf32>
    %134 = tpu.matmul %130, %133, %cst_45 {dimension_numbers = #tpu.dot_dimension_numbers<[1], [0], [0], [1], [0, 0, 1, 1], [], []>} : vector<8x8xf32>, vector<8x8xf32>, vector<8x8xf32> -> vector<8x8xf32>
    %135 = vector.broadcast %110 : vector<1x8xf32> to vector<8x8xf32>
    %136 = arith.addf %134, %135 : vector<8x8xf32>
    %cst_46 = arith.constant dense<0xFF800000> : vector<8xf32>
    %137 = vector.multi_reduction <maximumf>, %136, %cst_46 [1] : vector<8x8xf32> to vector<8xf32>
    %138 = vector.shape_cast %137 : vector<8xf32> to vector<8x1xf32>
    %139 = vector.broadcast %138 : vector<8x1xf32> to vector<8x8xf32>
    %140 = arith.subf %136, %139 : vector<8x8xf32>
    %141 = math.exp %140 : vector<8x8xf32>
    %cst_47 = arith.constant dense<0.000000e+00> : vector<8xf32>
    %142 = vector.multi_reduction <add>, %141, %cst_47 [1] : vector<8x8xf32> to vector<8xf32>
    %143 = vector.shape_cast %142 : vector<8xf32> to vector<8x1xf32>
    %144 = tpu.reciprocal %143 {approx = true} : vector<8x1xf32> -> vector<8x1xf32>
    %145 = vector.broadcast %144 : vector<8x1xf32> to vector<8x8xf32>
    %146 = arith.mulf %141, %145 : vector<8x8xf32>
    %cst_48 = arith.constant dense<0.000000e+00> : vector<8x8xf32>
    %147 = tpu.matmul %146, %132, %cst_48 {dimension_numbers = #tpu.dot_dimension_numbers<[1], [0], [0], [1], [0, 0, 1, 1], [], []>} : vector<8x8xf32>, vector<8x8xf32>, vector<8x8xf32> -> vector<8x8xf32>
    %c8_49 = arith.constant 8 : index
    %c8_50 = arith.constant 8 : index
    %148 = vector.load %arg21[%c8_49, %c8_50] : memref<16x32xf32, #tpu.memory_space<vmem>>, vector<8x8xf32>
    tpu.vector_store %arg21[%c8_49, %c8_50], %147 {strides = array<i32>} : memref<16x32xf32, #tpu.memory_space<vmem>>, vector<8x8xf32>,
    %149 = vector.extract_strided_slice %32 {offsets = [8, 16], sizes = [8, 8], strides = [1, 1]} : vector<16x96xf32> to vector<8x8xf32>
    %150 = vector.extract_strided_slice %32 {offsets = [8, 48], sizes = [8, 8], strides = [1, 1]} : vector<16x96xf32> to vector<8x8xf32>
    %151 = vector.extract_strided_slice %32 {offsets = [8, 80], sizes = [8, 8], strides = [1, 1]} : vector<16x96xf32> to vector<8x8xf32>
    %152 = tpu.transpose %150, [1, 0] : vector<8x8xf32> -> vector<8x8xf32>
    %cst_51 = arith.constant dense<0.000000e+00> : vector<8x8xf32>
    %153 = tpu.matmul %149, %152, %cst_51 {dimension_numbers = #tpu.dot_dimension_numbers<[1], [0], [0], [1], [0, 0, 1, 1], [], []>} : vector<8x8xf32>, vector<8x8xf32>, vector<8x8xf32> -> vector<8x8xf32>
    %154 = vector.broadcast %110 : vector<1x8xf32> to vector<8x8xf32>
    %155 = arith.addf %153, %154 : vector<8x8xf32>
    %cst_52 = arith.constant dense<0xFF800000> : vector<8xf32>
    %156 = vector.multi_reduction <maximumf>, %155, %cst_52 [1] : vector<8x8xf32> to vector<8xf32>
    %157 = vector.shape_cast %156 : vector<8xf32> to vector<8x1xf32>
    %158 = vector.broadcast %157 : vector<8x1xf32> to vector<8x8xf32>
    %159 = arith.subf %155, %158 : vector<8x8xf32>
    %160 = math.exp %159 : vector<8x8xf32>
    %cst_53 = arith.constant dense<0.000000e+00> : vector<8xf32>
    %161 = vector.multi_reduction <add>, %160, %cst_53 [1] : vector<8x8xf32> to vector<8xf32>
    %162 = vector.shape_cast %161 : vector<8xf32> to vector<8x1xf32>
    %163 = tpu.reciprocal %162 {approx = true} : vector<8x1xf32> -> vector<8x1xf32>
    %164 = vector.broadcast %163 : vector<8x1xf32> to vector<8x8xf32>
    %165 = arith.mulf %160, %164 : vector<8x8xf32>
    %cst_54 = arith.constant dense<0.000000e+00> : vector<8x8xf32>
    %166 = tpu.matmul %165, %151, %cst_54 {dimension_numbers = #tpu.dot_dimension_numbers<[1], [0], [0], [1], [0, 0, 1, 1], [], []>} : vector<8x8xf32>, vector<8x8xf32>, vector<8x8xf32> -> vector<8x8xf32>
    %c8_55 = arith.constant 8 : index
    %c16_56 = arith.constant 16 : index
    %167 = vector.load %arg21[%c8_55, %c16_56] : memref<16x32xf32, #tpu.memory_space<vmem>>, vector<8x8xf32>
    tpu.vector_store %arg21[%c8_55, %c16_56], %166 {strides = array<i32>} : memref<16x32xf32, #tpu.memory_space<vmem>>, vector<8x8xf32>,
    %168 = vector.extract_strided_slice %32 {offsets = [8, 24], sizes = [8, 8], strides = [1, 1]} : vector<16x96xf32> to vector<8x8xf32>
    %169 = vector.extract_strided_slice %32 {offsets = [8, 56], sizes = [8, 8], strides = [1, 1]} : vector<16x96xf32> to vector<8x8xf32>
    %170 = vector.extract_strided_slice %32 {offsets = [8, 88], sizes = [8, 8], strides = [1, 1]} : vector<16x96xf32> to vector<8x8xf32>
    %171 = tpu.transpose %169, [1, 0] : vector<8x8xf32> -> vector<8x8xf32>
    %cst_57 = arith.constant dense<0.000000e+00> : vector<8x8xf32>
    %172 = tpu.matmul %168, %171, %cst_57 {dimension_numbers = #tpu.dot_dimension_numbers<[1], [0], [0], [1], [0, 0, 1, 1], [], []>} : vector<8x8xf32>, vector<8x8xf32>, vector<8x8xf32> -> vector<8x8xf32>
    %173 = vector.broadcast %110 : vector<1x8xf32> to vector<8x8xf32>
    %174 = arith.addf %172, %173 : vector<8x8xf32>
    %cst_58 = arith.constant dense<0xFF800000> : vector<8xf32>
    %175 = vector.multi_reduction <maximumf>, %174, %cst_58 [1] : vector<8x8xf32> to vector<8xf32>
    %176 = vector.shape_cast %175 : vector<8xf32> to vector<8x1xf32>
    %177 = vector.broadcast %176 : vector<8x1xf32> to vector<8x8xf32>
    %178 = arith.subf %174, %177 : vector<8x8xf32>
    %179 = math.exp %178 : vector<8x8xf32>
    %cst_59 = arith.constant dense<0.000000e+00> : vector<8xf32>
    %180 = vector.multi_reduction <add>, %179, %cst_59 [1] : vector<8x8xf32> to vector<8xf32>
    %181 = vector.shape_cast %180 : vector<8xf32> to vector<8x1xf32>
    %182 = tpu.reciprocal %181 {approx = true} : vector<8x1xf32> -> vector<8x1xf32>
    %183 = vector.broadcast %182 : vector<8x1xf32> to vector<8x8xf32>
    %184 = arith.mulf %179, %183 : vector<8x8xf32>
    %cst_60 = arith.constant dense<0.000000e+00> : vector<8x8xf32>
    %185 = tpu.matmul %184, %170, %cst_60 {dimension_numbers = #tpu.dot_dimension_numbers<[1], [0], [0], [1], [0, 0, 1, 1], [], []>} : vector<8x8xf32>, vector<8x8xf32>, vector<8x8xf32> -> vector<8x8xf32>
    %c8_61 = arith.constant 8 : index
    %c24_62 = arith.constant 24 : index
    %186 = vector.load %arg21[%c8_61, %c24_62] : memref<16x32xf32, #tpu.memory_space<vmem>>, vector<8x8xf32>
    tpu.vector_store %arg21[%c8_61, %c24_62], %185 {strides = array<i32>} : memref<16x32xf32, #tpu.memory_space<vmem>>, vector<8x8xf32>,
    %c0_63 = arith.constant 0 : index
    %c0_64 = arith.constant 0 : index
    %187 = vector.load %arg21[%c0_63, %c0_64] : memref<16x32xf32, #tpu.memory_space<vmem>>, vector<16x32xf32>
    %c0_65 = arith.constant 0 : index
    %c0_66 = arith.constant 0 : index
    %c0_67 = arith.constant 0 : index
    %188 = vector.load %arg6[%c0_65, %c0_66, %c0_67] : memref<2x32x32xf32, #tpu.memory_space<vmem>>, vector<1x32x32xf32>
    %189 = vector.shape_cast %188 : vector<1x32x32xf32> to vector<32x32xf32>
    %cst_68 = arith.constant dense<0.000000e+00> : vector<16x32xf32>
    %190 = tpu.matmul %187, %189, %cst_68 {dimension_numbers = #tpu.dot_dimension_numbers<[1], [0], [0], [1], [0, 0, 1, 1], [], []>} : vector<16x32xf32>, vector<32x32xf32>, vector<16x32xf32> -> vector<16x32xf32>
    %c0_69 = arith.constant 0 : index
    %c0_70 = arith.constant 0 : index
    %c0_71 = arith.constant 0 : index
    %191 = vector.load %arg7[%c0_69, %c0_70, %c0_71] : memref<2x1x32xf32, #tpu.memory_space<vmem>>, vector<1x1x32xf32>
    %192 = vector.shape_cast %191 : vector<1x1x32xf32> to vector<1x32xf32>
    %193 = vector.broadcast %192 : vector<1x32xf32> to vector<16x32xf32>
    %194 = arith.addf %190, %193 : vector<16x32xf32>
    %195 = arith.addf %194, %24 : vector<16x32xf32>
    %c0_72 = arith.constant 0 : index
    %c0_73 = arith.constant 0 : index
    %c0_74 = arith.constant 0 : index
    %196 = vector.load %arg8[%c0_72, %c0_73, %c0_74] : memref<2x1x32xf32, #tpu.memory_space<vmem>>, vector<1x1x32xf32>
    %197 = vector.shape_cast %196 : vector<1x1x32xf32> to vector<1x32xf32>
    %c0_75 = arith.constant 0 : index
    %c0_76 = arith.constant 0 : index
    %c0_77 = arith.constant 0 : index
    %198 = vector.load %arg9[%c0_75, %c0_76, %c0_77] : memref<2x1x32xf32, #tpu.memory_space<vmem>>, vector<1x1x32xf32>
    %199 = vector.shape_cast %198 : vector<1x1x32xf32> to vector<1x32xf32>
    %cst_78 = arith.constant dense<0.000000e+00> : vector<16xf32>
    %200 = vector.multi_reduction <add>, %195, %cst_78 [1] : vector<16x32xf32> to vector<16xf32>
    %201 = vector.shape_cast %200 : vector<16xf32> to vector<16x1xf32>
    %cst_79 = arith.constant 3.200000e+01 : f32
    %202 = vector.broadcast %cst_79 : f32 to vector<16x1xf32>
    %203 = arith.divf %201, %202 : vector<16x1xf32>
    %204 = vector.broadcast %203 : vector<16x1xf32> to vector<16x32xf32>
    %205 = arith.subf %195, %204 : vector<16x32xf32>
    %206 = arith.mulf %205, %205 : vector<16x32xf32>
    %cst_80 = arith.constant dense<0.000000e+00> : vector<16xf32>
    %207 = vector.multi_reduction <add>, %206, %cst_80 [1] : vector<16x32xf32> to vector<16xf32>
    %208 = vector.shape_cast %207 : vector<16xf32> to vector<16x1xf32>
    %cst_81 = arith.constant 3.200000e+01 : f32
    %209 = vector.broadcast %cst_81 : f32 to vector<16x1xf32>
    %210 = arith.divf %208, %209 : vector<16x1xf32>
    %211 = vector.broadcast %203 : vector<16x1xf32> to vector<16x32xf32>
    %212 = arith.subf %195, %211 : vector<16x32xf32>
    %cst_82 = arith.constant 9.99999996E-13 : f32
    %213 = vector.broadcast %cst_82 : f32 to vector<16x1xf32>
    %214 = arith.addf %210, %213 : vector<16x1xf32>
    %215 = math.rsqrt %214 : vector<16x1xf32>
    %216 = vector.broadcast %215 : vector<16x1xf32> to vector<16x32xf32>
    %217 = arith.mulf %212, %216 : vector<16x32xf32>
    %218 = vector.broadcast %197 : vector<1x32xf32> to vector<16x32xf32>
    %219 = arith.mulf %217, %218 : vector<16x32xf32>
    %220 = vector.broadcast %199 : vector<1x32xf32> to vector<16x32xf32>
    %221 = arith.addf %219, %220 : vector<16x32xf32>
    %c0_83 = arith.constant 0 : index
    %c0_84 = arith.constant 0 : index
    %c0_85 = arith.constant 0 : index
    %222 = vector.load %arg10[%c0_83, %c0_84, %c0_85] : memref<2x32x128xf32, #tpu.memory_space<vmem>>, vector<1x32x128xf32>
    %223 = vector.shape_cast %222 : vector<1x32x128xf32> to vector<32x128xf32>
    %cst_86 = arith.constant dense<0.000000e+00> : vector<16x128xf32>
    %224 = tpu.matmul %221, %223, %cst_86 {dimension_numbers = #tpu.dot_dimension_numbers<[1], [0], [0], [1], [0, 0, 1, 1], [], []>} : vector<16x32xf32>, vector<32x128xf32>, vector<16x128xf32> -> vector<16x128xf32>
    %c0_87 = arith.constant 0 : index
    %c0_88 = arith.constant 0 : index
    %c0_89 = arith.constant 0 : index
    %225 = vector.load %arg11[%c0_87, %c0_88, %c0_89] : memref<2x1x128xf32, #tpu.memory_space<vmem>>, vector<1x1x128xf32>
    %226 = vector.shape_cast %225 : vector<1x1x128xf32> to vector<1x128xf32>
    %227 = vector.broadcast %226 : vector<1x128xf32> to vector<16x128xf32>
    %228 = arith.addf %224, %227 : vector<16x128xf32>
    %cst_90 = arith.constant 5.000000e-01 : f32
    %229 = vector.broadcast %cst_90 : f32 to vector<16x128xf32>
    %230 = arith.mulf %229, %228 : vector<16x128xf32>
    %cst_91 = arith.constant 0.707106769 : f32
    %231 = vector.broadcast %cst_91 : f32 to vector<16x128xf32>
    %232 = arith.mulf %228, %231 : vector<16x128xf32>
    %233 = math.erf %232 : vector<16x128xf32>
    %cst_92 = arith.constant 1.000000e+00 : f32
    %234 = vector.broadcast %cst_92 : f32 to vector<16x128xf32>
    %235 = arith.addf %234, %233 : vector<16x128xf32>
    %236 = arith.mulf %230, %235 : vector<16x128xf32>
    %c0_93 = arith.constant 0 : index
    %c0_94 = arith.constant 0 : index
    %c0_95 = arith.constant 0 : index
    %237 = vector.load %arg12[%c0_93, %c0_94, %c0_95] : memref<2x128x32xf32, #tpu.memory_space<vmem>>, vector<1x128x32xf32>
    %238 = vector.shape_cast %237 : vector<1x128x32xf32> to vector<128x32xf32>
    %cst_96 = arith.constant dense<0.000000e+00> : vector<16x32xf32>
    %239 = tpu.matmul %236, %238, %cst_96 {dimension_numbers = #tpu.dot_dimension_numbers<[1], [0], [0], [1], [0, 0, 1, 1], [], []>} : vector<16x128xf32>, vector<128x32xf32>, vector<16x32xf32> -> vector<16x32xf32>
    %c0_97 = arith.constant 0 : index
    %c0_98 = arith.constant 0 : index
    %c0_99 = arith.constant 0 : index
    %240 = vector.load %arg13[%c0_97, %c0_98, %c0_99] : memref<2x1x32xf32, #tpu.memory_space<vmem>>, vector<1x1x32xf32>
    %241 = vector.shape_cast %240 : vector<1x1x32xf32> to vector<1x32xf32>
    %242 = vector.broadcast %241 : vector<1x32xf32> to vector<16x32xf32>
    %243 = arith.addf %239, %242 : vector<16x32xf32>
    %244 = arith.addf %243, %221 : vector<16x32xf32>
    %c0_100 = arith.constant 0 : index
    %c0_101 = arith.constant 0 : index
    %c0_102 = arith.constant 0 : index
    %245 = vector.load %arg14[%c0_100, %c0_101, %c0_102] : memref<2x1x32xf32, #tpu.memory_space<vmem>>, vector<1x1x32xf32>
    %246 = vector.shape_cast %245 : vector<1x1x32xf32> to vector<1x32xf32>
    %c0_103 = arith.constant 0 : index
    %c0_104 = arith.constant 0 : index
    %c0_105 = arith.constant 0 : index
    %247 = vector.load %arg15[%c0_103, %c0_104, %c0_105] : memref<2x1x32xf32, #tpu.memory_space<vmem>>, vector<1x1x32xf32>
    %248 = vector.shape_cast %247 : vector<1x1x32xf32> to vector<1x32xf32>
    %cst_106 = arith.constant dense<0.000000e+00> : vector<16xf32>
    %249 = vector.multi_reduction <add>, %244, %cst_106 [1] : vector<16x32xf32> to vector<16xf32>
    %250 = vector.shape_cast %249 : vector<16xf32> to vector<16x1xf32>
    %cst_107 = arith.constant 3.200000e+01 : f32
    %251 = vector.broadcast %cst_107 : f32 to vector<16x1xf32>
    %252 = arith.divf %250, %251 : vector<16x1xf32>
    %253 = vector.broadcast %252 : vector<16x1xf32> to vector<16x32xf32>
    %254 = arith.subf %244, %253 : vector<16x32xf32>
    %255 = arith.mulf %254, %254 : vector<16x32xf32>
    %cst_108 = arith.constant dense<0.000000e+00> : vector<16xf32>
    %256 = vector.multi_reduction <add>, %255, %cst_108 [1] : vector<16x32xf32> to vector<16xf32>
    %257 = vector.shape_cast %256 : vector<16xf32> to vector<16x1xf32>
    %cst_109 = arith.constant 3.200000e+01 : f32
    %258 = vector.broadcast %cst_109 : f32 to vector<16x1xf32>
    %259 = arith.divf %257, %258 : vector<16x1xf32>
    %260 = vector.broadcast %252 : vector<16x1xf32> to vector<16x32xf32>
    %261 = arith.subf %244, %260 : vector<16x32xf32>
    %cst_110 = arith.constant 9.99999996E-13 : f32
    %262 = vector.broadcast %cst_110 : f32 to vector<16x1xf32>
    %263 = arith.addf %259, %262 : vector<16x1xf32>
    %264 = math.rsqrt %263 : vector<16x1xf32>
    %265 = vector.broadcast %264 : vector<16x1xf32> to vector<16x32xf32>
    %266 = arith.mulf %261, %265 : vector<16x32xf32>
    %267 = vector.broadcast %246 : vector<1x32xf32> to vector<16x32xf32>
    %268 = arith.mulf %266, %267 : vector<16x32xf32>
    %269 = vector.broadcast %248 : vector<1x32xf32> to vector<16x32xf32>
    %270 = arith.addf %268, %269 : vector<16x32xf32>
    %c1 = arith.constant 1 : index
    %c0_111 = arith.constant 0 : index
    %c0_112 = arith.constant 0 : index
    %271 = vector.load %arg4[%c1, %c0_111, %c0_112] : memref<2x32x96xf32, #tpu.memory_space<vmem>>, vector<1x32x96xf32>
    %272 = vector.shape_cast %271 : vector<1x32x96xf32> to vector<32x96xf32>
    %cst_113 = arith.constant dense<0.000000e+00> : vector<16x96xf32>
    %273 = tpu.matmul %270, %272, %cst_113 {dimension_numbers = #tpu.dot_dimension_numbers<[1], [0], [0], [1], [0, 0, 1, 1], [], []>} : vector<16x32xf32>, vector<32x96xf32>, vector<16x96xf32> -> vector<16x96xf32>
    %c1_114 = arith.constant 1 : index
    %c0_115 = arith.constant 0 : index
    %c0_116 = arith.constant 0 : index
    %274 = vector.load %arg5[%c1_114, %c0_115, %c0_116] : memref<2x1x96xf32, #tpu.memory_space<vmem>>, vector<1x1x96xf32>
    %275 = vector.shape_cast %274 : vector<1x1x96xf32> to vector<1x96xf32>
    %276 = vector.broadcast %275 : vector<1x96xf32> to vector<16x96xf32>
    %277 = arith.addf %273, %276 : vector<16x96xf32>
    %278 = vector.extract_strided_slice %25 {offsets = [0, 0], sizes = [1, 8], strides = [1, 1]} : vector<2x8xf32> to vector<1x8xf32>
    %279 = vector.extract_strided_slice %277 {offsets = [0, 0], sizes = [8, 8], strides = [1, 1]} : vector<16x96xf32> to vector<8x8xf32>
    %280 = vector.extract_strided_slice %277 {offsets = [0, 32], sizes = [8, 8], strides = [1, 1]} : vector<16x96xf32> to vector<8x8xf32>
    %281 = vector.extract_strided_slice %277 {offsets = [0, 64], sizes = [8, 8], strides = [1, 1]} : vector<16x96xf32> to vector<8x8xf32>
    %282 = tpu.transpose %280, [1, 0] : vector<8x8xf32> -> vector<8x8xf32>
    %cst_117 = arith.constant dense<0.000000e+00> : vector<8x8xf32>
    %283 = tpu.matmul %279, %282, %cst_117 {dimension_numbers = #tpu.dot_dimension_numbers<[1], [0], [0], [1], [0, 0, 1, 1], [], []>} : vector<8x8xf32>, vector<8x8xf32>, vector<8x8xf32> -> vector<8x8xf32>
    %284 = vector.broadcast %278 : vector<1x8xf32> to vector<8x8xf32>
    %285 = arith.addf %283, %284 : vector<8x8xf32>
    %cst_118 = arith.constant dense<0xFF800000> : vector<8xf32>
    %286 = vector.multi_reduction <maximumf>, %285, %cst_118 [1] : vector<8x8xf32> to vector<8xf32>
    %287 = vector.shape_cast %286 : vector<8xf32> to vector<8x1xf32>
    %288 = vector.broadcast %287 : vector<8x1xf32> to vector<8x8xf32>
    %289 = arith.subf %285, %288 : vector<8x8xf32>
    %290 = math.exp %289 : vector<8x8xf32>
    %cst_119 = arith.constant dense<0.000000e+00> : vector<8xf32>
    %291 = vector.multi_reduction <add>, %290, %cst_119 [1] : vector<8x8xf32> to vector<8xf32>
    %292 = vector.shape_cast %291 : vector<8xf32> to vector<8x1xf32>
    %293 = tpu.reciprocal %292 {approx = true} : vector<8x1xf32> -> vector<8x1xf32>
    %294 = vector.broadcast %293 : vector<8x1xf32> to vector<8x8xf32>
    %295 = arith.mulf %290, %294 : vector<8x8xf32>
    %cst_120 = arith.constant dense<0.000000e+00> : vector<8x8xf32>
    %296 = tpu.matmul %295, %281, %cst_120 {dimension_numbers = #tpu.dot_dimension_numbers<[1], [0], [0], [1], [0, 0, 1, 1], [], []>} : vector<8x8xf32>, vector<8x8xf32>, vector<8x8xf32> -> vector<8x8xf32>
    %c0_121 = arith.constant 0 : index
    %c0_122 = arith.constant 0 : index
    %297 = vector.load %arg21[%c0_121, %c0_122] : memref<16x32xf32, #tpu.memory_space<vmem>>, vector<8x8xf32>
    tpu.vector_store %arg21[%c0_121, %c0_122], %296 {strides = array<i32>} : memref<16x32xf32, #tpu.memory_space<vmem>>, vector<8x8xf32>,
    %298 = vector.extract_strided_slice %277 {offsets = [0, 8], sizes = [8, 8], strides = [1, 1]} : vector<16x96xf32> to vector<8x8xf32>
    %299 = vector.extract_strided_slice %277 {offsets = [0, 40], sizes = [8, 8], strides = [1, 1]} : vector<16x96xf32> to vector<8x8xf32>
    %300 = vector.extract_strided_slice %277 {offsets = [0, 72], sizes = [8, 8], strides = [1, 1]} : vector<16x96xf32> to vector<8x8xf32>
    %301 = tpu.transpose %299, [1, 0] : vector<8x8xf32> -> vector<8x8xf32>
    %cst_123 = arith.constant dense<0.000000e+00> : vector<8x8xf32>
    %302 = tpu.matmul %298, %301, %cst_123 {dimension_numbers = #tpu.dot_dimension_numbers<[1], [0], [0], [1], [0, 0, 1, 1], [], []>} : vector<8x8xf32>, vector<8x8xf32>, vector<8x8xf32> -> vector<8x8xf32>
    %303 = vector.broadcast %278 : vector<1x8xf32> to vector<8x8xf32>
    %304 = arith.addf %302, %303 : vector<8x8xf32>
    %cst_124 = arith.constant dense<0xFF800000> : vector<8xf32>
    %305 = vector.multi_reduction <maximumf>, %304, %cst_124 [1] : vector<8x8xf32> to vector<8xf32>
    %306 = vector.shape_cast %305 : vector<8xf32> to vector<8x1xf32>
    %307 = vector.broadcast %306 : vector<8x1xf32> to vector<8x8xf32>
    %308 = arith.subf %304, %307 : vector<8x8xf32>
    %309 = math.exp %308 : vector<8x8xf32>
    %cst_125 = arith.constant dense<0.000000e+00> : vector<8xf32>
    %310 = vector.multi_reduction <add>, %309, %cst_125 [1] : vector<8x8xf32> to vector<8xf32>
    %311 = vector.shape_cast %310 : vector<8xf32> to vector<8x1xf32>
    %312 = tpu.reciprocal %311 {approx = true} : vector<8x1xf32> -> vector<8x1xf32>
    %313 = vector.broadcast %312 : vector<8x1xf32> to vector<8x8xf32>
    %314 = arith.mulf %309, %313 : vector<8x8xf32>
    %cst_126 = arith.constant dense<0.000000e+00> : vector<8x8xf32>
    %315 = tpu.matmul %314, %300, %cst_126 {dimension_numbers = #tpu.dot_dimension_numbers<[1], [0], [0], [1], [0, 0, 1, 1], [], []>} : vector<8x8xf32>, vector<8x8xf32>, vector<8x8xf32> -> vector<8x8xf32>
    %c0_127 = arith.constant 0 : index
    %c8_128 = arith.constant 8 : index
    %316 = vector.load %arg21[%c0_127, %c8_128] : memref<16x32xf32, #tpu.memory_space<vmem>>, vector<8x8xf32>
    tpu.vector_store %arg21[%c0_127, %c8_128], %315 {strides = array<i32>} : memref<16x32xf32, #tpu.memory_space<vmem>>, vector<8x8xf32>,
    %317 = vector.extract_strided_slice %277 {offsets = [0, 16], sizes = [8, 8], strides = [1, 1]} : vector<16x96xf32> to vector<8x8xf32>
    %318 = vector.extract_strided_slice %277 {offsets = [0, 48], sizes = [8, 8], strides = [1, 1]} : vector<16x96xf32> to vector<8x8xf32>
    %319 = vector.extract_strided_slice %277 {offsets = [0, 80], sizes = [8, 8], strides = [1, 1]} : vector<16x96xf32> to vector<8x8xf32>
    %320 = tpu.transpose %318, [1, 0] : vector<8x8xf32> -> vector<8x8xf32>
    %cst_129 = arith.constant dense<0.000000e+00> : vector<8x8xf32>
    %321 = tpu.matmul %317, %320, %cst_129 {dimension_numbers = #tpu.dot_dimension_numbers<[1], [0], [0], [1], [0, 0, 1, 1], [], []>} : vector<8x8xf32>, vector<8x8xf32>, vector<8x8xf32> -> vector<8x8xf32>
    %322 = vector.broadcast %278 : vector<1x8xf32> to vector<8x8xf32>
    %323 = arith.addf %321, %322 : vector<8x8xf32>
    %cst_130 = arith.constant dense<0xFF800000> : vector<8xf32>
    %324 = vector.multi_reduction <maximumf>, %323, %cst_130 [1] : vector<8x8xf32> to vector<8xf32>
    %325 = vector.shape_cast %324 : vector<8xf32> to vector<8x1xf32>
    %326 = vector.broadcast %325 : vector<8x1xf32> to vector<8x8xf32>
    %327 = arith.subf %323, %326 : vector<8x8xf32>
    %328 = math.exp %327 : vector<8x8xf32>
    %cst_131 = arith.constant dense<0.000000e+00> : vector<8xf32>
    %329 = vector.multi_reduction <add>, %328, %cst_131 [1] : vector<8x8xf32> to vector<8xf32>
    %330 = vector.shape_cast %329 : vector<8xf32> to vector<8x1xf32>
    %331 = tpu.reciprocal %330 {approx = true} : vector<8x1xf32> -> vector<8x1xf32>
    %332 = vector.broadcast %331 : vector<8x1xf32> to vector<8x8xf32>
    %333 = arith.mulf %328, %332 : vector<8x8xf32>
    %cst_132 = arith.constant dense<0.000000e+00> : vector<8x8xf32>
    %334 = tpu.matmul %333, %319, %cst_132 {dimension_numbers = #tpu.dot_dimension_numbers<[1], [0], [0], [1], [0, 0, 1, 1], [], []>} : vector<8x8xf32>, vector<8x8xf32>, vector<8x8xf32> -> vector<8x8xf32>
    %c0_133 = arith.constant 0 : index
    %c16_134 = arith.constant 16 : index
    %335 = vector.load %arg21[%c0_133, %c16_134] : memref<16x32xf32, #tpu.memory_space<vmem>>, vector<8x8xf32>
    tpu.vector_store %arg21[%c0_133, %c16_134], %334 {strides = array<i32>} : memref<16x32xf32, #tpu.memory_space<vmem>>, vector<8x8xf32>,
    %336 = vector.extract_strided_slice %277 {offsets = [0, 24], sizes = [8, 8], strides = [1, 1]} : vector<16x96xf32> to vector<8x8xf32>
    %337 = vector.extract_strided_slice %277 {offsets = [0, 56], sizes = [8, 8], strides = [1, 1]} : vector<16x96xf32> to vector<8x8xf32>
    %338 = vector.extract_strided_slice %277 {offsets = [0, 88], sizes = [8, 8], strides = [1, 1]} : vector<16x96xf32> to vector<8x8xf32>
    %339 = tpu.transpose %337, [1, 0] : vector<8x8xf32> -> vector<8x8xf32>
    %cst_135 = arith.constant dense<0.000000e+00> : vector<8x8xf32>
    %340 = tpu.matmul %336, %339, %cst_135 {dimension_numbers = #tpu.dot_dimension_numbers<[1], [0], [0], [1], [0, 0, 1, 1], [], []>} : vector<8x8xf32>, vector<8x8xf32>, vector<8x8xf32> -> vector<8x8xf32>
    %341 = vector.broadcast %278 : vector<1x8xf32> to vector<8x8xf32>
    %342 = arith.addf %340, %341 : vector<8x8xf32>
    %cst_136 = arith.constant dense<0xFF800000> : vector<8xf32>
    %343 = vector.multi_reduction <maximumf>, %342, %cst_136 [1] : vector<8x8xf32> to vector<8xf32>
    %344 = vector.shape_cast %343 : vector<8xf32> to vector<8x1xf32>
    %345 = vector.broadcast %344 : vector<8x1xf32> to vector<8x8xf32>
    %346 = arith.subf %342, %345 : vector<8x8xf32>
    %347 = math.exp %346 : vector<8x8xf32>
    %cst_137 = arith.constant dense<0.000000e+00> : vector<8xf32>
    %348 = vector.multi_reduction <add>, %347, %cst_137 [1] : vector<8x8xf32> to vector<8xf32>
    %349 = vector.shape_cast %348 : vector<8xf32> to vector<8x1xf32>
    %350 = tpu.reciprocal %349 {approx = true} : vector<8x1xf32> -> vector<8x1xf32>
    %351 = vector.broadcast %350 : vector<8x1xf32> to vector<8x8xf32>
    %352 = arith.mulf %347, %351 : vector<8x8xf32>
    %cst_138 = arith.constant dense<0.000000e+00> : vector<8x8xf32>
    %353 = tpu.matmul %352, %338, %cst_138 {dimension_numbers = #tpu.dot_dimension_numbers<[1], [0], [0], [1], [0, 0, 1, 1], [], []>} : vector<8x8xf32>, vector<8x8xf32>, vector<8x8xf32> -> vector<8x8xf32>
    %c0_139 = arith.constant 0 : index
    %c24_140 = arith.constant 24 : index
    %354 = vector.load %arg21[%c0_139, %c24_140] : memref<16x32xf32, #tpu.memory_space<vmem>>, vector<8x8xf32>
    tpu.vector_store %arg21[%c0_139, %c24_140], %353 {strides = array<i32>} : memref<16x32xf32, #tpu.memory_space<vmem>>, vector<8x8xf32>,
    %355 = vector.extract_strided_slice %25 {offsets = [1, 0], sizes = [1, 8], strides = [1, 1]} : vector<2x8xf32> to vector<1x8xf32>
    %356 = vector.extract_strided_slice %277 {offsets = [8, 0], sizes = [8, 8], strides = [1, 1]} : vector<16x96xf32> to vector<8x8xf32>
    %357 = vector.extract_strided_slice %277 {offsets = [8, 32], sizes = [8, 8], strides = [1, 1]} : vector<16x96xf32> to vector<8x8xf32>
    %358 = vector.extract_strided_slice %277 {offsets = [8, 64], sizes = [8, 8], strides = [1, 1]} : vector<16x96xf32> to vector<8x8xf32>
    %359 = tpu.transpose %357, [1, 0] : vector<8x8xf32> -> vector<8x8xf32>
    %cst_141 = arith.constant dense<0.000000e+00> : vector<8x8xf32>
    %360 = tpu.matmul %356, %359, %cst_141 {dimension_numbers = #tpu.dot_dimension_numbers<[1], [0], [0], [1], [0, 0, 1, 1], [], []>} : vector<8x8xf32>, vector<8x8xf32>, vector<8x8xf32> -> vector<8x8xf32>
    %361 = vector.broadcast %355 : vector<1x8xf32> to vector<8x8xf32>
    %362 = arith.addf %360, %361 : vector<8x8xf32>
    %cst_142 = arith.constant dense<0xFF800000> : vector<8xf32>
    %363 = vector.multi_reduction <maximumf>, %362, %cst_142 [1] : vector<8x8xf32> to vector<8xf32>
    %364 = vector.shape_cast %363 : vector<8xf32> to vector<8x1xf32>
    %365 = vector.broadcast %364 : vector<8x1xf32> to vector<8x8xf32>
    %366 = arith.subf %362, %365 : vector<8x8xf32>
    %367 = math.exp %366 : vector<8x8xf32>
    %cst_143 = arith.constant dense<0.000000e+00> : vector<8xf32>
    %368 = vector.multi_reduction <add>, %367, %cst_143 [1] : vector<8x8xf32> to vector<8xf32>
    %369 = vector.shape_cast %368 : vector<8xf32> to vector<8x1xf32>
    %370 = tpu.reciprocal %369 {approx = true} : vector<8x1xf32> -> vector<8x1xf32>
    %371 = vector.broadcast %370 : vector<8x1xf32> to vector<8x8xf32>
    %372 = arith.mulf %367, %371 : vector<8x8xf32>
    %cst_144 = arith.constant dense<0.000000e+00> : vector<8x8xf32>
    %373 = tpu.matmul %372, %358, %cst_144 {dimension_numbers = #tpu.dot_dimension_numbers<[1], [0], [0], [1], [0, 0, 1, 1], [], []>} : vector<8x8xf32>, vector<8x8xf32>, vector<8x8xf32> -> vector<8x8xf32>
    %c8_145 = arith.constant 8 : index
    %c0_146 = arith.constant 0 : index
    %374 = vector.load %arg21[%c8_145, %c0_146] : memref<16x32xf32, #tpu.memory_space<vmem>>, vector<8x8xf32>
    tpu.vector_store %arg21[%c8_145, %c0_146], %373 {strides = array<i32>} : memref<16x32xf32, #tpu.memory_space<vmem>>, vector<8x8xf32>,
    %375 = vector.extract_strided_slice %277 {offsets = [8, 8], sizes = [8, 8], strides = [1, 1]} : vector<16x96xf32> to vector<8x8xf32>
    %376 = vector.extract_strided_slice %277 {offsets = [8, 40], sizes = [8, 8], strides = [1, 1]} : vector<16x96xf32> to vector<8x8xf32>
    %377 = vector.extract_strided_slice %277 {offsets = [8, 72], sizes = [8, 8], strides = [1, 1]} : vector<16x96xf32> to vector<8x8xf32>
    %378 = tpu.transpose %376, [1, 0] : vector<8x8xf32> -> vector<8x8xf32>
    %cst_147 = arith.constant dense<0.000000e+00> : vector<8x8xf32>
    %379 = tpu.matmul %375, %378, %cst_147 {dimension_numbers = #tpu.dot_dimension_numbers<[1], [0], [0], [1], [0, 0, 1, 1], [], []>} : vector<8x8xf32>, vector<8x8xf32>, vector<8x8xf32> -> vector<8x8xf32>
    %380 = vector.broadcast %355 : vector<1x8xf32> to vector<8x8xf32>
    %381 = arith.addf %379, %380 : vector<8x8xf32>
    %cst_148 = arith.constant dense<0xFF800000> : vector<8xf32>
    %382 = vector.multi_reduction <maximumf>, %381, %cst_148 [1] : vector<8x8xf32> to vector<8xf32>
    %383 = vector.shape_cast %382 : vector<8xf32> to vector<8x1xf32>
    %384 = vector.broadcast %383 : vector<8x1xf32> to vector<8x8xf32>
    %385 = arith.subf %381, %384 : vector<8x8xf32>
    %386 = math.exp %385 : vector<8x8xf32>
    %cst_149 = arith.constant dense<0.000000e+00> : vector<8xf32>
    %387 = vector.multi_reduction <add>, %386, %cst_149 [1] : vector<8x8xf32> to vector<8xf32>
    %388 = vector.shape_cast %387 : vector<8xf32> to vector<8x1xf32>
    %389 = tpu.reciprocal %388 {approx = true} : vector<8x1xf32> -> vector<8x1xf32>
    %390 = vector.broadcast %389 : vector<8x1xf32> to vector<8x8xf32>
    %391 = arith.mulf %386, %390 : vector<8x8xf32>
    %cst_150 = arith.constant dense<0.000000e+00> : vector<8x8xf32>
    %392 = tpu.matmul %391, %377, %cst_150 {dimension_numbers = #tpu.dot_dimension_numbers<[1], [0], [0], [1], [0, 0, 1, 1], [], []>} : vector<8x8xf32>, vector<8x8xf32>, vector<8x8xf32> -> vector<8x8xf32>
    %c8_151 = arith.constant 8 : index
    %c8_152 = arith.constant 8 : index
    %393 = vector.load %arg21[%c8_151, %c8_152] : memref<16x32xf32, #tpu.memory_space<vmem>>, vector<8x8xf32>
    tpu.vector_store %arg21[%c8_151, %c8_152], %392 {strides = array<i32>} : memref<16x32xf32, #tpu.memory_space<vmem>>, vector<8x8xf32>,
    %394 = vector.extract_strided_slice %277 {offsets = [8, 16], sizes = [8, 8], strides = [1, 1]} : vector<16x96xf32> to vector<8x8xf32>
    %395 = vector.extract_strided_slice %277 {offsets = [8, 48], sizes = [8, 8], strides = [1, 1]} : vector<16x96xf32> to vector<8x8xf32>
    %396 = vector.extract_strided_slice %277 {offsets = [8, 80], sizes = [8, 8], strides = [1, 1]} : vector<16x96xf32> to vector<8x8xf32>
    %397 = tpu.transpose %395, [1, 0] : vector<8x8xf32> -> vector<8x8xf32>
    %cst_153 = arith.constant dense<0.000000e+00> : vector<8x8xf32>
    %398 = tpu.matmul %394, %397, %cst_153 {dimension_numbers = #tpu.dot_dimension_numbers<[1], [0], [0], [1], [0, 0, 1, 1], [], []>} : vector<8x8xf32>, vector<8x8xf32>, vector<8x8xf32> -> vector<8x8xf32>
    %399 = vector.broadcast %355 : vector<1x8xf32> to vector<8x8xf32>
    %400 = arith.addf %398, %399 : vector<8x8xf32>
    %cst_154 = arith.constant dense<0xFF800000> : vector<8xf32>
    %401 = vector.multi_reduction <maximumf>, %400, %cst_154 [1] : vector<8x8xf32> to vector<8xf32>
    %402 = vector.shape_cast %401 : vector<8xf32> to vector<8x1xf32>
    %403 = vector.broadcast %402 : vector<8x1xf32> to vector<8x8xf32>
    %404 = arith.subf %400, %403 : vector<8x8xf32>
    %405 = math.exp %404 : vector<8x8xf32>
    %cst_155 = arith.constant dense<0.000000e+00> : vector<8xf32>
    %406 = vector.multi_reduction <add>, %405, %cst_155 [1] : vector<8x8xf32> to vector<8xf32>
    %407 = vector.shape_cast %406 : vector<8xf32> to vector<8x1xf32>
    %408 = tpu.reciprocal %407 {approx = true} : vector<8x1xf32> -> vector<8x1xf32>
    %409 = vector.broadcast %408 : vector<8x1xf32> to vector<8x8xf32>
    %410 = arith.mulf %405, %409 : vector<8x8xf32>
    %cst_156 = arith.constant dense<0.000000e+00> : vector<8x8xf32>
    %411 = tpu.matmul %410, %396, %cst_156 {dimension_numbers = #tpu.dot_dimension_numbers<[1], [0], [0], [1], [0, 0, 1, 1], [], []>} : vector<8x8xf32>, vector<8x8xf32>, vector<8x8xf32> -> vector<8x8xf32>
    %c8_157 = arith.constant 8 : index
    %c16_158 = arith.constant 16 : index
    %412 = vector.load %arg21[%c8_157, %c16_158] : memref<16x32xf32, #tpu.memory_space<vmem>>, vector<8x8xf32>
    tpu.vector_store %arg21[%c8_157, %c16_158], %411 {strides = array<i32>} : memref<16x32xf32, #tpu.memory_space<vmem>>, vector<8x8xf32>,
    %413 = vector.extract_strided_slice %277 {offsets = [8, 24], sizes = [8, 8], strides = [1, 1]} : vector<16x96xf32> to vector<8x8xf32>
    %414 = vector.extract_strided_slice %277 {offsets = [8, 56], sizes = [8, 8], strides = [1, 1]} : vector<16x96xf32> to vector<8x8xf32>
    %415 = vector.extract_strided_slice %277 {offsets = [8, 88], sizes = [8, 8], strides = [1, 1]} : vector<16x96xf32> to vector<8x8xf32>
    %416 = tpu.transpose %414, [1, 0] : vector<8x8xf32> -> vector<8x8xf32>
    %cst_159 = arith.constant dense<0.000000e+00> : vector<8x8xf32>
    %417 = tpu.matmul %413, %416, %cst_159 {dimension_numbers = #tpu.dot_dimension_numbers<[1], [0], [0], [1], [0, 0, 1, 1], [], []>} : vector<8x8xf32>, vector<8x8xf32>, vector<8x8xf32> -> vector<8x8xf32>
    %418 = vector.broadcast %355 : vector<1x8xf32> to vector<8x8xf32>
    %419 = arith.addf %417, %418 : vector<8x8xf32>
    %cst_160 = arith.constant dense<0xFF800000> : vector<8xf32>
    %420 = vector.multi_reduction <maximumf>, %419, %cst_160 [1] : vector<8x8xf32> to vector<8xf32>
    %421 = vector.shape_cast %420 : vector<8xf32> to vector<8x1xf32>
    %422 = vector.broadcast %421 : vector<8x1xf32> to vector<8x8xf32>
    %423 = arith.subf %419, %422 : vector<8x8xf32>
    %424 = math.exp %423 : vector<8x8xf32>
    %cst_161 = arith.constant dense<0.000000e+00> : vector<8xf32>
    %425 = vector.multi_reduction <add>, %424, %cst_161 [1] : vector<8x8xf32> to vector<8xf32>
    %426 = vector.shape_cast %425 : vector<8xf32> to vector<8x1xf32>
    %427 = tpu.reciprocal %426 {approx = true} : vector<8x1xf32> -> vector<8x1xf32>
    %428 = vector.broadcast %427 : vector<8x1xf32> to vector<8x8xf32>
    %429 = arith.mulf %424, %428 : vector<8x8xf32>
    %cst_162 = arith.constant dense<0.000000e+00> : vector<8x8xf32>
    %430 = tpu.matmul %429, %415, %cst_162 {dimension_numbers = #tpu.dot_dimension_numbers<[1], [0], [0], [1], [0, 0, 1, 1], [], []>} : vector<8x8xf32>, vector<8x8xf32>, vector<8x8xf32> -> vector<8x8xf32>
    %c8_163 = arith.constant 8 : index
    %c24_164 = arith.constant 24 : index
    %431 = vector.load %arg21[%c8_163, %c24_164] : memref<16x32xf32, #tpu.memory_space<vmem>>, vector<8x8xf32>
    tpu.vector_store %arg21[%c8_163, %c24_164], %430 {strides = array<i32>} : memref<16x32xf32, #tpu.memory_space<vmem>>, vector<8x8xf32>,
    %c0_165 = arith.constant 0 : index
    %c0_166 = arith.constant 0 : index
    %432 = vector.load %arg21[%c0_165, %c0_166] : memref<16x32xf32, #tpu.memory_space<vmem>>, vector<16x32xf32>
    %c1_167 = arith.constant 1 : index
    %c0_168 = arith.constant 0 : index
    %c0_169 = arith.constant 0 : index
    %433 = vector.load %arg6[%c1_167, %c0_168, %c0_169] : memref<2x32x32xf32, #tpu.memory_space<vmem>>, vector<1x32x32xf32>
    %434 = vector.shape_cast %433 : vector<1x32x32xf32> to vector<32x32xf32>
    %cst_170 = arith.constant dense<0.000000e+00> : vector<16x32xf32>
    %435 = tpu.matmul %432, %434, %cst_170 {dimension_numbers = #tpu.dot_dimension_numbers<[1], [0], [0], [1], [0, 0, 1, 1], [], []>} : vector<16x32xf32>, vector<32x32xf32>, vector<16x32xf32> -> vector<16x32xf32>
    %c1_171 = arith.constant 1 : index
    %c0_172 = arith.constant 0 : index
    %c0_173 = arith.constant 0 : index
    %436 = vector.load %arg7[%c1_171, %c0_172, %c0_173] : memref<2x1x32xf32, #tpu.memory_space<vmem>>, vector<1x1x32xf32>
    %437 = vector.shape_cast %436 : vector<1x1x32xf32> to vector<1x32xf32>
    %438 = vector.broadcast %437 : vector<1x32xf32> to vector<16x32xf32>
    %439 = arith.addf %435, %438 : vector<16x32xf32>
    %440 = arith.addf %439, %270 : vector<16x32xf32>
    %c1_174 = arith.constant 1 : index
    %c0_175 = arith.constant 0 : index
    %c0_176 = arith.constant 0 : index
    %441 = vector.load %arg8[%c1_174, %c0_175, %c0_176] : memref<2x1x32xf32, #tpu.memory_space<vmem>>, vector<1x1x32xf32>
    %442 = vector.shape_cast %441 : vector<1x1x32xf32> to vector<1x32xf32>
    %c1_177 = arith.constant 1 : index
    %c0_178 = arith.constant 0 : index
    %c0_179 = arith.constant 0 : index
    %443 = vector.load %arg9[%c1_177, %c0_178, %c0_179] : memref<2x1x32xf32, #tpu.memory_space<vmem>>, vector<1x1x32xf32>
    %444 = vector.shape_cast %443 : vector<1x1x32xf32> to vector<1x32xf32>
    %cst_180 = arith.constant dense<0.000000e+00> : vector<16xf32>
    %445 = vector.multi_reduction <add>, %440, %cst_180 [1] : vector<16x32xf32> to vector<16xf32>
    %446 = vector.shape_cast %445 : vector<16xf32> to vector<16x1xf32>
    %cst_181 = arith.constant 3.200000e+01 : f32
    %447 = vector.broadcast %cst_181 : f32 to vector<16x1xf32>
    %448 = arith.divf %446, %447 : vector<16x1xf32>
    %449 = vector.broadcast %448 : vector<16x1xf32> to vector<16x32xf32>
    %450 = arith.subf %440, %449 : vector<16x32xf32>
    %451 = arith.mulf %450, %450 : vector<16x32xf32>
    %cst_182 = arith.constant dense<0.000000e+00> : vector<16xf32>
    %452 = vector.multi_reduction <add>, %451, %cst_182 [1] : vector<16x32xf32> to vector<16xf32>
    %453 = vector.shape_cast %452 : vector<16xf32> to vector<16x1xf32>
    %cst_183 = arith.constant 3.200000e+01 : f32
    %454 = vector.broadcast %cst_183 : f32 to vector<16x1xf32>
    %455 = arith.divf %453, %454 : vector<16x1xf32>
    %456 = vector.broadcast %448 : vector<16x1xf32> to vector<16x32xf32>
    %457 = arith.subf %440, %456 : vector<16x32xf32>
    %cst_184 = arith.constant 9.99999996E-13 : f32
    %458 = vector.broadcast %cst_184 : f32 to vector<16x1xf32>
    %459 = arith.addf %455, %458 : vector<16x1xf32>
    %460 = math.rsqrt %459 : vector<16x1xf32>
    %461 = vector.broadcast %460 : vector<16x1xf32> to vector<16x32xf32>
    %462 = arith.mulf %457, %461 : vector<16x32xf32>
    %463 = vector.broadcast %442 : vector<1x32xf32> to vector<16x32xf32>
    %464 = arith.mulf %462, %463 : vector<16x32xf32>
    %465 = vector.broadcast %444 : vector<1x32xf32> to vector<16x32xf32>
    %466 = arith.addf %464, %465 : vector<16x32xf32>
    %c1_185 = arith.constant 1 : index
    %c0_186 = arith.constant 0 : index
    %c0_187 = arith.constant 0 : index
    %467 = vector.load %arg10[%c1_185, %c0_186, %c0_187] : memref<2x32x128xf32, #tpu.memory_space<vmem>>, vector<1x32x128xf32>
    %468 = vector.shape_cast %467 : vector<1x32x128xf32> to vector<32x128xf32>
    %cst_188 = arith.constant dense<0.000000e+00> : vector<16x128xf32>
    %469 = tpu.matmul %466, %468, %cst_188 {dimension_numbers = #tpu.dot_dimension_numbers<[1], [0], [0], [1], [0, 0, 1, 1], [], []>} : vector<16x32xf32>, vector<32x128xf32>, vector<16x128xf32> -> vector<16x128xf32>
    %c1_189 = arith.constant 1 : index
    %c0_190 = arith.constant 0 : index
    %c0_191 = arith.constant 0 : index
    %470 = vector.load %arg11[%c1_189, %c0_190, %c0_191] : memref<2x1x128xf32, #tpu.memory_space<vmem>>, vector<1x1x128xf32>
    %471 = vector.shape_cast %470 : vector<1x1x128xf32> to vector<1x128xf32>
    %472 = vector.broadcast %471 : vector<1x128xf32> to vector<16x128xf32>
    %473 = arith.addf %469, %472 : vector<16x128xf32>
    %cst_192 = arith.constant 5.000000e-01 : f32
    %474 = vector.broadcast %cst_192 : f32 to vector<16x128xf32>
    %475 = arith.mulf %474, %473 : vector<16x128xf32>
    %cst_193 = arith.constant 0.707106769 : f32
    %476 = vector.broadcast %cst_193 : f32 to vector<16x128xf32>
    %477 = arith.mulf %473, %476 : vector<16x128xf32>
    %478 = math.erf %477 : vector<16x128xf32>
    %cst_194 = arith.constant 1.000000e+00 : f32
    %479 = vector.broadcast %cst_194 : f32 to vector<16x128xf32>
    %480 = arith.addf %479, %478 : vector<16x128xf32>
    %481 = arith.mulf %475, %480 : vector<16x128xf32>
    %c1_195 = arith.constant 1 : index
    %c0_196 = arith.constant 0 : index
    %c0_197 = arith.constant 0 : index
    %482 = vector.load %arg12[%c1_195, %c0_196, %c0_197] : memref<2x128x32xf32, #tpu.memory_space<vmem>>, vector<1x128x32xf32>
    %483 = vector.shape_cast %482 : vector<1x128x32xf32> to vector<128x32xf32>
    %cst_198 = arith.constant dense<0.000000e+00> : vector<16x32xf32>
    %484 = tpu.matmul %481, %483, %cst_198 {dimension_numbers = #tpu.dot_dimension_numbers<[1], [0], [0], [1], [0, 0, 1, 1], [], []>} : vector<16x128xf32>, vector<128x32xf32>, vector<16x32xf32> -> vector<16x32xf32>
    %c1_199 = arith.constant 1 : index
    %c0_200 = arith.constant 0 : index
    %c0_201 = arith.constant 0 : index
    %485 = vector.load %arg13[%c1_199, %c0_200, %c0_201] : memref<2x1x32xf32, #tpu.memory_space<vmem>>, vector<1x1x32xf32>
    %486 = vector.shape_cast %485 : vector<1x1x32xf32> to vector<1x32xf32>
    %487 = vector.broadcast %486 : vector<1x32xf32> to vector<16x32xf32>
    %488 = arith.addf %484, %487 : vector<16x32xf32>
    %489 = arith.addf %488, %466 : vector<16x32xf32>
    %c1_202 = arith.constant 1 : index
    %c0_203 = arith.constant 0 : index
    %c0_204 = arith.constant 0 : index
    %490 = vector.load %arg14[%c1_202, %c0_203, %c0_204] : memref<2x1x32xf32, #tpu.memory_space<vmem>>, vector<1x1x32xf32>
    %491 = vector.shape_cast %490 : vector<1x1x32xf32> to vector<1x32xf32>
    %c1_205 = arith.constant 1 : index
    %c0_206 = arith.constant 0 : index
    %c0_207 = arith.constant 0 : index
    %492 = vector.load %arg15[%c1_205, %c0_206, %c0_207] : memref<2x1x32xf32, #tpu.memory_space<vmem>>, vector<1x1x32xf32>
    %493 = vector.shape_cast %492 : vector<1x1x32xf32> to vector<1x32xf32>
    %cst_208 = arith.constant dense<0.000000e+00> : vector<16xf32>
    %494 = vector.multi_reduction <add>, %489, %cst_208 [1] : vector<16x32xf32> to vector<16xf32>
    %495 = vector.shape_cast %494 : vector<16xf32> to vector<16x1xf32>
    %cst_209 = arith.constant 3.200000e+01 : f32
    %496 = vector.broadcast %cst_209 : f32 to vector<16x1xf32>
    %497 = arith.divf %495, %496 : vector<16x1xf32>
    %498 = vector.broadcast %497 : vector<16x1xf32> to vector<16x32xf32>
    %499 = arith.subf %489, %498 : vector<16x32xf32>
    %500 = arith.mulf %499, %499 : vector<16x32xf32>
    %cst_210 = arith.constant dense<0.000000e+00> : vector<16xf32>
    %501 = vector.multi_reduction <add>, %500, %cst_210 [1] : vector<16x32xf32> to vector<16xf32>
    %502 = vector.shape_cast %501 : vector<16xf32> to vector<16x1xf32>
    %cst_211 = arith.constant 3.200000e+01 : f32
    %503 = vector.broadcast %cst_211 : f32 to vector<16x1xf32>
    %504 = arith.divf %502, %503 : vector<16x1xf32>
    %505 = vector.broadcast %497 : vector<16x1xf32> to vector<16x32xf32>
    %506 = arith.subf %489, %505 : vector<16x32xf32>
    %cst_212 = arith.constant 9.99999996E-13 : f32
    %507 = vector.broadcast %cst_212 : f32 to vector<16x1xf32>
    %508 = arith.addf %504, %507 : vector<16x1xf32>
    %509 = math.rsqrt %508 : vector<16x1xf32>
    %510 = vector.broadcast %509 : vector<16x1xf32> to vector<16x32xf32>
    %511 = arith.mulf %506, %510 : vector<16x32xf32>
    %512 = vector.broadcast %491 : vector<1x32xf32> to vector<16x32xf32>
    %513 = arith.mulf %511, %512 : vector<16x32xf32>
    %514 = vector.broadcast %493 : vector<1x32xf32> to vector<16x32xf32>
    %515 = arith.addf %513, %514 : vector<16x32xf32>
    %516 = vector.extract_strided_slice %515 {offsets = [0, 0], sizes = [1, 32], strides = [1, 1]} : vector<16x32xf32> to vector<1x32xf32>
    %517 = vector.extract_strided_slice %515 {offsets = [8, 0], sizes = [1, 32], strides = [1, 1]} : vector<16x32xf32> to vector<1x32xf32>
    %518 = tpu.concatenate %516, %517 in 0 : vector<1x32xf32>, vector<1x32xf32> -> vector<2x32xf32>
    %c0_213 = arith.constant 0 : index
    %c0_214 = arith.constant 0 : index
    %519 = vector.load %arg16[%c0_213, %c0_214] : memref<32x32xf32, #tpu.memory_space<vmem>>, vector<32x32xf32>
    %cst_215 = arith.constant dense<0.000000e+00> : vector<2x32xf32>
    %520 = tpu.matmul %518, %519, %cst_215 {dimension_numbers = #tpu.dot_dimension_numbers<[1], [0], [0], [1], [0, 0, 1, 1], [], []>} : vector<2x32xf32>, vector<32x32xf32>, vector<2x32xf32> -> vector<2x32xf32>
    %c0_216 = arith.constant 0 : index
    %c0_217 = arith.constant 0 : index
    %521 = vector.load %arg17[%c0_216, %c0_217] : memref<1x32xf32, #tpu.memory_space<vmem>>, vector<1x32xf32>
    %522 = vector.broadcast %521 : vector<1x32xf32> to vector<2x32xf32>
    %523 = arith.addf %520, %522 : vector<2x32xf32>
    %524 = math.tanh %523 : vector<2x32xf32>
    %c0_218 = arith.constant 0 : index
    %c0_219 = arith.constant 0 : index
    %525 = vector.load %arg18[%c0_218, %c0_219] : memref<32x128xf32, #tpu.memory_space<vmem>>, vector<32x128xf32>
    %cst_220 = arith.constant dense<0.000000e+00> : vector<2x128xf32>
    %526 = tpu.matmul %524, %525, %cst_220 {dimension_numbers = #tpu.dot_dimension_numbers<[1], [0], [0], [1], [0, 0, 1, 1], [], []>} : vector<2x32xf32>, vector<32x128xf32>, vector<2x128xf32> -> vector<2x128xf32>
    %c0_221 = arith.constant 0 : index
    %c0_222 = arith.constant 0 : index
    %527 = vector.load %arg19[%c0_221, %c0_222] : memref<1x128xf32, #tpu.memory_space<vmem>>, vector<1x128xf32>
    %528 = vector.broadcast %527 : vector<1x128xf32> to vector<2x128xf32>
    %529 = arith.addf %526, %528 : vector<2x128xf32>
    %c0_223 = arith.constant 0 : index
    %c0_224 = arith.constant 0 : index
    %530 = vector.load %arg20[%c0_223, %c0_224] : memref<2x128xf32, #tpu.memory_space<vmem>>, vector<2x128xf32>
    tpu.vector_store %arg20[%c0_223, %c0_224], %529 {strides = array<i32>} : memref<2x128xf32, #tpu.memory_space<vmem>>, vector<2x128xf32>,
    return
  }
}

</mosaic_0001>

<llo_original>
// kernel: bert_classifier_forward.1
$region0: #{bert_classifier_forward.1}
  #allocation0 [shape = 'u32[]', space=smem, size = 0x4, offset = 0x4, fixed_abs, tag = 'smem constant byte address 0x4 - core index']
  #allocation1 [shape = 'u32[144,128]{1,0:T(1,128)}', space=vmem, size = 0x12000, scoped, tag = 'internal scratch']
  #allocation2 [shape = 'f32[16,32]{1,0:T(8,128)}', space=vmem, size = 0x2000, scoped, tag = 'scratch operand']
  %s0 = inlined_call_operand.vmem [shape: f32[16,32], index: 0, kind: input, shape index: {}]
  %s1 = inlined_call_operand.vmem [shape: f32[2,8], index: 1, kind: input, shape index: {}]
  %s2 = inlined_call_operand.vmem [shape: f32[1,32], index: 2, kind: input, shape index: {}]
  %s3 = inlined_call_operand.vmem [shape: f32[1,32], index: 3, kind: input, shape index: {}]
  %s4 = inlined_call_operand.vmem [shape: f32[2,32,96], index: 4, kind: input, shape index: {}]
  %s5 = inlined_call_operand.vmem [shape: f32[2,1,96], index: 5, kind: input, shape index: {}]
  %s6 = inlined_call_operand.vmem [shape: f32[2,32,32], index: 6, kind: input, shape index: {}]
  %s7 = inlined_call_operand.vmem [shape: f32[2,1,32], index: 7, kind: input, shape index: {}]
  %s8 = inlined_call_operand.vmem [shape: f32[2,1,32], index: 8, kind: input, shape index: {}]
  %s9 = inlined_call_operand.vmem [shape: f32[2,1,32], index: 9, kind: input, shape index: {}]
  %s10 = inlined_call_operand.vmem [shape: f32[2,32,128], index: 10, kind: input, shape index: {}]
  %s11 = inlined_call_operand.vmem [shape: f32[2,1,128], index: 11, kind: input, shape index: {}]
  %s12 = inlined_call_operand.vmem [shape: f32[2,128,32], index: 12, kind: input, shape index: {}]
  %s13 = inlined_call_operand.vmem [shape: f32[2,1,32], index: 13, kind: input, shape index: {}]
  %s14 = inlined_call_operand.vmem [shape: f32[2,1,32], index: 14, kind: input, shape index: {}]
  %s15 = inlined_call_operand.vmem [shape: f32[2,1,32], index: 15, kind: input, shape index: {}]
  %s16 = inlined_call_operand.vmem [shape: f32[32,32], index: 16, kind: input, shape index: {}]
  %s17 = inlined_call_operand.vmem [shape: f32[1,32], index: 17, kind: input, shape index: {}]
  %s18 = inlined_call_operand.vmem [shape: f32[32,128], index: 18, kind: input, shape index: {}]
  %s19 = inlined_call_operand.vmem [shape: f32[1,128], index: 19, kind: input, shape index: {}]
  %s20 = inlined_call_operand.vmem [shape: f32[2,128], index: 20, kind: output, shape index: {}]
  %s21 = sld [smem:[#allocation0]]
  $region90: #{bert_classifier_forward.1} parent=0
    _
  %s23 = ssub.s32 1, %s21
  %s24 = scalar_select 0, %s23, %s21
  // Predicated region
  $region2: #{bert_classifier_forward.1} parent=0 // pred_check
    _
  $region3: #{bert_classifier_forward.1} parent=0 // pred_check_branch
    %26 = sbr.rel (0) target = $region5
  $region4: #{bert_classifier_forward.1} parent=0 // pred_region
    _
  $region5: #{bert_classifier_forward.1} parent=0 // pred_fallthru
    _
  // Predicated region
  $region6: #{bert_classifier_forward.1} parent=0 // pred_check
    _
  $region7: #{bert_classifier_forward.1} parent=0 // pred_check_branch
    %28 = sbr.rel (0) target = $region9
  $region8: #{bert_classifier_forward.1} parent=0 // pred_region
    _
  $region9: #{bert_classifier_forward.1} parent=0 // pred_fallthru
    _
  // Predicated region
  $region10: #{bert_classifier_forward.1} parent=0 // pred_check
    _
  $region11: #{bert_classifier_forward.1} parent=0 // pred_check_branch
    %30 = sbr.rel (0) target = $region13
  $region12: #{bert_classifier_forward.1} parent=0 // pred_region
    _
  $region13: #{bert_classifier_forward.1} parent=0 // pred_fallthru
    _
  // Predicated region
  $region14: #{bert_classifier_forward.1} parent=0 // pred_check
    _
  $region15: #{bert_classifier_forward.1} parent=0 // pred_check_branch
    %32 = sbr.rel (0) target = $region17
  $region16: #{bert_classifier_forward.1} parent=0 // pred_region
    _
  $region17: #{bert_classifier_forward.1} parent=0 // pred_fallthru
    _
  // Predicated region
  $region18: #{bert_classifier_forward.1} parent=0 // pred_check
    _
  $region19: #{bert_classifier_forward.1} parent=0 // pred_check_branch
    %34 = sbr.rel (0) target = $region21
  $region20: #{bert_classifier_forward.1} parent=0 // pred_region
    _
  $region21: #{bert_classifier_forward.1} parent=0 // pred_fallthru
    _
  // Predicated region
  $region22: #{bert_classifier_forward.1} parent=0 // pred_check
    _
  $region23: #{bert_classifier_forward.1} parent=0 // pred_check_branch
    %36 = sbr.rel (0) target = $region25
  $region24: #{bert_classifier_forward.1} parent=0 // pred_region
    _
  $region25: #{bert_classifier_forward.1} parent=0 // pred_fallthru
    _
  // Predicated region
  $region26: #{bert_classifier_forward.1} parent=0 // pred_check
    _
  $region27: #{bert_classifier_forward.1} parent=0 // pred_check_branch
    %38 = sbr.rel (0) target = $region29
  $region28: #{bert_classifier_forward.1} parent=0 // pred_region
    _
  $region29: #{bert_classifier_forward.1} parent=0 // pred_fallthru
    _
  // Predicated region
  $region30: #{bert_classifier_forward.1} parent=0 // pred_check
    _
  $region31: #{bert_classifier_forward.1} parent=0 // pred_check_branch
    %40 = sbr.rel (0) target = $region33
  $region32: #{bert_classifier_forward.1} parent=0 // pred_region
    _
  $region33: #{bert_classifier_forward.1} parent=0 // pred_fallthru
    _
  // Predicated region
  $region34: #{bert_classifier_forward.1} parent=0 // pred_check
    _
  $region35: #{bert_classifier_forward.1} parent=0 // pred_check_branch
    %42 = sbr.rel (0) target = $region37
  $region36: #{bert_classifier_forward.1} parent=0 // pred_region
    _
  $region37: #{bert_classifier_forward.1} parent=0 // pred_fallthru
    _
  // Predicated region
  $region38: #{bert_classifier_forward.1} parent=0 // pred_check
    _
  $region39: #{bert_classifier_forward.1} parent=0 // pred_check_branch
    %44 = sbr.rel (0) target = $region41
  $region40: #{bert_classifier_forward.1} parent=0 // pred_region
    _
  $region41: #{bert_classifier_forward.1} parent=0 // pred_fallthru
    _
  // Predicated region
  $region42: #{bert_classifier_forward.1} parent=0 // pred_check
    _
  $region43: #{bert_classifier_forward.1} parent=0 // pred_check_branch
    %46 = sbr.rel (0) target = $region45
  $region44: #{bert_classifier_forward.1} parent=0 // pred_region
    _
  $region45: #{bert_classifier_forward.1} parent=0 // pred_fallthru
    _
  // Predicated region
  $region46: #{bert_classifier_forward.1} parent=0 // pred_check
    _
  $region47: #{bert_classifier_forward.1} parent=0 // pred_check_branch
    %48 = sbr.rel (0) target = $region49
  $region48: #{bert_classifier_forward.1} parent=0 // pred_region
    _
  $region49: #{bert_classifier_forward.1} parent=0 // pred_fallthru
    _
  // Predicated region
  $region50: #{bert_classifier_forward.1} parent=0 // pred_check
    _
  $region51: #{bert_classifier_forward.1} parent=0 // pred_check_branch
    %50 = sbr.rel (0) target = $region53
  $region52: #{bert_classifier_forward.1} parent=0 // pred_region
    _
  $region53: #{bert_classifier_forward.1} parent=0 // pred_fallthru
    _
  // Predicated region
  $region54: #{bert_classifier_forward.1} parent=0 // pred_check
    _
  $region55: #{bert_classifier_forward.1} parent=0 // pred_check_branch
    %52 = sbr.rel (0) target = $region57
  $region56: #{bert_classifier_forward.1} parent=0 // pred_region
    _
  $region57: #{bert_classifier_forward.1} parent=0 // pred_fallthru
    _
  // Predicated region
  $region58: #{bert_classifier_forward.1} parent=0 // pred_check
    _
  $region59: #{bert_classifier_forward.1} parent=0 // pred_check_branch
    %54 = sbr.rel (0) target = $region61
  $region60: #{bert_classifier_forward.1} parent=0 // pred_region
    _
  $region61: #{bert_classifier_forward.1} parent=0 // pred_fallthru
    _
  // Predicated region
  $region62: #{bert_classifier_forward.1} parent=0 // pred_check
    _
  $region63: #{bert_classifier_forward.1} parent=0 // pred_check_branch
    %56 = sbr.rel (0) target = $region65
  $region64: #{bert_classifier_forward.1} parent=0 // pred_region
    _
  $region65: #{bert_classifier_forward.1} parent=0 // pred_fallthru
    _
  // Predicated region
  $region66: #{bert_classifier_forward.1} parent=0 // pred_check
    _
  $region67: #{bert_classifier_forward.1} parent=0 // pred_check_branch
    %58 = sbr.rel (0) target = $region69
  $region68: #{bert_classifier_forward.1} parent=0 // pred_region
    _
  $region69: #{bert_classifier_forward.1} parent=0 // pred_fallthru
    _
  // Predicated region
  $region70: #{bert_classifier_forward.1} parent=0 // pred_check
    _
  $region71: #{bert_classifier_forward.1} parent=0 // pred_check_branch
    %60 = sbr.rel (0) target = $region73
  $region72: #{bert_classifier_forward.1} parent=0 // pred_region
    _
  $region73: #{bert_classifier_forward.1} parent=0 // pred_fallthru
    _
  // Predicated region
  $region74: #{bert_classifier_forward.1} parent=0 // pred_check
    _
  $region75: #{bert_classifier_forward.1} parent=0 // pred_check_branch
    %62 = sbr.rel (0) target = $region77
  $region76: #{bert_classifier_forward.1} parent=0 // pred_region
    _
  $region77: #{bert_classifier_forward.1} parent=0 // pred_fallthru
    _
  // Predicated region
  $region78: #{bert_classifier_forward.1} parent=0 // pred_check
    _
  $region79: #{bert_classifier_forward.1} parent=0 // pred_check_branch
    %64 = sbr.rel (0) target = $region81
  $region80: #{bert_classifier_forward.1} parent=0 // pred_region
    _
  $region81: #{bert_classifier_forward.1} parent=0 // pred_fallthru
    _
  %v65 = vld [vmem:[%s0] sm:$0xff]
  %v66 = vld [vmem:[%s0 + $0x8] sm:$0xff]
  %v67 = vld [vmem:[%s2] sm:$0x1]
  %v68 = vld [vmem:[%s3] sm:$0x1]
  %vm69 = vcmask 261120
  %v70 = vsel %vm69, %v65, 0.0
  %71 = vadd.xlane.f32.xlu0 %v70
  %v72 = vpop.xlane.xlu0 %71
  %v73 = vsel %vm69, %v66, 0.0
  %74 = vadd.xlane.f32.xlu0 %v73
  %v75 = vpop.xlane.xlu0 %74
  %v76 = vrcp.pop 32.0
  %v77 = vmul.f32 %v72, %v76
  %v78 = vmul.f32 %v75, %v76
  %v79 = vsub.f32 %v65, %v77
  %v80 = vsub.f32 %v66, %v78
  %v81 = vmul.f32 %v79, %v79
  %v82 = vmul.f32 %v80, %v80
  %v83 = vsel %vm69, %v81, 0.0
  %84 = vadd.xlane.f32.xlu0 %v83
  %v85 = vpop.xlane.xlu0 %84
  %v86 = vsel %vm69, %v82, 0.0
  %87 = vadd.xlane.f32.xlu0 %v86
  %v88 = vpop.xlane.xlu0 %87
  %v89 = vmul.f32 %v85, %v76
  %v90 = vmul.f32 %v88, %v76
  %v91 = vadd.f32 %v89, 1e-12
  %v92 = vadd.f32 %v90, 1e-12
  %v93 = vrsqrt.pop %v91
  %v94 = vrsqrt.pop %v92
  %v95 = vmul.f32 %v79, %v93
  %v96 = vmul.f32 %v80, %v94
  %v98 = vlaneseq
  %v99 = vshrl.u32 %v98, 7
  %v100 = vsub.s32 0, %v99
  %v101 = vrot.slane %v67, %v100
  %v103 = vmul.f32 %v95, %v101
  %v104 = vmul.f32 %v96, %v101
  %v106 = vlaneseq
  %v107 = vshrl.u32 %v106, 7
  %v108 = vsub.s32 0, %v107
  %v109 = vrot.slane %v68, %v108
  %v111 = vadd.f32 %v103, %v109
  %v112 = vadd.f32 %v104, %v109
  %v113 = vld [vmem:[%s1] sm:$0x3]
  %v114 = vld [vmem:[%s4] sm:$0xff]
  %v115 = vld [vmem:[%s4 + $0x8] sm:$0xff]
  %v116 = vld [vmem:[%s4 + $0x10] sm:$0xff]
  %v117 = vld [vmem:[%s4 + $0x18] sm:$0xff]
  %v118 = vld [vmem:[%s5] sm:$0x1]
  %v120 = vlaneseq
  %v121 = vshrl.u32 %v120, 7
  %v122 = vsub.s32 0, %v121
  %v123 = vrot.slane %v118, %v122
  %v126 = vsel %vm69, %v111, 0
  %v129 = vsel %vm69, %v112, 0
  %131 = vmatprep.subr.mxu0 0.0
  %132 = vmatpush1.msra.mxu0 %v114
  %133 = vmatprep.subr.mxu0 0.0
  %134 = vmatpush1.msra.mxu0 %v115
  %135 = vmatprep.subr.mxu0 0.0
  %136 = vmatpush1.msra.mxu0 %v116
  %137 = vmatprep.subr.mxu0 0.0
  %138 = vmatpush1.msra.mxu0 %v117
  %139 = vmatprep.subr.mxu0 0.0
  %140 = vmatpush1.msra.mxu0 0.0
  %141 = vmatprep.subr.mxu0 0.0
  %142 = vmatpush1.msra.mxu0 0.0
  %143 = vmatprep.subr.mxu0 0.0
  %144 = vmatpush1.msra.mxu0 0.0
  %145 = vmatprep.subr.mxu0 0.0
  %146 = vmatpush1.msra.mxu0 0.0
  %147 = vmatprep.subr.mxu0 0.0
  %148 = vmatpush1.msra.mxu0 0.0
  %149 = vmatprep.subr.mxu0 0.0
  %150 = vmatpush1.msra.mxu0 0.0
  %151 = vmatprep.subr.mxu0 0.0
  %152 = vmatpush1.msra.mxu0 0.0
  %153 = vmatprep.subr.mxu0 0.0
  %154 = vmatpush1.msra.mxu0 0.0
  %155 = vmatprep.subr.mxu0 0.0
  %156 = vmatpush1.msra.mxu0 0.0
  %157 = vmatprep.subr.mxu0 0.0
  %158 = vmatpush1.msra.mxu0 0.0
  %159 = vmatprep.subr.mxu0 0.0
  %160 = vmatpush1.msra.mxu0 0.0
  %161 = vmatprep.subr.mxu0 0.0
  %162 = vmatpush1.msra.mxu0 0.0
  %163 = vmatprep.subr.mxu0 0.0
  %164 = vmatpush1.msra.mxu0 0.0
  %165 = vmatprep.subr.mxu0 0.0
  %166 = vmatpush1.msra.mxu0 0.0
  %167 = vmatprep.subr.mxu0 0.0
  %168 = vmatpush1.msra.mxu0 0.0
  %169 = vmatprep.subr.mxu0 0.0
  %170 = vmatpush1.msra.mxu0 0.0
  %171 = vmatprep.subr.mxu0 0.0
  %172 = vmatpush1.msra.mxu0 0.0
  %173 = vmatprep.subr.mxu0 0.0
  %174 = vmatpush1.msra.mxu0 0.0
  %175 = vmatprep.subr.mxu0 0.0
  %176 = vmatpush1.msra.mxu0 0.0
  %177 = vmatprep.subr.mxu0 0.0
  %178 = vmatpush1.msra.mxu0 0.0
  %179 = vmatprep.subr.mxu0 0.0
  %180 = vmatpush1.msra.mxu0 0.0
  %181 = vmatprep.subr.mxu0 0.0
  %182 = vmatpush1.msra.mxu0 0.0
  %183 = vmatprep.subr.mxu0 0.0
  %184 = vmatpush1.msra.mxu0 0.0
  %185 = vmatprep.subr.mxu0 0.0
  %186 = vmatpush1.msra.mxu0 0.0
  %187 = vmatprep.subr.mxu0 0.0
  %188 = vmatpush1.msra.mxu0 0.0
  %189 = vmatprep.subr.mxu0 0.0
  %190 = vmatpush1.msra.mxu0 0.0
  %191 = vmatprep.subr.mxu0 0.0
  %192 = vmatpush1.msra.mxu0 0.0
  %193 = vmatprep.subr.mxu0 0.0
  %194 = vmatpush1.msra.mxu0 0.0
  %195 = vmatprep.mubr.f32.mxu0 0.0
  %196 = vmatmul.mubr.f32.gmra.mrb[0].mxu0 %v126
  %v197 = vpop.f32.mrb[0].mxu0
  %v198 = vadd.f32 %v123, %v197
  %v199 = vpop.f32.mrb[0].mxu0
  %200 = vmatprep.mubr.f32.mxu0 0.0
  %201 = vmatmul.mubr.f32.gmra.mrb[0].mxu0 %v129
  %v202 = vpop.f32.mrb[0].mxu0
  %v203 = vadd.f32 %v123, %v202
  %v204 = vpop.f32.mrb[0].mxu0
  %205 = vdwg.mxu0
  %v206 = vlaneseq
  %v207 = vshrl.u32 %v206, 7
  %v208 = vsub.s32 0, %v207
  %v209 = vrot.slane %v113, %v208
  %211 = vrot.lane.b32.xlu0 %v198, 96
  %v212 = vpop.permute.xlu0 %211
  %vm213 = vcmask 64512
  %v214 = vsel %vm213, %v198, 0
  %v216 = vsel %vm213, %v212, 0
  %218 = vmatprep.subr.mxu0 0.0
  %219 = vmatpush1.xpose.msra.mxu0 %v216
  %220 = vmatprep.subr.mxu0 0.0
  %221 = vmatpush1.xpose.msra.mxu0 0.0
  %222 = vmatprep.subr.mxu0 0.0
  %223 = vmatpush1.xpose.msra.mxu0 0.0
  %224 = vmatprep.subr.mxu0 0.0
  %225 = vmatpush1.xpose.msra.mxu0 0.0
  %226 = vmatprep.subr.mxu0 0.0
  %227 = vmatpush1.xpose.msra.mxu0 0.0
  %228 = vmatprep.subr.mxu0 0.0
  %229 = vmatpush1.xpose.msra.mxu0 0.0
  %230 = vmatprep.subr.mxu0 0.0
  %231 = vmatpush1.xpose.msra.mxu0 0.0
  %232 = vmatprep.subr.mxu0 0.0
  %233 = vmatpush1.xpose.msra.mxu0 0.0
  %234 = vmatprep.subr.mxu0 0.0
  %235 = vmatpush1.xpose.msra.mxu0 0.0
  %236 = vmatprep.subr.mxu0 0.0
  %237 = vmatpush1.xpose.msra.mxu0 0.0
  %238 = vmatprep.subr.mxu0 0.0
  %239 = vmatpush1.xpose.msra.mxu0 0.0
  %240 = vmatprep.subr.mxu0 0.0
  %241 = vmatpush1.xpose.msra.mxu0 0.0
  %242 = vmatprep.subr.mxu0 0.0
  %243 = vmatpush1.xpose.msra.mxu0 0.0
  %244 = vmatprep.subr.mxu0 0.0
  %245 = vmatpush1.xpose.msra.mxu0 0.0
  %246 = vmatprep.subr.mxu0 0.0
  %247 = vmatpush1.xpose.msra.mxu0 0.0
  %248 = vmatprep.subr.mxu0 0.0
  %249 = vmatpush1.xpose.msra.mxu0 0.0
  %250 = vmatprep.subr.mxu0 0.0
  %251 = vmatpush1.xpose.msra.mxu0 0.0
  %252 = vmatprep.subr.mxu0 0.0
  %253 = vmatpush1.xpose.msra.mxu0 0.0
  %254 = vmatprep.subr.mxu0 0.0
  %255 = vmatpush1.xpose.msra.mxu0 0.0
  %256 = vmatprep.subr.mxu0 0.0
  %257 = vmatpush1.xpose.msra.mxu0 0.0
  %258 = vmatprep.subr.mxu0 0.0
  %259 = vmatpush1.xpose.msra.mxu0 0.0
  %260 = vmatprep.subr.mxu0 0.0
  %261 = vmatpush1.xpose.msra.mxu0 0.0
  %262 = vmatprep.subr.mxu0 0.0
  %263 = vmatpush1.xpose.msra.mxu0 0.0
  %264 = vmatprep.subr.mxu0 0.0
  %265 = vmatpush1.xpose.msra.mxu0 0.0
  %266 = vmatprep.subr.mxu0 0.0
  %267 = vmatpush1.xpose.msra.mxu0 0.0
  %268 = vmatprep.subr.mxu0 0.0
  %269 = vmatpush1.xpose.msra.mxu0 0.0
  %270 = vmatprep.subr.mxu0 0.0
  %271 = vmatpush1.xpose.msra.mxu0 0.0
  %272 = vmatprep.subr.mxu0 0.0
  %273 = vmatpush1.xpose.msra.mxu0 0.0
  %274 = vmatprep.subr.mxu0 0.0
  %275 = vmatpush1.xpose.msra.mxu0 0.0
  %276 = vmatprep.subr.mxu0 0.0
  %277 = vmatpush1.xpose.msra.mxu0 0.0
  %278 = vmatprep.subr.mxu0 0.0
  %279 = vmatpush1.xpose.msra.mxu0 0.0
  %280 = vmatprep.subr.mxu0 0.0
  %281 = vmatpush1.xpose.msra.mxu0 0.0
  %282 = vmatprep.mubr.f32.mxu0 0.0
  %283 = vmatmul.mubr.f32.gmra.mrb[0].mxu0 %v214
  %v284 = vpop.f32.mrb[0].mxu0
  %v285 = vadd.f32 %v209, %v284
  %v286 = vpop.f32.mrb[0].mxu0
  %287 = vdwg.mxu0
  %v288 = vsel %vm213, %v285, -inf
  %289 = vmax.xlane.f32.xlu0 %v288
  %v290 = vpop.xlane.xlu0 %289
  %v291 = vsub.f32 %v285, %v290
  %v292 = vmul.f32 %v291, 1.442695
  %v293 = vpow.pop %v292
  %v294 = vsel %vm213, %v293, 0.0
  %295 = vadd.xlane.f32.xlu0 %v294
  %v296 = vpop.xlane.xlu0 %295
  %v297 = vrcp.pop %v296
  %v298 = vmul.f32 %v293, %v297
  %299 = vrot.lane.b32.xlu0 %v198, 64
  %v300 = vpop.permute.xlu0 %299
  %v303 = vsel %vm213, %v298, 0
  %305 = vmatprep.subr.mxu0 0.0
  %306 = vmatpush1.msra.mxu0 %v300
  %307 = vmatprep.subr.mxu0 0.0
  %308 = vmatpush1.msra.mxu0 0.0
  %309 = vmatprep.subr.mxu0 0.0
  %310 = vmatpush1.msra.mxu0 0.0
  %311 = vmatprep.subr.mxu0 0.0
  %312 = vmatpush1.msra.mxu0 0.0
  %313 = vmatprep.subr.mxu0 0.0
  %314 = vmatpush1.msra.mxu0 0.0
  %315 = vmatprep.subr.mxu0 0.0
  %316 = vmatpush1.msra.mxu0 0.0
  %317 = vmatprep.subr.mxu0 0.0
  %318 = vmatpush1.msra.mxu0 0.0
  %319 = vmatprep.subr.mxu0 0.0
  %320 = vmatpush1.msra.mxu0 0.0
  %321 = vmatprep.subr.mxu0 0.0
  %322 = vmatpush1.msra.mxu0 0.0
  %323 = vmatprep.subr.mxu0 0.0
  %324 = vmatpush1.msra.mxu0 0.0
  %325 = vmatprep.subr.mxu0 0.0
  %326 = vmatpush1.msra.mxu0 0.0
  %327 = vmatprep.subr.mxu0 0.0
  %328 = vmatpush1.msra.mxu0 0.0
  %329 = vmatprep.subr.mxu0 0.0
  %330 = vmatpush1.msra.mxu0 0.0
  %331 = vmatprep.subr.mxu0 0.0
  %332 = vmatpush1.msra.mxu0 0.0
  %333 = vmatprep.subr.mxu0 0.0
  %334 = vmatpush1.msra.mxu0 0.0
  %335 = vmatprep.subr.mxu0 0.0
  %336 = vmatpush1.msra.mxu0 0.0
  %337 = vmatprep.subr.mxu0 0.0
  %338 = vmatpush1.msra.mxu0 0.0
  %339 = vmatprep.subr.mxu0 0.0
  %340 = vmatpush1.msra.mxu0 0.0
  %341 = vmatprep.subr.mxu0 0.0
  %342 = vmatpush1.msra.mxu0 0.0
  %343 = vmatprep.subr.mxu0 0.0
  %344 = vmatpush1.msra.mxu0 0.0
  %345 = vmatprep.subr.mxu0 0.0
  %346 = vmatpush1.msra.mxu0 0.0
  %347 = vmatprep.subr.mxu0 0.0
  %348 = vmatpush1.msra.mxu0 0.0
  %349 = vmatprep.subr.mxu0 0.0
  %350 = vmatpush1.msra.mxu0 0.0
  %351 = vmatprep.subr.mxu0 0.0
  %352 = vmatpush1.msra.mxu0 0.0
  %353 = vmatprep.subr.mxu0 0.0
  %354 = vmatpush1.msra.mxu0 0.0
  %355 = vmatprep.subr.mxu0 0.0
  %356 = vmatpush1.msra.mxu0 0.0
  %357 = vmatprep.subr.mxu0 0.0
  %358 = vmatpush1.msra.mxu0 0.0
  %359 = vmatprep.subr.mxu0 0.0
  %360 = vmatpush1.msra.mxu0 0.0
  %361 = vmatprep.subr.mxu0 0.0
  %362 = vmatpush1.msra.mxu0 0.0
  %363 = vmatprep.subr.mxu0 0.0
  %364 = vmatpush1.msra.mxu0 0.0
  %365 = vmatprep.subr.mxu0 0.0
  %366 = vmatpush1.msra.mxu0 0.0
  %367 = vmatprep.subr.mxu0 0.0
  %368 = vmatpush1.msra.mxu0 0.0
  %369 = vmatprep.mubr.f32.mxu0 0.0
  %370 = vmatmul.mubr.f32.gmra.mrb[0].mxu0 %v303
  %v371 = vpop.f32.mrb[0].mxu0
  %v372 = vadd.f32 0.0, %v371
  %v373 = vpop.f32.mrb[0].mxu0
  %374 = vdwg.mxu0
  %375 = vst.msk [vmem:[#allocation2] sm:$0xff] %vm213, %v372
  %376 = vrot.lane.b32.xlu0 %v198, 120
  %v377 = vpop.permute.xlu0 %376
  %378 = vrot.lane.b32.xlu0 %v198, 88
  %v379 = vpop.permute.xlu0 %378
  %v380 = vsel %vm213, %v377, 0
  %v382 = vsel %vm213, %v379, 0
  %384 = vmatprep.subr.mxu0 0.0
  %385 = vmatpush1.xpose.msra.mxu0 %v382
  %386 = vmatprep.subr.mxu0 0.0
  %387 = vmatpush1.xpose.msra.mxu0 0.0
  %388 = vmatprep.subr.mxu0 0.0
  %389 = vmatpush1.xpose.msra.mxu0 0.0
  %390 = vmatprep.subr.mxu0 0.0
  %391 = vmatpush1.xpose.msra.mxu0 0.0
  %392 = vmatprep.subr.mxu0 0.0
  %393 = vmatpush1.xpose.msra.mxu0 0.0
  %394 = vmatprep.subr.mxu0 0.0
  %395 = vmatpush1.xpose.msra.mxu0 0.0
  %396 = vmatprep.subr.mxu0 0.0
  %397 = vmatpush1.xpose.msra.mxu0 0.0
  %398 = vmatprep.subr.mxu0 0.0
  %399 = vmatpush1.xpose.msra.mxu0 0.0
  %400 = vmatprep.subr.mxu0 0.0
  %401 = vmatpush1.xpose.msra.mxu0 0.0
  %402 = vmatprep.subr.mxu0 0.0
  %403 = vmatpush1.xpose.msra.mxu0 0.0
  %404 = vmatprep.subr.mxu0 0.0
  %405 = vmatpush1.xpose.msra.mxu0 0.0
  %406 = vmatprep.subr.mxu0 0.0
  %407 = vmatpush1.xpose.msra.mxu0 0.0
  %408 = vmatprep.subr.mxu0 0.0
  %409 = vmatpush1.xpose.msra.mxu0 0.0
  %410 = vmatprep.subr.mxu0 0.0
  %411 = vmatpush1.xpose.msra.mxu0 0.0
  %412 = vmatprep.subr.mxu0 0.0
  %413 = vmatpush1.xpose.msra.mxu0 0.0
  %414 = vmatprep.subr.mxu0 0.0
  %415 = vmatpush1.xpose.msra.mxu0 0.0
  %416 = vmatprep.subr.mxu0 0.0
  %417 = vmatpush1.xpose.msra.mxu0 0.0
  %418 = vmatprep.subr.mxu0 0.0
  %419 = vmatpush1.xpose.msra.mxu0 0.0
  %420 = vmatprep.subr.mxu0 0.0
  %421 = vmatpush1.xpose.msra.mxu0 0.0
  %422 = vmatprep.subr.mxu0 0.0
  %423 = vmatpush1.xpose.msra.mxu0 0.0
  %424 = vmatprep.subr.mxu0 0.0
  %425 = vmatpush1.xpose.msra.mxu0 0.0
  %426 = vmatprep.subr.mxu0 0.0
  %427 = vmatpush1.xpose.msra.mxu0 0.0
  %428 = vmatprep.subr.mxu0 0.0
  %429 = vmatpush1.xpose.msra.mxu0 0.0
  %430 = vmatprep.subr.mxu0 0.0
  %431 = vmatpush1.xpose.msra.mxu0 0.0
  %432 = vmatprep.subr.mxu0 0.0
  %433 = vmatpush1.xpose.msra.mxu0 0.0
  %434 = vmatprep.subr.mxu0 0.0
  %435 = vmatpush1.xpose.msra.mxu0 0.0
  %436 = vmatprep.subr.mxu0 0.0
  %437 = vmatpush1.xpose.msra.mxu0 0.0
  %438 = vmatprep.subr.mxu0 0.0
  %439 = vmatpush1.xpose.msra.mxu0 0.0
  %440 = vmatprep.subr.mxu0 0.0
  %441 = vmatpush1.xpose.msra.mxu0 0.0
  %442 = vmatprep.subr.mxu0 0.0
  %443 = vmatpush1.xpose.msra.mxu0 0.0
  %444 = vmatprep.subr.mxu0 0.0
  %445 = vmatpush1.xpose.msra.mxu0 0.0
  %446 = vmatprep.subr.mxu0 0.0
  %447 = vmatpush1.xpose.msra.mxu0 0.0
  %448 = vmatprep.mubr.f32.mxu0 0.0
  %449 = vmatmul.mubr.f32.gmra.mrb[0].mxu0 %v380
  %v450 = vpop.f32.mrb[0].mxu0
  %v451 = vadd.f32 %v209, %v450
  %v452 = vpop.f32.mrb[0].mxu0
  %453 = vdwg.mxu0
  %v454 = vsel %vm213, %v451, -inf
  %455 = vmax.xlane.f32.xlu0 %v454
  %v456 = vpop.xlane.xlu0 %455
  %v457 = vsub.f32 %v451, %v456
  %v458 = vmul.f32 %v457, 1.442695
  %v459 = vpow.pop %v458
  %v460 = vsel %vm213, %v459, 0.0
  %461 = vadd.xlane.f32.xlu0 %v460
  %v462 = vpop.xlane.xlu0 %461
  %v463 = vrcp.pop %v462
  %v464 = vmul.f32 %v459, %v463
  %465 = vrot.lane.b32.xlu0 %v198, 56
  %v466 = vpop.permute.xlu0 %465
  %v469 = vsel %vm213, %v464, 0
  %471 = vmatprep.subr.mxu0 0.0
  %472 = vmatpush1.msra.mxu0 %v466
  %473 = vmatprep.subr.mxu0 0.0
  %474 = vmatpush1.msra.mxu0 0.0
  %475 = vmatprep.subr.mxu0 0.0
  %476 = vmatpush1.msra.mxu0 0.0
  %477 = vmatprep.subr.mxu0 0.0
  %478 = vmatpush1.msra.mxu0 0.0
  %479 = vmatprep.subr.mxu0 0.0
  %480 = vmatpush1.msra.mxu0 0.0
  %481 = vmatprep.subr.mxu0 0.0
  %482 = vmatpush1.msra.mxu0 0.0
  %483 = vmatprep.subr.mxu0 0.0
  %484 = vmatpush1.msra.mxu0 0.0
  %485 = vmatprep.subr.mxu0 0.0
  %486 = vmatpush1.msra.mxu0 0.0
  %487 = vmatprep.subr.mxu0 0.0
  %488 = vmatpush1.msra.mxu0 0.0
  %489 = vmatprep.subr.mxu0 0.0
  %490 = vmatpush1.msra.mxu0 0.0
  %491 = vmatprep.subr.mxu0 0.0
  %492 = vmatpush1.msra.mxu0 0.0
  %493 = vmatprep.subr.mxu0 0.0
  %494 = vmatpush1.msra.mxu0 0.0
  %495 = vmatprep.subr.mxu0 0.0
  %496 = vmatpush1.msra.mxu0 0.0
  %497 = vmatprep.subr.mxu0 0.0
  %498 = vmatpush1.msra.mxu0 0.0
  %499 = vmatprep.subr.mxu0 0.0
  %500 = vmatpush1.msra.mxu0 0.0
  %501 = vmatprep.subr.mxu0 0.0
  %502 = vmatpush1.msra.mxu0 0.0
  %503 = vmatprep.subr.mxu0 0.0
  %504 = vmatpush1.msra.mxu0 0.0
  %505 = vmatprep.subr.mxu0 0.0
  %506 = vmatpush1.msra.mxu0 0.0
  %507 = vmatprep.subr.mxu0 0.0
  %508 = vmatpush1.msra.mxu0 0.0
  %509 = vmatprep.subr.mxu0 0.0
  %510 = vmatpush1.msra.mxu0 0.0
  %511 = vmatprep.subr.mxu0 0.0
  %512 = vmatpush1.msra.mxu0 0.0
  %513 = vmatprep.subr.mxu0 0.0
  %514 = vmatpush1.msra.mxu0 0.0
  %515 = vmatprep.subr.mxu0 0.0
  %516 = vmatpush1.msra.mxu0 0.0
  %517 = vmatprep.subr.mxu0 0.0
  %518 = vmatpush1.msra.mxu0 0.0
  %519 = vmatprep.subr.mxu0 0.0
  %520 = vmatpush1.msra.mxu0 0.0
  %521 = vmatprep.subr.mxu0 0.0
  %522 = vmatpush1.msra.mxu0 0.0
  %523 = vmatprep.subr.mxu0 0.0
  %524 = vmatpush1.msra.mxu0 0.0
  %525 = vmatprep.subr.mxu0 0.0
  %526 = vmatpush1.msra.mxu0 0.0
  %527 = vmatprep.subr.mxu0 0.0
  %528 = vmatpush1.msra.mxu0 0.0
  %529 = vmatprep.subr.mxu0 0.0
  %530 = vmatpush1.msra.mxu0 0.0
  %531 = vmatprep.subr.mxu0 0.0
  %532 = vmatpush1.msra.mxu0 0.0
  %533 = vmatprep.subr.mxu0 0.0
  %534 = vmatpush1.msra.mxu0 0.0
  %535 = vmatprep.mubr.f32.mxu0 0.0
  %536 = vmatmul.mubr.f32.gmra.mrb[0].mxu0 %v469
  %v537 = vpop.f32.mrb[0].mxu0
  %v538 = vadd.f32 0.0, %v537
  %v539 = vpop.f32.mrb[0].mxu0
  %540 = vdwg.mxu0
  %542 = vrot.lane.b32.xlu0 %v538, 8
  %v543 = vpop.permute.xlu0 %542
  %vm545 = vcmask 130112
  %546 = vst.msk [vmem:[#allocation2] sm:$0xff] %vm545, %v543
  %547 = vrot.lane.b32.xlu0 %v198, 112
  %v548 = vpop.permute.xlu0 %547
  %549 = vrot.lane.b32.xlu0 %v198, 80
  %v550 = vpop.permute.xlu0 %549
  %v551 = vsel %vm213, %v548, 0
  %v553 = vsel %vm213, %v550, 0
  %555 = vmatprep.subr.mxu0 0.0
  %556 = vmatpush1.xpose.msra.mxu0 %v553
  %557 = vmatprep.subr.mxu0 0.0
  %558 = vmatpush1.xpose.msra.mxu0 0.0
  %559 = vmatprep.subr.mxu0 0.0
  %560 = vmatpush1.xpose.msra.mxu0 0.0
  %561 = vmatprep.subr.mxu0 0.0
  %562 = vmatpush1.xpose.msra.mxu0 0.0
  %563 = vmatprep.subr.mxu0 0.0
  %564 = vmatpush1.xpose.msra.mxu0 0.0
  %565 = vmatprep.subr.mxu0 0.0
  %566 = vmatpush1.xpose.msra.mxu0 0.0
  %567 = vmatprep.subr.mxu0 0.0
  %568 = vmatpush1.xpose.msra.mxu0 0.0
  %569 = vmatprep.subr.mxu0 0.0
  %570 = vmatpush1.xpose.msra.mxu0 0.0
  %571 = vmatprep.subr.mxu0 0.0
  %572 = vmatpush1.xpose.msra.mxu0 0.0
  %573 = vmatprep.subr.mxu0 0.0
  %574 = vmatpush1.xpose.msra.mxu0 0.0
  %575 = vmatprep.subr.mxu0 0.0
  %576 = vmatpush1.xpose.msra.mxu0 0.0
  %577 = vmatprep.subr.mxu0 0.0
  %578 = vmatpush1.xpose.msra.mxu0 0.0
  %579 = vmatprep.subr.mxu0 0.0
  %580 = vmatpush1.xpose.msra.mxu0 0.0
  %581 = vmatprep.subr.mxu0 0.0
  %582 = vmatpush1.xpose.msra.mxu0 0.0
  %583 = vmatprep.subr.mxu0 0.0
  %584 = vmatpush1.xpose.msra.mxu0 0.0
  %585 = vmatprep.subr.mxu0 0.0
  %586 = vmatpush1.xpose.msra.mxu0 0.0
  %587 = vmatprep.subr.mxu0 0.0
  %588 = vmatpush1.xpose.msra.mxu0 0.0
  %589 = vmatprep.subr.mxu0 0.0
  %590 = vmatpush1.xpose.msra.mxu0 0.0
  %591 = vmatprep.subr.mxu0 0.0
  %592 = vmatpush1.xpose.msra.mxu0 0.0
  %593 = vmatprep.subr.mxu0 0.0
  %594 = vmatpush1.xpose.msra.mxu0 0.0
  %595 = vmatprep.subr.mxu0 0.0
  %596 = vmatpush1.xpose.msra.mxu0 0.0
  %597 = vmatprep.subr.mxu0 0.0
  %598 = vmatpush1.xpose.msra.mxu0 0.0
  %599 = vmatprep.subr.mxu0 0.0
  %600 = vmatpush1.xpose.msra.mxu0 0.0
  %601 = vmatprep.subr.mxu0 0.0
  %602 = vmatpush1.xpose.msra.mxu0 0.0
  %603 = vmatprep.subr.mxu0 0.0
  %604 = vmatpush1.xpose.msra.mxu0 0.0
  %605 = vmatprep.subr.mxu0 0.0
  %606 = vmatpush1.xpose.msra.mxu0 0.0
  %607 = vmatprep.subr.mxu0 0.0
  %608 = vmatpush1.xpose.msra.mxu0 0.0
  %609 = vmatprep.subr.mxu0 0.0
  %610 = vmatpush1.xpose.msra.mxu0 0.0
  %611 = vmatprep.subr.mxu0 0.0
  %612 = vmatpush1.xpose.msra.mxu0 0.0
  %613 = vmatprep.subr.mxu0 0.0
  %614 = vmatpush1.xpose.msra.mxu0 0.0
  %615 = vmatprep.subr.mxu0 0.0
  %616 = vmatpush1.xpose.msra.mxu0 0.0
  %617 = vmatprep.subr.mxu0 0.0
  %618 = vmatpush1.xpose.msra.mxu0 0.0
  %619 = vmatprep.mubr.f32.mxu0 0.0
  %620 = vmatmul.mubr.f32.gmra.mrb[0].mxu0 %v551
  %v621 = vpop.f32.mrb[0].mxu0
  %v622 = vadd.f32 %v209, %v621
  %v623 = vpop.f32.mrb[0].mxu0
  %624 = vdwg.mxu0
  %v625 = vsel %vm213, %v622, -inf
  %626 = vmax.xlane.f32.xlu0 %v625
  %v627 = vpop.xlane.xlu0 %626
  %v628 = vsub.f32 %v622, %v627
  %v629 = vmul.f32 %v628, 1.442695
  %v630 = vpow.pop %v629
  %v631 = vsel %vm213, %v630, 0.0
  %632 = vadd.xlane.f32.xlu0 %v631
  %v633 = vpop.xlane.xlu0 %632
  %v634 = vrcp.pop %v633
  %v635 = vmul.f32 %v630, %v634
  %636 = vrot.lane.b32.xlu0 %v198, 48
  %v637 = vpop.permute.xlu0 %636
  %v640 = vsel %vm213, %v635, 0
  %642 = vmatprep.subr.mxu0 0.0
  %643 = vmatpush1.msra.mxu0 %v637
  %644 = vmatprep.subr.mxu0 0.0
  %645 = vmatpush1.msra.mxu0 0.0
  %646 = vmatprep.subr.mxu0 0.0
  %647 = vmatpush1.msra.mxu0 0.0
  %648 = vmatprep.subr.mxu0 0.0
  %649 = vmatpush1.msra.mxu0 0.0
  %650 = vmatprep.subr.mxu0 0.0
  %651 = vmatpush1.msra.mxu0 0.0
  %652 = vmatprep.subr.mxu0 0.0
  %653 = vmatpush1.msra.mxu0 0.0
  %654 = vmatprep.subr.mxu0 0.0
  %655 = vmatpush1.msra.mxu0 0.0
  %656 = vmatprep.subr.mxu0 0.0
  %657 = vmatpush1.msra.mxu0 0.0
  %658 = vmatprep.subr.mxu0 0.0
  %659 = vmatpush1.msra.mxu0 0.0
  %660 = vmatprep.subr.mxu0 0.0
  %661 = vmatpush1.msra.mxu0 0.0
  %662 = vmatprep.subr.mxu0 0.0
  %663 = vmatpush1.msra.mxu0 0.0
  %664 = vmatprep.subr.mxu0 0.0
  %665 = vmatpush1.msra.mxu0 0.0
  %666 = vmatprep.subr.mxu0 0.0
  %667 = vmatpush1.msra.mxu0 0.0
  %668 = vmatprep.subr.mxu0 0.0
  %669 = vmatpush1.msra.mxu0 0.0
  %670 = vmatprep.subr.mxu0 0.0
  %671 = vmatpush1.msra.mxu0 0.0
  %672 = vmatprep.subr.mxu0 0.0
  %673 = vmatpush1.msra.mxu0 0.0
  %674 = vmatprep.subr.mxu0 0.0
  %675 = vmatpush1.msra.mxu0 0.0
  %676 = vmatprep.subr.mxu0 0.0
  %677 = vmatpush1.msra.mxu0 0.0
  %678 = vmatprep.subr.mxu0 0.0
  %679 = vmatpush1.msra.mxu0 0.0
  %680 = vmatprep.subr.mxu0 0.0
  %681 = vmatpush1.msra.mxu0 0.0
  %682 = vmatprep.subr.mxu0 0.0
  %683 = vmatpush1.msra.mxu0 0.0
  %684 = vmatprep.subr.mxu0 0.0
  %685 = vmatpush1.msra.mxu0 0.0
  %686 = vmatprep.subr.mxu0 0.0
  %687 = vmatpush1.msra.mxu0 0.0
  %688 = vmatprep.subr.mxu0 0.0
  %689 = vmatpush1.msra.mxu0 0.0
  %690 = vmatprep.subr.mxu0 0.0
  %691 = vmatpush1.msra.mxu0 0.0
  %692 = vmatprep.subr.mxu0 0.0
  %693 = vmatpush1.msra.mxu0 0.0
  %694 = vmatprep.subr.mxu0 0.0
  %695 = vmatpush1.msra.mxu0 0.0
  %696 = vmatprep.subr.mxu0 0.0
  %697 = vmatpush1.msra.mxu0 0.0
  %698 = vmatprep.subr.mxu0 0.0
  %699 = vmatpush1.msra.mxu0 0.0
  %700 = vmatprep.subr.mxu0 0.0
  %701 = vmatpush1.msra.mxu0 0.0
  %702 = vmatprep.subr.mxu0 0.0
  %703 = vmatpush1.msra.mxu0 0.0
  %704 = vmatprep.subr.mxu0 0.0
  %705 = vmatpush1.msra.mxu0 0.0
  %706 = vmatprep.mubr.f32.mxu0 0.0
  %707 = vmatmul.mubr.f32.gmra.mrb[0].mxu0 %v640
  %v708 = vpop.f32.mrb[0].mxu0
  %v709 = vadd.f32 0.0, %v708
  %v710 = vpop.f32.mrb[0].mxu0
  %711 = vdwg.mxu0
  %713 = vrot.lane.b32.xlu0 %v709, 16
  %v714 = vpop.permute.xlu0 %713
  %vm716 = vcmask 195712
  %717 = vst.msk [vmem:[#allocation2] sm:$0xff] %vm716, %v714
  %718 = vrot.lane.b32.xlu0 %v198, 104
  %v719 = vpop.permute.xlu0 %718
  %720 = vrot.lane.b32.xlu0 %v198, 72
  %v721 = vpop.permute.xlu0 %720
  %v722 = vsel %vm213, %v719, 0
  %v724 = vsel %vm213, %v721, 0
  %726 = vmatprep.subr.mxu0 0.0
  %727 = vmatpush1.xpose.msra.mxu0 %v724
  %728 = vmatprep.subr.mxu0 0.0
  %729 = vmatpush1.xpose.msra.mxu0 0.0
  %730 = vmatprep.subr.mxu0 0.0
  %731 = vmatpush1.xpose.msra.mxu0 0.0
  %732 = vmatprep.subr.mxu0 0.0
  %733 = vmatpush1.xpose.msra.mxu0 0.0
  %734 = vmatprep.subr.mxu0 0.0
  %735 = vmatpush1.xpose.msra.mxu0 0.0
  %736 = vmatprep.subr.mxu0 0.0
  %737 = vmatpush1.xpose.msra.mxu0 0.0
  %738 = vmatprep.subr.mxu0 0.0
  %739 = vmatpush1.xpose.msra.mxu0 0.0
  %740 = vmatprep.subr.mxu0 0.0
  %741 = vmatpush1.xpose.msra.mxu0 0.0
  %742 = vmatprep.subr.mxu0 0.0
  %743 = vmatpush1.xpose.msra.mxu0 0.0
  %744 = vmatprep.subr.mxu0 0.0
  %745 = vmatpush1.xpose.msra.mxu0 0.0
  %746 = vmatprep.subr.mxu0 0.0
  %747 = vmatpush1.xpose.msra.mxu0 0.0
  %748 = vmatprep.subr.mxu0 0.0
  %749 = vmatpush1.xpose.msra.mxu0 0.0
  %750 = vmatprep.subr.mxu0 0.0
  %751 = vmatpush1.xpose.msra.mxu0 0.0
  %752 = vmatprep.subr.mxu0 0.0
  %753 = vmatpush1.xpose.msra.mxu0 0.0
  %754 = vmatprep.subr.mxu0 0.0
  %755 = vmatpush1.xpose.msra.mxu0 0.0
  %756 = vmatprep.subr.mxu0 0.0
  %757 = vmatpush1.xpose.msra.mxu0 0.0
  %758 = vmatprep.subr.mxu0 0.0
  %759 = vmatpush1.xpose.msra.mxu0 0.0
  %760 = vmatprep.subr.mxu0 0.0
  %761 = vmatpush1.xpose.msra.mxu0 0.0
  %762 = vmatprep.subr.mxu0 0.0
  %763 = vmatpush1.xpose.msra.mxu0 0.0
  %764 = vmatprep.subr.mxu0 0.0
  %765 = vmatpush1.xpose.msra.mxu0 0.0
  %766 = vmatprep.subr.mxu0 0.0
  %767 = vmatpush1.xpose.msra.mxu0 0.0
  %768 = vmatprep.subr.mxu0 0.0
  %769 = vmatpush1.xpose.msra.mxu0 0.0
  %770 = vmatprep.subr.mxu0 0.0
  %771 = vmatpush1.xpose.msra.mxu0 0.0
  %772 = vmatprep.subr.mxu0 0.0
  %773 = vmatpush1.xpose.msra.mxu0 0.0
  %774 = vmatprep.subr.mxu0 0.0
  %775 = vmatpush1.xpose.msra.mxu0 0.0
  %776 = vmatprep.subr.mxu0 0.0
  %777 = vmatpush1.xpose.msra.mxu0 0.0
  %778 = vmatprep.subr.mxu0 0.0
  %779 = vmatpush1.xpose.msra.mxu0 0.0
  %780 = vmatprep.subr.mxu0 0.0
  %781 = vmatpush1.xpose.msra.mxu0 0.0
  %782 = vmatprep.subr.mxu0 0.0
  %783 = vmatpush1.xpose.msra.mxu0 0.0
  %784 = vmatprep.subr.mxu0 0.0
  %785 = vmatpush1.xpose.msra.mxu0 0.0
  %786 = vmatprep.subr.mxu0 0.0
  %787 = vmatpush1.xpose.msra.mxu0 0.0
  %788 = vmatprep.subr.mxu0 0.0
  %789 = vmatpush1.xpose.msra.mxu0 0.0
  %790 = vmatprep.mubr.f32.mxu0 0.0
  %791 = vmatmul.mubr.f32.gmra.mrb[0].mxu0 %v722
  %v792 = vpop.f32.mrb[0].mxu0
  %v793 = vadd.f32 %v209, %v792
  %v794 = vpop.f32.mrb[0].mxu0
  %795 = vdwg.mxu0
  %v796 = vsel %vm213, %v793, -inf
  %797 = vmax.xlane.f32.xlu0 %v796
  %v798 = vpop.xlane.xlu0 %797
  %v799 = vsub.f32 %v793, %v798
  %v800 = vmul.f32 %v799, 1.442695
  %v801 = vpow.pop %v800
  %v802 = vsel %vm213, %v801, 0.0
  %803 = vadd.xlane.f32.xlu0 %v802
  %v804 = vpop.xlane.xlu0 %803
  %v805 = vrcp.pop %v804
  %v806 = vmul.f32 %v801, %v805
  %807 = vrot.lane.b32.xlu0 %v198, 40
  %v808 = vpop.permute.xlu0 %807
  %v811 = vsel %vm213, %v806, 0
  %813 = vmatprep.subr.mxu0 0.0
  %814 = vmatpush1.msra.mxu0 %v808
  %815 = vmatprep.subr.mxu0 0.0
  %816 = vmatpush1.msra.mxu0 0.0
  %817 = vmatprep.subr.mxu0 0.0
  %818 = vmatpush1.msra.mxu0 0.0
  %819 = vmatprep.subr.mxu0 0.0
  %820 = vmatpush1.msra.mxu0 0.0
  %821 = vmatprep.subr.mxu0 0.0
  %822 = vmatpush1.msra.mxu0 0.0
  %823 = vmatprep.subr.mxu0 0.0
  %824 = vmatpush1.msra.mxu0 0.0
  %825 = vmatprep.subr.mxu0 0.0
  %826 = vmatpush1.msra.mxu0 0.0
  %827 = vmatprep.subr.mxu0 0.0
  %828 = vmatpush1.msra.mxu0 0.0
  %829 = vmatprep.subr.mxu0 0.0
  %830 = vmatpush1.msra.mxu0 0.0
  %831 = vmatprep.subr.mxu0 0.0
  %832 = vmatpush1.msra.mxu0 0.0
  %833 = vmatprep.subr.mxu0 0.0
  %834 = vmatpush1.msra.mxu0 0.0
  %835 = vmatprep.subr.mxu0 0.0
  %836 = vmatpush1.msra.mxu0 0.0
  %837 = vmatprep.subr.mxu0 0.0
  %838 = vmatpush1.msra.mxu0 0.0
  %839 = vmatprep.subr.mxu0 0.0
  %840 = vmatpush1.msra.mxu0 0.0
  %841 = vmatprep.subr.mxu0 0.0
  %842 = vmatpush1.msra.mxu0 0.0
  %843 = vmatprep.subr.mxu0 0.0
  %844 = vmatpush1.msra.mxu0 0.0
  %845 = vmatprep.subr.mxu0 0.0
  %846 = vmatpush1.msra.mxu0 0.0
  %847 = vmatprep.subr.mxu0 0.0
  %848 = vmatpush1.msra.mxu0 0.0
  %849 = vmatprep.subr.mxu0 0.0
  %850 = vmatpush1.msra.mxu0 0.0
  %851 = vmatprep.subr.mxu0 0.0
  %852 = vmatpush1.msra.mxu0 0.0
  %853 = vmatprep.subr.mxu0 0.0
  %854 = vmatpush1.msra.mxu0 0.0
  %855 = vmatprep.subr.mxu0 0.0
  %856 = vmatpush1.msra.mxu0 0.0
  %857 = vmatprep.subr.mxu0 0.0
  %858 = vmatpush1.msra.mxu0 0.0
  %859 = vmatprep.subr.mxu0 0.0
  %860 = vmatpush1.msra.mxu0 0.0
  %861 = vmatprep.subr.mxu0 0.0
  %862 = vmatpush1.msra.mxu0 0.0
  %863 = vmatprep.subr.mxu0 0.0
  %864 = vmatpush1.msra.mxu0 0.0
  %865 = vmatprep.subr.mxu0 0.0
  %866 = vmatpush1.msra.mxu0 0.0
  %867 = vmatprep.subr.mxu0 0.0
  %868 = vmatpush1.msra.mxu0 0.0
  %869 = vmatprep.subr.mxu0 0.0
  %870 = vmatpush1.msra.mxu0 0.0
  %871 = vmatprep.subr.mxu0 0.0
  %872 = vmatpush1.msra.mxu0 0.0
  %873 = vmatprep.subr.mxu0 0.0
  %874 = vmatpush1.msra.mxu0 0.0
  %875 = vmatprep.subr.mxu0 0.0
  %876 = vmatpush1.msra.mxu0 0.0
  %877 = vmatprep.mubr.f32.mxu0 0.0
  %878 = vmatmul.mubr.f32.gmra.mrb[0].mxu0 %v811
  %v879 = vpop.f32.mrb[0].mxu0
  %v880 = vadd.f32 0.0, %v879
  %v881 = vpop.f32.mrb[0].mxu0
  %882 = vdwg.mxu0
  %884 = vrot.lane.b32.xlu0 %v880, 24
  %v885 = vpop.permute.xlu0 %884
  %vm887 = vcmask 261312
  %888 = vst.msk [vmem:[#allocation2] sm:$0xff] %vm887, %v885
  %v889 = vlaneseq
  %v890 = vshrl.u32 %v889, 7
  %v891 = vsub.s32 1, %v890
  %v892 = vrot.slane %v113, %v891
  %894 = vrot.lane.b32.xlu0 %v203, 96
  %v895 = vpop.permute.xlu0 %894
  %v896 = vsel %vm213, %v203, 0
  %v898 = vsel %vm213, %v895, 0
  %900 = vmatprep.subr.mxu0 0.0
  %901 = vmatpush1.xpose.msra.mxu0 %v898
  %902 = vmatprep.subr.mxu0 0.0
  %903 = vmatpush1.xpose.msra.mxu0 0.0
  %904 = vmatprep.subr.mxu0 0.0
  %905 = vmatpush1.xpose.msra.mxu0 0.0
  %906 = vmatprep.subr.mxu0 0.0
  %907 = vmatpush1.xpose.msra.mxu0 0.0
  %908 = vmatprep.subr.mxu0 0.0
  %909 = vmatpush1.xpose.msra.mxu0 0.0
  %910 = vmatprep.subr.mxu0 0.0
  %911 = vmatpush1.xpose.msra.mxu0 0.0
  %912 = vmatprep.subr.mxu0 0.0
  %913 = vmatpush1.xpose.msra.mxu0 0.0
  %914 = vmatprep.subr.mxu0 0.0
  %915 = vmatpush1.xpose.msra.mxu0 0.0
  %916 = vmatprep.subr.mxu0 0.0
  %917 = vmatpush1.xpose.msra.mxu0 0.0
  %918 = vmatprep.subr.mxu0 0.0
  %919 = vmatpush1.xpose.msra.mxu0 0.0
  %920 = vmatprep.subr.mxu0 0.0
  %921 = vmatpush1.xpose.msra.mxu0 0.0
  %922 = vmatprep.subr.mxu0 0.0
  %923 = vmatpush1.xpose.msra.mxu0 0.0
  %924 = vmatprep.subr.mxu0 0.0
  %925 = vmatpush1.xpose.msra.mxu0 0.0
  %926 = vmatprep.subr.mxu0 0.0
  %927 = vmatpush1.xpose.msra.mxu0 0.0
  %928 = vmatprep.subr.mxu0 0.0
  %929 = vmatpush1.xpose.msra.mxu0 0.0
  %930 = vmatprep.subr.mxu0 0.0
  %931 = vmatpush1.xpose.msra.mxu0 0.0
  %932 = vmatprep.subr.mxu0 0.0
  %933 = vmatpush1.xpose.msra.mxu0 0.0
  %934 = vmatprep.subr.mxu0 0.0
  %935 = vmatpush1.xpose.msra.mxu0 0.0
  %936 = vmatprep.subr.mxu0 0.0
  %937 = vmatpush1.xpose.msra.mxu0 0.0
  %938 = vmatprep.subr.mxu0 0.0
  %939 = vmatpush1.xpose.msra.mxu0 0.0
  %940 = vmatprep.subr.mxu0 0.0
  %941 = vmatpush1.xpose.msra.mxu0 0.0
  %942 = vmatprep.subr.mxu0 0.0
  %943 = vmatpush1.xpose.msra.mxu0 0.0
  %944 = vmatprep.subr.mxu0 0.0
  %945 = vmatpush1.xpose.msra.mxu0 0.0
  %946 = vmatprep.subr.mxu0 0.0
  %947 = vmatpush1.xpose.msra.mxu0 0.0
  %948 = vmatprep.subr.mxu0 0.0
  %949 = vmatpush1.xpose.msra.mxu0 0.0
  %950 = vmatprep.subr.mxu0 0.0
  %951 = vmatpush1.xpose.msra.mxu0 0.0
  %952 = vmatprep.subr.mxu0 0.0
  %953 = vmatpush1.xpose.msra.mxu0 0.0
  %954 = vmatprep.subr.mxu0 0.0
  %955 = vmatpush1.xpose.msra.mxu0 0.0
  %956 = vmatprep.subr.mxu0 0.0
  %957 = vmatpush1.xpose.msra.mxu0 0.0
  %958 = vmatprep.subr.mxu0 0.0
  %959 = vmatpush1.xpose.msra.mxu0 0.0
  %960 = vmatprep.subr.mxu0 0.0
  %961 = vmatpush1.xpose.msra.mxu0 0.0
  %962 = vmatprep.subr.mxu0 0.0
  %963 = vmatpush1.xpose.msra.mxu0 0.0
  %964 = vmatprep.mubr.f32.mxu0 0.0
  %965 = vmatmul.mubr.f32.gmra.mrb[0].mxu0 %v896
  %v966 = vpop.f32.mrb[0].mxu0
  %v967 = vadd.f32 %v892, %v966
  %v968 = vpop.f32.mrb[0].mxu0
  %969 = vdwg.mxu0
  %v970 = vsel %vm213, %v967, -inf
  %971 = vmax.xlane.f32.xlu0 %v970
  %v972 = vpop.xlane.xlu0 %971
  %v973 = vsub.f32 %v967, %v972
  %v974 = vmul.f32 %v973, 1.442695
  %v975 = vpow.pop %v974
  %v976 = vsel %vm213, %v975, 0.0
  %977 = vadd.xlane.f32.xlu0 %v976
  %v978 = vpop.xlane.xlu0 %977
  %v979 = vrcp.pop %v978
  %v980 = vmul.f32 %v975, %v979
  %981 = vrot.lane.b32.xlu0 %v203, 64
  %v982 = vpop.permute.xlu0 %981
  %v985 = vsel %vm213, %v980, 0
  %987 = vmatprep.subr.mxu0 0.0
  %988 = vmatpush1.msra.mxu0 %v982
  %989 = vmatprep.subr.mxu0 0.0
  %990 = vmatpush1.msra.mxu0 0.0
  %991 = vmatprep.subr.mxu0 0.0
  %992 = vmatpush1.msra.mxu0 0.0
  %993 = vmatprep.subr.mxu0 0.0
  %994 = vmatpush1.msra.mxu0 0.0
  %995 = vmatprep.subr.mxu0 0.0
  %996 = vmatpush1.msra.mxu0 0.0
  %997 = vmatprep.subr.mxu0 0.0
  %998 = vmatpush1.msra.mxu0 0.0
  %999 = vmatprep.subr.mxu0 0.0
  %1000 = vmatpush1.msra.mxu0 0.0
  %1001 = vmatprep.subr.mxu0 0.0
  %1002 = vmatpush1.msra.mxu0 0.0
  %1003 = vmatprep.subr.mxu0 0.0
  %1004 = vmatpush1.msra.mxu0 0.0
  %1005 = vmatprep.subr.mxu0 0.0
  %1006 = vmatpush1.msra.mxu0 0.0
  %1007 = vmatprep.subr.mxu0 0.0
  %1008 = vmatpush1.msra.mxu0 0.0
  %1009 = vmatprep.subr.mxu0 0.0
  %1010 = vmatpush1.msra.mxu0 0.0
  %1011 = vmatprep.subr.mxu0 0.0
  %1012 = vmatpush1.msra.mxu0 0.0
  %1013 = vmatprep.subr.mxu0 0.0
  %1014 = vmatpush1.msra.mxu0 0.0
  %1015 = vmatprep.subr.mxu0 0.0
  %1016 = vmatpush1.msra.mxu0 0.0
  %1017 = vmatprep.subr.mxu0 0.0
  %1018 = vmatpush1.msra.mxu0 0.0
  %1019 = vmatprep.subr.mxu0 0.0
  %1020 = vmatpush1.msra.mxu0 0.0
  %1021 = vmatprep.subr.mxu0 0.0
  %1022 = vmatpush1.msra.mxu0 0.0
  %1023 = vmatprep.subr.mxu0 0.0
  %1024 = vmatpush1.msra.mxu0 0.0
  %1025 = vmatprep.subr.mxu0 0.0
  %1026 = vmatpush1.msra.mxu0 0.0
  %1027 = vmatprep.subr.mxu0 0.0
  %1028 = vmatpush1.msra.mxu0 0.0
  %1029 = vmatprep.subr.mxu0 0.0
  %1030 = vmatpush1.msra.mxu0 0.0
  %1031 = vmatprep.subr.mxu0 0.0
  %1032 = vmatpush1.msra.mxu0 0.0
  %1033 = vmatprep.subr.mxu0 0.0
  %1034 = vmatpush1.msra.mxu0 0.0
  %1035 = vmatprep.subr.mxu0 0.0
  %1036 = vmatpush1.msra.mxu0 0.0
  %1037 = vmatprep.subr.mxu0 0.0
  %1038 = vmatpush1.msra.mxu0 0.0
  %1039 = vmatprep.subr.mxu0 0.0
  %1040 = vmatpush1.msra.mxu0 0.0
  %1041 = vmatprep.subr.mxu0 0.0
  %1042 = vmatpush1.msra.mxu0 0.0
  %1043 = vmatprep.subr.mxu0 0.0
  %1044 = vmatpush1.msra.mxu0 0.0
  %1045 = vmatprep.subr.mxu0 0.0
  %1046 = vmatpush1.msra.mxu0 0.0
  %1047 = vmatprep.subr.mxu0 0.0
  %1048 = vmatpush1.msra.mxu0 0.0
  %1049 = vmatprep.subr.mxu0 0.0
  %1050 = vmatpush1.msra.mxu0 0.0
  %1051 = vmatprep.mubr.f32.mxu0 0.0
  %1052 = vmatmul.mubr.f32.gmra.mrb[0].mxu0 %v985
  %v1053 = vpop.f32.mrb[0].mxu0
  %v1054 = vadd.f32 0.0, %v1053
  %v1055 = vpop.f32.mrb[0].mxu0
  %1056 = vdwg.mxu0
  %1057 = vst.msk [vmem:[#allocation2 + $0x8] sm:$0xff] %vm213, %v1054
  %1058 = vrot.lane.b32.xlu0 %v203, 120
  %v1059 = vpop.permute.xlu0 %1058
  %1060 = vrot.lane.b32.xlu0 %v203, 88
  %v1061 = vpop.permute.xlu0 %1060
  %v1062 = vsel %vm213, %v1059, 0
  %v1064 = vsel %vm213, %v1061, 0
  %1066 = vmatprep.subr.mxu0 0.0
  %1067 = vmatpush1.xpose.msra.mxu0 %v1064
  %1068 = vmatprep.subr.mxu0 0.0
  %1069 = vmatpush1.xpose.msra.mxu0 0.0
  %1070 = vmatprep.subr.mxu0 0.0
  %1071 = vmatpush1.xpose.msra.mxu0 0.0
  %1072 = vmatprep.subr.mxu0 0.0
  %1073 = vmatpush1.xpose.msra.mxu0 0.0
  %1074 = vmatprep.subr.mxu0 0.0
  %1075 = vmatpush1.xpose.msra.mxu0 0.0
  %1076 = vmatprep.subr.mxu0 0.0
  %1077 = vmatpush1.xpose.msra.mxu0 0.0
  %1078 = vmatprep.subr.mxu0 0.0
  %1079 = vmatpush1.xpose.msra.mxu0 0.0
  %1080 = vmatprep.subr.mxu0 0.0
  %1081 = vmatpush1.xpose.msra.mxu0 0.0
  %1082 = vmatprep.subr.mxu0 0.0
  %1083 = vmatpush1.xpose.msra.mxu0 0.0
  %1084 = vmatprep.subr.mxu0 0.0
  %1085 = vmatpush1.xpose.msra.mxu0 0.0
  %1086 = vmatprep.subr.mxu0 0.0
  %1087 = vmatpush1.xpose.msra.mxu0 0.0
  %1088 = vmatprep.subr.mxu0 0.0
  %1089 = vmatpush1.xpose.msra.mxu0 0.0
  %1090 = vmatprep.subr.mxu0 0.0
  %1091 = vmatpush1.xpose.msra.mxu0 0.0
  %1092 = vmatprep.subr.mxu0 0.0
  %1093 = vmatpush1.xpose.msra.mxu0 0.0
  %1094 = vmatprep.subr.mxu0 0.0
  %1095 = vmatpush1.xpose.msra.mxu0 0.0
  %1096 = vmatprep.subr.mxu0 0.0
  %1097 = vmatpush1.xpose.msra.mxu0 0.0
  %1098 = vmatprep.subr.mxu0 0.0
  %1099 = vmatpush1.xpose.msra.mxu0 0.0
  %1100 = vmatprep.subr.mxu0 0.0
  %1101 = vmatpush1.xpose.msra.mxu0 0.0
  %1102 = vmatprep.subr.mxu0 0.0
  %1103 = vmatpush1.xpose.msra.mxu0 0.0
  %1104 = vmatprep.subr.mxu0 0.0
  %1105 = vmatpush1.xpose.msra.mxu0 0.0
  %1106 = vmatprep.subr.mxu0 0.0
  %1107 = vmatpush1.xpose.msra.mxu0 0.0
  %1108 = vmatprep.subr.mxu0 0.0
  %1109 = vmatpush1.xpose.msra.mxu0 0.0
  %1110 = vmatprep.subr.mxu0 0.0
  %1111 = vmatpush1.xpose.msra.mxu0 0.0
  %1112 = vmatprep.subr.mxu0 0.0
  %1113 = vmatpush1.xpose.msra.mxu0 0.0
  %1114 = vmatprep.subr.mxu0 0.0
  %1115 = vmatpush1.xpose.msra.mxu0 0.0
  %1116 = vmatprep.subr.mxu0 0.0
  %1117 = vmatpush1.xpose.msra.mxu0 0.0
  %1118 = vmatprep.subr.mxu0 0.0
  %1119 = vmatpush1.xpose.msra.mxu0 0.0
  %1120 = vmatprep.subr.mxu0 0.0
  %1121 = vmatpush1.xpose.msra.mxu0 0.0
  %1122 = vmatprep.subr.mxu0 0.0
  %1123 = vmatpush1.xpose.msra.mxu0 0.0
  %1124 = vmatprep.subr.mxu0 0.0
  %1125 = vmatpush1.xpose.msra.mxu0 0.0
  %1126 = vmatprep.subr.mxu0 0.0
  %1127 = vmatpush1.xpose.msra.mxu0 0.0
  %1128 = vmatprep.subr.mxu0 0.0
  %1129 = vmatpush1.xpose.msra.mxu0 0.0
  %1130 = vmatprep.mubr.f32.mxu0 0.0
  %1131 = vmatmul.mubr.f32.gmra.mrb[0].mxu0 %v1062
  %v1132 = vpop.f32.mrb[0].mxu0
  %v1133 = vadd.f32 %v892, %v1132
  %v1134 = vpop.f32.mrb[0].mxu0
  %1135 = vdwg.mxu0
  %v1136 = vsel %vm213, %v1133, -inf
  %1137 = vmax.xlane.f32.xlu0 %v1136
  %v1138 = vpop.xlane.xlu0 %1137
  %v1139 = vsub.f32 %v1133, %v1138
  %v1140 = vmul.f32 %v1139, 1.442695
  %v1141 = vpow.pop %v1140
  %v1142 = vsel %vm213, %v1141, 0.0
  %1143 = vadd.xlane.f32.xlu0 %v1142
  %v1144 = vpop.xlane.xlu0 %1143
  %v1145 = vrcp.pop %v1144
  %v1146 = vmul.f32 %v1141, %v1145
  %1147 = vrot.lane.b32.xlu0 %v203, 56
  %v1148 = vpop.permute.xlu0 %1147
  %v1151 = vsel %vm213, %v1146, 0
  %1153 = vmatprep.subr.mxu0 0.0
  %1154 = vmatpush1.msra.mxu0 %v1148
  %1155 = vmatprep.subr.mxu0 0.0
  %1156 = vmatpush1.msra.mxu0 0.0
  %1157 = vmatprep.subr.mxu0 0.0
  %1158 = vmatpush1.msra.mxu0 0.0
  %1159 = vmatprep.subr.mxu0 0.0
  %1160 = vmatpush1.msra.mxu0 0.0
  %1161 = vmatprep.subr.mxu0 0.0
  %1162 = vmatpush1.msra.mxu0 0.0
  %1163 = vmatprep.subr.mxu0 0.0
  %1164 = vmatpush1.msra.mxu0 0.0
  %1165 = vmatprep.subr.mxu0 0.0
  %1166 = vmatpush1.msra.mxu0 0.0
  %1167 = vmatprep.subr.mxu0 0.0
  %1168 = vmatpush1.msra.mxu0 0.0
  %1169 = vmatprep.subr.mxu0 0.0
  %1170 = vmatpush1.msra.mxu0 0.0
  %1171 = vmatprep.subr.mxu0 0.0
  %1172 = vmatpush1.msra.mxu0 0.0
  %1173 = vmatprep.subr.mxu0 0.0
  %1174 = vmatpush1.msra.mxu0 0.0
  %1175 = vmatprep.subr.mxu0 0.0
  %1176 = vmatpush1.msra.mxu0 0.0
  %1177 = vmatprep.subr.mxu0 0.0
  %1178 = vmatpush1.msra.mxu0 0.0
  %1179 = vmatprep.subr.mxu0 0.0
  %1180 = vmatpush1.msra.mxu0 0.0
  %1181 = vmatprep.subr.mxu0 0.0
  %1182 = vmatpush1.msra.mxu0 0.0
  %1183 = vmatprep.subr.mxu0 0.0
  %1184 = vmatpush1.msra.mxu0 0.0
  %1185 = vmatprep.subr.mxu0 0.0
  %1186 = vmatpush1.msra.mxu0 0.0
  %1187 = vmatprep.subr.mxu0 0.0
  %1188 = vmatpush1.msra.mxu0 0.0
  %1189 = vmatprep.subr.mxu0 0.0
  %1190 = vmatpush1.msra.mxu0 0.0
  %1191 = vmatprep.subr.mxu0 0.0
  %1192 = vmatpush1.msra.mxu0 0.0
  %1193 = vmatprep.subr.mxu0 0.0
  %1194 = vmatpush1.msra.mxu0 0.0
  %1195 = vmatprep.subr.mxu0 0.0
  %1196 = vmatpush1.msra.mxu0 0.0
  %1197 = vmatprep.subr.mxu0 0.0
  %1198 = vmatpush1.msra.mxu0 0.0
  %1199 = vmatprep.subr.mxu0 0.0
  %1200 = vmatpush1.msra.mxu0 0.0
  %1201 = vmatprep.subr.mxu0 0.0
  %1202 = vmatpush1.msra.mxu0 0.0
  %1203 = vmatprep.subr.mxu0 0.0
  %1204 = vmatpush1.msra.mxu0 0.0
  %1205 = vmatprep.subr.mxu0 0.0
  %1206 = vmatpush1.msra.mxu0 0.0
  %1207 = vmatprep.subr.mxu0 0.0
  %1208 = vmatpush1.msra.mxu0 0.0
  %1209 = vmatprep.subr.mxu0 0.0
  %1210 = vmatpush1.msra.mxu0 0.0
  %1211 = vmatprep.subr.mxu0 0.0
  %1212 = vmatpush1.msra.mxu0 0.0
  %1213 = vmatprep.subr.mxu0 0.0
  %1214 = vmatpush1.msra.mxu0 0.0
  %1215 = vmatprep.subr.mxu0 0.0
  %1216 = vmatpush1.msra.mxu0 0.0
  %1217 = vmatprep.mubr.f32.mxu0 0.0
  %1218 = vmatmul.mubr.f32.gmra.mrb[0].mxu0 %v1151
  %v1219 = vpop.f32.mrb[0].mxu0
  %v1220 = vadd.f32 0.0, %v1219
  %v1221 = vpop.f32.mrb[0].mxu0
  %1222 = vdwg.mxu0
  %1224 = vrot.lane.b32.xlu0 %v1220, 8
  %v1225 = vpop.permute.xlu0 %1224
  %1227 = vst.msk [vmem:[#allocation2 + $0x8] sm:$0xff] %vm545, %v1225
  %1228 = vrot.lane.b32.xlu0 %v203, 112
  %v1229 = vpop.permute.xlu0 %1228
  %1230 = vrot.lane.b32.xlu0 %v203, 80
  %v1231 = vpop.permute.xlu0 %1230
  %v1232 = vsel %vm213, %v1229, 0
  %v1234 = vsel %vm213, %v1231, 0
  %1236 = vmatprep.subr.mxu0 0.0
  %1237 = vmatpush1.xpose.msra.mxu0 %v1234
  %1238 = vmatprep.subr.mxu0 0.0
  %1239 = vmatpush1.xpose.msra.mxu0 0.0
  %1240 = vmatprep.subr.mxu0 0.0
  %1241 = vmatpush1.xpose.msra.mxu0 0.0
  %1242 = vmatprep.subr.mxu0 0.0
  %1243 = vmatpush1.xpose.msra.mxu0 0.0
  %1244 = vmatprep.subr.mxu0 0.0
  %1245 = vmatpush1.xpose.msra.mxu0 0.0
  %1246 = vmatprep.subr.mxu0 0.0
  %1247 = vmatpush1.xpose.msra.mxu0 0.0
  %1248 = vmatprep.subr.mxu0 0.0
  %1249 = vmatpush1.xpose.msra.mxu0 0.0
  %1250 = vmatprep.subr.mxu0 0.0
  %1251 = vmatpush1.xpose.msra.mxu0 0.0
  %1252 = vmatprep.subr.mxu0 0.0
  %1253 = vmatpush1.xpose.msra.mxu0 0.0
  %1254 = vmatprep.subr.mxu0 0.0
  %1255 = vmatpush1.xpose.msra.mxu0 0.0
  %1256 = vmatprep.subr.mxu0 0.0
  %1257 = vmatpush1.xpose.msra.mxu0 0.0
  %1258 = vmatprep.subr.mxu0 0.0
  %1259 = vmatpush1.xpose.msra.mxu0 0.0
  %1260 = vmatprep.subr.mxu0 0.0
  %1261 = vmatpush1.xpose.msra.mxu0 0.0
  %1262 = vmatprep.subr.mxu0 0.0
  %1263 = vmatpush1.xpose.msra.mxu0 0.0
  %1264 = vmatprep.subr.mxu0 0.0
  %1265 = vmatpush1.xpose.msra.mxu0 0.0
  %1266 = vmatprep.subr.mxu0 0.0
  %1267 = vmatpush1.xpose.msra.mxu0 0.0
  %1268 = vmatprep.subr.mxu0 0.0
  %1269 = vmatpush1.xpose.msra.mxu0 0.0
  %1270 = vmatprep.subr.mxu0 0.0
  %1271 = vmatpush1.xpose.msra.mxu0 0.0
  %1272 = vmatprep.subr.mxu0 0.0
  %1273 = vmatpush1.xpose.msra.mxu0 0.0
  %1274 = vmatprep.subr.mxu0 0.0
  %1275 = vmatpush1.xpose.msra.mxu0 0.0
  %1276 = vmatprep.subr.mxu0 0.0
  %1277 = vmatpush1.xpose.msra.mxu0 0.0
  %1278 = vmatprep.subr.mxu0 0.0
  %1279 = vmatpush1.xpose.msra.mxu0 0.0
  %1280 = vmatprep.subr.mxu0 0.0
  %1281 = vmatpush1.xpose.msra.mxu0 0.0
  %1282 = vmatprep.subr.mxu0 0.0
  %1283 = vmatpush1.xpose.msra.mxu0 0.0
  %1284 = vmatprep.subr.mxu0 0.0
  %1285 = vmatpush1.xpose.msra.mxu0 0.0
  %1286 = vmatprep.subr.mxu0 0.0
  %1287 = vmatpush1.xpose.msra.mxu0 0.0
  %1288 = vmatprep.subr.mxu0 0.0
  %1289 = vmatpush1.xpose.msra.mxu0 0.0
  %1290 = vmatprep.subr.mxu0 0.0
  %1291 = vmatpush1.xpose.msra.mxu0 0.0
  %1292 = vmatprep.subr.mxu0 0.0
  %1293 = vmatpush1.xpose.msra.mxu0 0.0
  %1294 = vmatprep.subr.mxu0 0.0
  %1295 = vmatpush1.xpose.msra.mxu0 0.0
  %1296 = vmatprep.subr.mxu0 0.0
  %1297 = vmatpush1.xpose.msra.mxu0 0.0
  %1298 = vmatprep.subr.mxu0 0.0
  %1299 = vmatpush1.xpose.msra.mxu0 0.0
  %1300 = vmatprep.mubr.f32.mxu0 0.0
  %1301 = vmatmul.mubr.f32.gmra.mrb[0].mxu0 %v1232
  %v1302 = vpop.f32.mrb[0].mxu0
  %v1303 = vadd.f32 %v892, %v1302
  %v1304 = vpop.f32.mrb[0].mxu0
  %1305 = vdwg.mxu0
  %v1306 = vsel %vm213, %v1303, -inf
  %1307 = vmax.xlane.f32.xlu0 %v1306
  %v1308 = vpop.xlane.xlu0 %1307
  %v1309 = vsub.f32 %v1303, %v1308
  %v1310 = vmul.f32 %v1309, 1.442695
  %v1311 = vpow.pop %v1310
  %v1312 = vsel %vm213, %v1311, 0.0
  %1313 = vadd.xlane.f32.xlu0 %v1312
  %v1314 = vpop.xlane.xlu0 %1313
  %v1315 = vrcp.pop %v1314
  %v1316 = vmul.f32 %v1311, %v1315
  %1317 = vrot.lane.b32.xlu0 %v203, 48
  %v1318 = vpop.permute.xlu0 %1317
  %v1321 = vsel %vm213, %v1316, 0
  %1323 = vmatprep.subr.mxu0 0.0
  %1324 = vmatpush1.msra.mxu0 %v1318
  %1325 = vmatprep.subr.mxu0 0.0
  %1326 = vmatpush1.msra.mxu0 0.0
  %1327 = vmatprep.subr.mxu0 0.0
  %1328 = vmatpush1.msra.mxu0 0.0
  %1329 = vmatprep.subr.mxu0 0.0
  %1330 = vmatpush1.msra.mxu0 0.0
  %1331 = vmatprep.subr.mxu0 0.0
  %1332 = vmatpush1.msra.mxu0 0.0
  %1333 = vmatprep.subr.mxu0 0.0
  %1334 = vmatpush1.msra.mxu0 0.0
  %1335 = vmatprep.subr.mxu0 0.0
  %1336 = vmatpush1.msra.mxu0 0.0
  %1337 = vmatprep.subr.mxu0 0.0
  %1338 = vmatpush1.msra.mxu0 0.0
  %1339 = vmatprep.subr.mxu0 0.0
  %1340 = vmatpush1.msra.mxu0 0.0
  %1341 = vmatprep.subr.mxu0 0.0
  %1342 = vmatpush1.msra.mxu0 0.0
  %1343 = vmatprep.subr.mxu0 0.0
  %1344 = vmatpush1.msra.mxu0 0.0
  %1345 = vmatprep.subr.mxu0 0.0
  %1346 = vmatpush1.msra.mxu0 0.0
  %1347 = vmatprep.subr.mxu0 0.0
  %1348 = vmatpush1.msra.mxu0 0.0
  %1349 = vmatprep.subr.mxu0 0.0
  %1350 = vmatpush1.msra.mxu0 0.0
  %1351 = vmatprep.subr.mxu0 0.0
  %1352 = vmatpush1.msra.mxu0 0.0
  %1353 = vmatprep.subr.mxu0 0.0
  %1354 = vmatpush1.msra.mxu0 0.0
  %1355 = vmatprep.subr.mxu0 0.0
  %1356 = vmatpush1.msra.mxu0 0.0
  %1357 = vmatprep.subr.mxu0 0.0
  %1358 = vmatpush1.msra.mxu0 0.0
  %1359 = vmatprep.subr.mxu0 0.0
  %1360 = vmatpush1.msra.mxu0 0.0
  %1361 = vmatprep.subr.mxu0 0.0
  %1362 = vmatpush1.msra.mxu0 0.0
  %1363 = vmatprep.subr.mxu0 0.0
  %1364 = vmatpush1.msra.mxu0 0.0
  %1365 = vmatprep.subr.mxu0 0.0
  %1366 = vmatpush1.msra.mxu0 0.0
  %1367 = vmatprep.subr.mxu0 0.0
  %1368 = vmatpush1.msra.mxu0 0.0
  %1369 = vmatprep.subr.mxu0 0.0
  %1370 = vmatpush1.msra.mxu0 0.0
  %1371 = vmatprep.subr.mxu0 0.0
  %1372 = vmatpush1.msra.mxu0 0.0
  %1373 = vmatprep.subr.mxu0 0.0
  %1374 = vmatpush1.msra.mxu0 0.0
  %1375 = vmatprep.subr.mxu0 0.0
  %1376 = vmatpush1.msra.mxu0 0.0
  %1377 = vmatprep.subr.mxu0 0.0
  %1378 = vmatpush1.msra.mxu0 0.0
  %1379 = vmatprep.subr.mxu0 0.0
  %1380 = vmatpush1.msra.mxu0 0.0
  %1381 = vmatprep.subr.mxu0 0.0
  %1382 = vmatpush1.msra.mxu0 0.0
  %1383 = vmatprep.subr.mxu0 0.0
  %1384 = vmatpush1.msra.mxu0 0.0
  %1385 = vmatprep.subr.mxu0 0.0
  %1386 = vmatpush1.msra.mxu0 0.0
  %1387 = vmatprep.mubr.f32.mxu0 0.0
  %1388 = vmatmul.mubr.f32.gmra.mrb[0].mxu0 %v1321
  %v1389 = vpop.f32.mrb[0].mxu0
  %v1390 = vadd.f32 0.0, %v1389
  %v1391 = vpop.f32.mrb[0].mxu0
  %1392 = vdwg.mxu0
  %1394 = vrot.lane.b32.xlu0 %v1390, 16
  %v1395 = vpop.permute.xlu0 %1394
  %1397 = vst.msk [vmem:[#allocation2 + $0x8] sm:$0xff] %vm716, %v1395
  %1398 = vrot.lane.b32.xlu0 %v203, 104
  %v1399 = vpop.permute.xlu0 %1398
  %1400 = vrot.lane.b32.xlu0 %v203, 72
  %v1401 = vpop.permute.xlu0 %1400
  %v1402 = vsel %vm213, %v1399, 0
  %v1404 = vsel %vm213, %v1401, 0
  %1406 = vmatprep.subr.mxu0 0.0
  %1407 = vmatpush1.xpose.msra.mxu0 %v1404
  %1408 = vmatprep.subr.mxu0 0.0
  %1409 = vmatpush1.xpose.msra.mxu0 0.0
  %1410 = vmatprep.subr.mxu0 0.0
  %1411 = vmatpush1.xpose.msra.mxu0 0.0
  %1412 = vmatprep.subr.mxu0 0.0
  %1413 = vmatpush1.xpose.msra.mxu0 0.0
  %1414 = vmatprep.subr.mxu0 0.0
  %1415 = vmatpush1.xpose.msra.mxu0 0.0
  %1416 = vmatprep.subr.mxu0 0.0
  %1417 = vmatpush1.xpose.msra.mxu0 0.0
  %1418 = vmatprep.subr.mxu0 0.0
  %1419 = vmatpush1.xpose.msra.mxu0 0.0
  %1420 = vmatprep.subr.mxu0 0.0
  %1421 = vmatpush1.xpose.msra.mxu0 0.0
  %1422 = vmatprep.subr.mxu0 0.0
  %1423 = vmatpush1.xpose.msra.mxu0 0.0
  %1424 = vmatprep.subr.mxu0 0.0
  %1425 = vmatpush1.xpose.msra.mxu0 0.0
  %1426 = vmatprep.subr.mxu0 0.0
  %1427 = vmatpush1.xpose.msra.mxu0 0.0
  %1428 = vmatprep.subr.mxu0 0.0
  %1429 = vmatpush1.xpose.msra.mxu0 0.0
  %1430 = vmatprep.subr.mxu0 0.0
  %1431 = vmatpush1.xpose.msra.mxu0 0.0
  %1432 = vmatprep.subr.mxu0 0.0
  %1433 = vmatpush1.xpose.msra.mxu0 0.0
  %1434 = vmatprep.subr.mxu0 0.0
  %1435 = vmatpush1.xpose.msra.mxu0 0.0
  %1436 = vmatprep.subr.mxu0 0.0
  %1437 = vmatpush1.xpose.msra.mxu0 0.0
  %1438 = vmatprep.subr.mxu0 0.0
  %1439 = vmatpush1.xpose.msra.mxu0 0.0
  %1440 = vmatprep.subr.mxu0 0.0
  %1441 = vmatpush1.xpose.msra.mxu0 0.0
  %1442 = vmatprep.subr.mxu0 0.0
  %1443 = vmatpush1.xpose.msra.mxu0 0.0
  %1444 = vmatprep.subr.mxu0 0.0
  %1445 = vmatpush1.xpose.msra.mxu0 0.0
  %1446 = vmatprep.subr.mxu0 0.0
  %1447 = vmatpush1.xpose.msra.mxu0 0.0
  %1448 = vmatprep.subr.mxu0 0.0
  %1449 = vmatpush1.xpose.msra.mxu0 0.0
  %1450 = vmatprep.subr.mxu0 0.0
  %1451 = vmatpush1.xpose.msra.mxu0 0.0
  %1452 = vmatprep.subr.mxu0 0.0
  %1453 = vmatpush1.xpose.msra.mxu0 0.0
  %1454 = vmatprep.subr.mxu0 0.0
  %1455 = vmatpush1.xpose.msra.mxu0 0.0
  %1456 = vmatprep.subr.mxu0 0.0
  %1457 = vmatpush1.xpose.msra.mxu0 0.0
  %1458 = vmatprep.subr.mxu0 0.0
  %1459 = vmatpush1.xpose.msra.mxu0 0.0
  %1460 = vmatprep.subr.mxu0 0.0
  %1461 = vmatpush1.xpose.msra.mxu0 0.0
  %1462 = vmatprep.subr.mxu0 0.0
  %1463 = vmatpush1.xpose.msra.mxu0 0.0
  %1464 = vmatprep.subr.mxu0 0.0
  %1465 = vmatpush1.xpose.msra.mxu0 0.0
  %1466 = vmatprep.subr.mxu0 0.0
  %1467 = vmatpush1.xpose.msra.mxu0 0.0
  %1468 = vmatprep.subr.mxu0 0.0
  %1469 = vmatpush1.xpose.msra.mxu0 0.0
  %1470 = vmatprep.mubr.f32.mxu0 0.0
  %1471 = vmatmul.mubr.f32.gmra.mrb[0].mxu0 %v1402
  %v1472 = vpop.f32.mrb[0].mxu0
  %v1473 = vadd.f32 %v892, %v1472
  %v1474 = vpop.f32.mrb[0].mxu0
  %1475 = vdwg.mxu0
  %v1476 = vsel %vm213, %v1473, -inf
  %1477 = vmax.xlane.f32.xlu0 %v1476
  %v1478 = vpop.xlane.xlu0 %1477
  %v1479 = vsub.f32 %v1473, %v1478
  %v1480 = vmul.f32 %v1479, 1.442695
  %v1481 = vpow.pop %v1480
  %v1482 = vsel %vm213, %v1481, 0.0
  %1483 = vadd.xlane.f32.xlu0 %v1482
  %v1484 = vpop.xlane.xlu0 %1483
  %v1485 = vrcp.pop %v1484
  %v1486 = vmul.f32 %v1481, %v1485
  %1487 = vrot.lane.b32.xlu0 %v203, 40
  %v1488 = vpop.permute.xlu0 %1487
  %v1491 = vsel %vm213, %v1486, 0
  %1493 = vmatprep.subr.mxu0 0.0
  %1494 = vmatpush1.msra.mxu0 %v1488
  %1495 = vmatprep.subr.mxu0 0.0
  %1496 = vmatpush1.msra.mxu0 0.0
  %1497 = vmatprep.subr.mxu0 0.0
  %1498 = vmatpush1.msra.mxu0 0.0
  %1499 = vmatprep.subr.mxu0 0.0
  %1500 = vmatpush1.msra.mxu0 0.0
  %1501 = vmatprep.subr.mxu0 0.0
  %1502 = vmatpush1.msra.mxu0 0.0
  %1503 = vmatprep.subr.mxu0 0.0
  %1504 = vmatpush1.msra.mxu0 0.0
  %1505 = vmatprep.subr.mxu0 0.0
  %1506 = vmatpush1.msra.mxu0 0.0
  %1507 = vmatprep.subr.mxu0 0.0
  %1508 = vmatpush1.msra.mxu0 0.0
  %1509 = vmatprep.subr.mxu0 0.0
  %1510 = vmatpush1.msra.mxu0 0.0
  %1511 = vmatprep.subr.mxu0 0.0
  %1512 = vmatpush1.msra.mxu0 0.0
  %1513 = vmatprep.subr.mxu0 0.0
  %1514 = vmatpush1.msra.mxu0 0.0
  %1515 = vmatprep.subr.mxu0 0.0
  %1516 = vmatpush1.msra.mxu0 0.0
  %1517 = vmatprep.subr.mxu0 0.0
  %1518 = vmatpush1.msra.mxu0 0.0
  %1519 = vmatprep.subr.mxu0 0.0
  %1520 = vmatpush1.msra.mxu0 0.0
  %1521 = vmatprep.subr.mxu0 0.0
  %1522 = vmatpush1.msra.mxu0 0.0
  %1523 = vmatprep.subr.mxu0 0.0
  %1524 = vmatpush1.msra.mxu0 0.0
  %1525 = vmatprep.subr.mxu0 0.0
  %1526 = vmatpush1.msra.mxu0 0.0
  %1527 = vmatprep.subr.mxu0 0.0
  %1528 = vmatpush1.msra.mxu0 0.0
  %1529 = vmatprep.subr.mxu0 0.0
  %1530 = vmatpush1.msra.mxu0 0.0
  %1531 = vmatprep.subr.mxu0 0.0
  %1532 = vmatpush1.msra.mxu0 0.0
  %1533 = vmatprep.subr.mxu0 0.0
  %1534 = vmatpush1.msra.mxu0 0.0
  %1535 = vmatprep.subr.mxu0 0.0
  %1536 = vmatpush1.msra.mxu0 0.0
  %1537 = vmatprep.subr.mxu0 0.0
  %1538 = vmatpush1.msra.mxu0 0.0
  %1539 = vmatprep.subr.mxu0 0.0
  %1540 = vmatpush1.msra.mxu0 0.0
  %1541 = vmatprep.subr.mxu0 0.0
  %1542 = vmatpush1.msra.mxu0 0.0
  %1543 = vmatprep.subr.mxu0 0.0
  %1544 = vmatpush1.msra.mxu0 0.0
  %1545 = vmatprep.subr.mxu0 0.0
  %1546 = vmatpush1.msra.mxu0 0.0
  %1547 = vmatprep.subr.mxu0 0.0
  %1548 = vmatpush1.msra.mxu0 0.0
  %1549 = vmatprep.subr.mxu0 0.0
  %1550 = vmatpush1.msra.mxu0 0.0
  %1551 = vmatprep.subr.mxu0 0.0
  %1552 = vmatpush1.msra.mxu0 0.0
  %1553 = vmatprep.subr.mxu0 0.0
  %1554 = vmatpush1.msra.mxu0 0.0
  %1555 = vmatprep.subr.mxu0 0.0
  %1556 = vmatpush1.msra.mxu0 0.0
  %1557 = vmatprep.mubr.f32.mxu0 0.0
  %1558 = vmatmul.mubr.f32.gmra.mrb[0].mxu0 %v1491
  %v1559 = vpop.f32.mrb[0].mxu0
  %v1560 = vadd.f32 0.0, %v1559
  %v1561 = vpop.f32.mrb[0].mxu0
  %1562 = vdwg.mxu0
  %1564 = vrot.lane.b32.xlu0 %v1560, 24
  %v1565 = vpop.permute.xlu0 %1564
  %1567 = vst.msk [vmem:[#allocation2 + $0x8] sm:$0xff] %vm887, %v1565
  %v1568 = vld [vmem:[#allocation2] sm:$0xff]
  %v1569 = vld [vmem:[#allocation2 + $0x8] sm:$0xff]
  %v1570 = vld [vmem:[%s6] sm:$0xff]
  %v1571 = vld [vmem:[%s6 + $0x8] sm:$0xff]
  %v1572 = vld [vmem:[%s6 + $0x10] sm:$0xff]
  %v1573 = vld [vmem:[%s6 + $0x18] sm:$0xff]
  %v1574 = vld [vmem:[%s7] sm:$0x1]
  %v1576 = vlaneseq
  %v1577 = vshrl.u32 %v1576, 7
  %v1578 = vsub.s32 0, %v1577
  %v1579 = vrot.slane %v1574, %v1578
  %v1582 = vsel %vm69, %v1568, 0
  %v1585 = vsel %vm69, %v1569, 0
  %1587 = vmatprep.subr.mxu0 0.0
  %1588 = vmatpush1.msra.mxu0 %v1570
  %1589 = vmatprep.subr.mxu0 0.0
  %1590 = vmatpush1.msra.mxu0 %v1571
  %1591 = vmatprep.subr.mxu0 0.0
  %1592 = vmatpush1.msra.mxu0 %v1572
  %1593 = vmatprep.subr.mxu0 0.0
  %1594 = vmatpush1.msra.mxu0 %v1573
  %1595 = vmatprep.subr.mxu0 0.0
  %1596 = vmatpush1.msra.mxu0 0.0
  %1597 = vmatprep.subr.mxu0 0.0
  %1598 = vmatpush1.msra.mxu0 0.0
  %1599 = vmatprep.subr.mxu0 0.0
  %1600 = vmatpush1.msra.mxu0 0.0
  %1601 = vmatprep.subr.mxu0 0.0
  %1602 = vmatpush1.msra.mxu0 0.0
  %1603 = vmatprep.subr.mxu0 0.0
  %1604 = vmatpush1.msra.mxu0 0.0
  %1605 = vmatprep.subr.mxu0 0.0
  %1606 = vmatpush1.msra.mxu0 0.0
  %1607 = vmatprep.subr.mxu0 0.0
  %1608 = vmatpush1.msra.mxu0 0.0
  %1609 = vmatprep.subr.mxu0 0.0
  %1610 = vmatpush1.msra.mxu0 0.0
  %1611 = vmatprep.subr.mxu0 0.0
  %1612 = vmatpush1.msra.mxu0 0.0
  %1613 = vmatprep.subr.mxu0 0.0
  %1614 = vmatpush1.msra.mxu0 0.0
  %1615 = vmatprep.subr.mxu0 0.0
  %1616 = vmatpush1.msra.mxu0 0.0
  %1617 = vmatprep.subr.mxu0 0.0
  %1618 = vmatpush1.msra.mxu0 0.0
  %1619 = vmatprep.subr.mxu0 0.0
  %1620 = vmatpush1.msra.mxu0 0.0
  %1621 = vmatprep.subr.mxu0 0.0
  %1622 = vmatpush1.msra.mxu0 0.0
  %1623 = vmatprep.subr.mxu0 0.0
  %1624 = vmatpush1.msra.mxu0 0.0
  %1625 = vmatprep.subr.mxu0 0.0
  %1626 = vmatpush1.msra.mxu0 0.0
  %1627 = vmatprep.subr.mxu0 0.0
  %1628 = vmatpush1.msra.mxu0 0.0
  %1629 = vmatprep.subr.mxu0 0.0
  %1630 = vmatpush1.msra.mxu0 0.0
  %1631 = vmatprep.subr.mxu0 0.0
  %1632 = vmatpush1.msra.mxu0 0.0
  %1633 = vmatprep.subr.mxu0 0.0
  %1634 = vmatpush1.msra.mxu0 0.0
  %1635 = vmatprep.subr.mxu0 0.0
  %1636 = vmatpush1.msra.mxu0 0.0
  %1637 = vmatprep.subr.mxu0 0.0
  %1638 = vmatpush1.msra.mxu0 0.0
  %1639 = vmatprep.subr.mxu0 0.0
  %1640 = vmatpush1.msra.mxu0 0.0
  %1641 = vmatprep.subr.mxu0 0.0
  %1642 = vmatpush1.msra.mxu0 0.0
  %1643 = vmatprep.subr.mxu0 0.0
  %1644 = vmatpush1.msra.mxu0 0.0
  %1645 = vmatprep.subr.mxu0 0.0
  %1646 = vmatpush1.msra.mxu0 0.0
  %1647 = vmatprep.subr.mxu0 0.0
  %1648 = vmatpush1.msra.mxu0 0.0
  %1649 = vmatprep.subr.mxu0 0.0
  %1650 = vmatpush1.msra.mxu0 0.0
  %1651 = vmatprep.mubr.f32.mxu0 0.0
  %1652 = vmatmul.mubr.f32.gmra.mrb[0].mxu0 %v1582
  %v1653 = vpop.f32.mrb[0].mxu0
  %v1654 = vadd.f32 %v1579, %v1653
  %v1655 = vpop.f32.mrb[0].mxu0
  %1656 = vmatprep.mubr.f32.mxu0 0.0
  %1657 = vmatmul.mubr.f32.gmra.mrb[0].mxu0 %v1585
  %v1658 = vpop.f32.mrb[0].mxu0
  %v1659 = vadd.f32 %v1579, %v1658
  %v1660 = vpop.f32.mrb[0].mxu0
  %1661 = vdwg.mxu0
  %v1662 = vadd.f32 %v1654, %v111
  %v1663 = vadd.f32 %v1659, %v112
  %v1664 = vld [vmem:[%s8] sm:$0x1]
  %v1665 = vld [vmem:[%s9] sm:$0x1]
  %v1666 = vsel %vm69, %v1662, 0.0
  %1667 = vadd.xlane.f32.xlu0 %v1666
  %v1668 = vpop.xlane.xlu0 %1667
  %v1669 = vsel %vm69, %v1663, 0.0
  %1670 = vadd.xlane.f32.xlu0 %v1669
  %v1671 = vpop.xlane.xlu0 %1670
  %v1672 = vmul.f32 %v1668, %v76
  %v1673 = vmul.f32 %v1671, %v76
  %v1674 = vsub.f32 %v1662, %v1672
  %v1675 = vsub.f32 %v1663, %v1673
  %v1676 = vmul.f32 %v1674, %v1674
  %v1677 = vmul.f32 %v1675, %v1675
  %v1678 = vsel %vm69, %v1676, 0.0
  %1679 = vadd.xlane.f32.xlu0 %v1678
  %v1680 = vpop.xlane.xlu0 %1679
  %v1681 = vsel %vm69, %v1677, 0.0
  %1682 = vadd.xlane.f32.xlu0 %v1681
  %v1683 = vpop.xlane.xlu0 %1682
  %v1684 = vmul.f32 %v1680, %v76
  %v1685 = vmul.f32 %v1683, %v76
  %v1686 = vadd.f32 %v1684, 1e-12
  %v1687 = vadd.f32 %v1685, 1e-12
  %v1688 = vrsqrt.pop %v1686
  %v1689 = vrsqrt.pop %v1687
  %v1690 = vmul.f32 %v1674, %v1688
  %v1691 = vmul.f32 %v1675, %v1689
  %v1693 = vlaneseq
  %v1694 = vshrl.u32 %v1693, 7
  %v1695 = vsub.s32 0, %v1694
  %v1696 = vrot.slane %v1664, %v1695
  %v1698 = vmul.f32 %v1690, %v1696
  %v1699 = vmul.f32 %v1691, %v1696
  %v1701 = vlaneseq
  %v1702 = vshrl.u32 %v1701, 7
  %v1703 = vsub.s32 0, %v1702
  %v1704 = vrot.slane %v1665, %v1703
  %v1706 = vadd.f32 %v1698, %v1704
  %v1707 = vadd.f32 %v1699, %v1704
  %v1708 = vld [vmem:[%s10] sm:$0xff]
  %v1709 = vld [vmem:[%s10 + $0x8] sm:$0xff]
  %v1710 = vld [vmem:[%s10 + $0x10] sm:$0xff]
  %v1711 = vld [vmem:[%s10 + $0x18] sm:$0xff]
  %v1712 = vld [vmem:[%s11] sm:$0x1]
  %v1714 = vlaneseq
  %v1715 = vshrl.u32 %v1714, 7
  %v1716 = vsub.s32 0, %v1715
  %v1717 = vrot.slane %v1712, %v1716
  %v1720 = vsel %vm69, %v1706, 0
  %v1723 = vsel %vm69, %v1707, 0
  %1725 = vmatprep.subr.mxu0 0.0
  %1726 = vmatpush1.msra.mxu0 %v1708
  %1727 = vmatprep.subr.mxu0 0.0
  %1728 = vmatpush1.msra.mxu0 %v1709
  %1729 = vmatprep.subr.mxu0 0.0
  %1730 = vmatpush1.msra.mxu0 %v1710
  %1731 = vmatprep.subr.mxu0 0.0
  %1732 = vmatpush1.msra.mxu0 %v1711
  %1733 = vmatprep.subr.mxu0 0.0
  %1734 = vmatpush1.msra.mxu0 0.0
  %1735 = vmatprep.subr.mxu0 0.0
  %1736 = vmatpush1.msra.mxu0 0.0
  %1737 = vmatprep.subr.mxu0 0.0
  %1738 = vmatpush1.msra.mxu0 0.0
  %1739 = vmatprep.subr.mxu0 0.0
  %1740 = vmatpush1.msra.mxu0 0.0
  %1741 = vmatprep.subr.mxu0 0.0
  %1742 = vmatpush1.msra.mxu0 0.0
  %1743 = vmatprep.subr.mxu0 0.0
  %1744 = vmatpush1.msra.mxu0 0.0
  %1745 = vmatprep.subr.mxu0 0.0
  %1746 = vmatpush1.msra.mxu0 0.0
  %1747 = vmatprep.subr.mxu0 0.0
  %1748 = vmatpush1.msra.mxu0 0.0
  %1749 = vmatprep.subr.mxu0 0.0
  %1750 = vmatpush1.msra.mxu0 0.0
  %1751 = vmatprep.subr.mxu0 0.0
  %1752 = vmatpush1.msra.mxu0 0.0
  %1753 = vmatprep.subr.mxu0 0.0
  %1754 = vmatpush1.msra.mxu0 0.0
  %1755 = vmatprep.subr.mxu0 0.0
  %1756 = vmatpush1.msra.mxu0 0.0
  %1757 = vmatprep.subr.mxu0 0.0
  %1758 = vmatpush1.msra.mxu0 0.0
  %1759 = vmatprep.subr.mxu0 0.0
  %1760 = vmatpush1.msra.mxu0 0.0
  %1761 = vmatprep.subr.mxu0 0.0
  %1762 = vmatpush1.msra.mxu0 0.0
  %1763 = vmatprep.subr.mxu0 0.0
  %1764 = vmatpush1.msra.mxu0 0.0
  %1765 = vmatprep.subr.mxu0 0.0
  %1766 = vmatpush1.msra.mxu0 0.0
  %1767 = vmatprep.subr.mxu0 0.0
  %1768 = vmatpush1.msra.mxu0 0.0
  %1769 = vmatprep.subr.mxu0 0.0
  %1770 = vmatpush1.msra.mxu0 0.0
  %1771 = vmatprep.subr.mxu0 0.0
  %1772 = vmatpush1.msra.mxu0 0.0
  %1773 = vmatprep.subr.mxu0 0.0
  %1774 = vmatpush1.msra.mxu0 0.0
  %1775 = vmatprep.subr.mxu0 0.0
  %1776 = vmatpush1.msra.mxu0 0.0
  %1777 = vmatprep.subr.mxu0 0.0
  %1778 = vmatpush1.msra.mxu0 0.0
  %1779 = vmatprep.subr.mxu0 0.0
  %1780 = vmatpush1.msra.mxu0 0.0
  %1781 = vmatprep.subr.mxu0 0.0
  %1782 = vmatpush1.msra.mxu0 0.0
  %1783 = vmatprep.subr.mxu0 0.0
  %1784 = vmatpush1.msra.mxu0 0.0
  %1785 = vmatprep.subr.mxu0 0.0
  %1786 = vmatpush1.msra.mxu0 0.0
  %1787 = vmatprep.subr.mxu0 0.0
  %1788 = vmatpush1.msra.mxu0 0.0
  %1789 = vmatprep.mubr.f32.mxu0 0.0
  %1790 = vmatmul.mubr.f32.gmra.mrb[0].mxu0 %v1720
  %v1791 = vpop.f32.mrb[0].mxu0
  %v1792 = vadd.f32 %v1717, %v1791
  %v1793 = vpop.f32.mrb[0].mxu0
  %1794 = vmatprep.mubr.f32.mxu0 0.0
  %1795 = vmatmul.mubr.f32.gmra.mrb[0].mxu0 %v1723
  %v1796 = vpop.f32.mrb[0].mxu0
  %v1797 = vadd.f32 %v1717, %v1796
  %v1798 = vpop.f32.mrb[0].mxu0
  %1799 = vdwg.mxu0
  %v1800 = vmul.f32 %v1792, 0.5
  %v1801 = vmul.f32 %v1797, 0.5
  %v1802 = vmul.f32 %v1792, 0.70710677
  %v1803 = vmul.f32 %v1797, 0.70710677
  %v1804 = verf.f32.pop %v1802
  %v1805 = verf.f32.pop %v1803
  %v1806 = vadd.f32 %v1804, 1.0
  %v1807 = vadd.f32 %v1805, 1.0
  %v1808 = vmul.f32 %v1800, %v1806
  %v1809 = vmul.f32 %v1801, %v1807
  %v1810 = vld [vmem:[%s12] sm:$0xff]
  %v1811 = vld [vmem:[%s12 + $0x8] sm:$0xff]
  %v1812 = vld [vmem:[%s12 + $0x10] sm:$0xff]
  %v1813 = vld [vmem:[%s12 + $0x18] sm:$0xff]
  %v1814 = vld [vmem:[%s12 + $0x20] sm:$0xff]
  %v1815 = vld [vmem:[%s12 + $0x28] sm:$0xff]
  %v1816 = vld [vmem:[%s12 + $0x30] sm:$0xff]
  %v1817 = vld [vmem:[%s12 + $0x38] sm:$0xff]
  %v1818 = vld [vmem:[%s12 + $0x40] sm:$0xff]
  %v1819 = vld [vmem:[%s12 + $0x48] sm:$0xff]
  %v1820 = vld [vmem:[%s12 + $0x50] sm:$0xff]
  %v1821 = vld [vmem:[%s12 + $0x58] sm:$0xff]
  %v1822 = vld [vmem:[%s12 + $0x60] sm:$0xff]
  %v1823 = vld [vmem:[%s12 + $0x68] sm:$0xff]
  %v1824 = vld [vmem:[%s12 + $0x70] sm:$0xff]
  %v1825 = vld [vmem:[%s12 + $0x78] sm:$0xff]
  %v1826 = vld [vmem:[%s13] sm:$0x1]
  %v1828 = vlaneseq
  %v1829 = vshrl.u32 %v1828, 7
  %v1830 = vsub.s32 0, %v1829
  %v1831 = vrot.slane %v1826, %v1830
  %1833 = vmatprep.subr.mxu0 0.0
  %1834 = vmatpush1.msra.mxu0 %v1810
  %1835 = vmatprep.subr.mxu0 0.0
  %1836 = vmatpush1.msra.mxu0 %v1811
  %1837 = vmatprep.subr.mxu0 0.0
  %1838 = vmatpush1.msra.mxu0 %v1812
  %1839 = vmatprep.subr.mxu0 0.0
  %1840 = vmatpush1.msra.mxu0 %v1813
  %1841 = vmatprep.subr.mxu0 0.0
  %1842 = vmatpush1.msra.mxu0 %v1814
  %1843 = vmatprep.subr.mxu0 0.0
  %1844 = vmatpush1.msra.mxu0 %v1815
  %1845 = vmatprep.subr.mxu0 0.0
  %1846 = vmatpush1.msra.mxu0 %v1816
  %1847 = vmatprep.subr.mxu0 0.0
  %1848 = vmatpush1.msra.mxu0 %v1817
  %1849 = vmatprep.subr.mxu0 0.0
  %1850 = vmatpush1.msra.mxu0 %v1818
  %1851 = vmatprep.subr.mxu0 0.0
  %1852 = vmatpush1.msra.mxu0 %v1819
  %1853 = vmatprep.subr.mxu0 0.0
  %1854 = vmatpush1.msra.mxu0 %v1820
  %1855 = vmatprep.subr.mxu0 0.0
  %1856 = vmatpush1.msra.mxu0 %v1821
  %1857 = vmatprep.subr.mxu0 0.0
  %1858 = vmatpush1.msra.mxu0 %v1822
  %1859 = vmatprep.subr.mxu0 0.0
  %1860 = vmatpush1.msra.mxu0 %v1823
  %1861 = vmatprep.subr.mxu0 0.0
  %1862 = vmatpush1.msra.mxu0 %v1824
  %1863 = vmatprep.subr.mxu0 0.0
  %1864 = vmatpush1.msra.mxu0 %v1825
  %1865 = vmatprep.subr.mxu0 0.0
  %1866 = vmatpush1.msra.mxu0 0.0
  %1867 = vmatprep.subr.mxu0 0.0
  %1868 = vmatpush1.msra.mxu0 0.0
  %1869 = vmatprep.subr.mxu0 0.0
  %1870 = vmatpush1.msra.mxu0 0.0
  %1871 = vmatprep.subr.mxu0 0.0
  %1872 = vmatpush1.msra.mxu0 0.0
  %1873 = vmatprep.subr.mxu0 0.0
  %1874 = vmatpush1.msra.mxu0 0.0
  %1875 = vmatprep.subr.mxu0 0.0
  %1876 = vmatpush1.msra.mxu0 0.0
  %1877 = vmatprep.subr.mxu0 0.0
  %1878 = vmatpush1.msra.mxu0 0.0
  %1879 = vmatprep.subr.mxu0 0.0
  %1880 = vmatpush1.msra.mxu0 0.0
  %1881 = vmatprep.subr.mxu0 0.0
  %1882 = vmatpush1.msra.mxu0 0.0
  %1883 = vmatprep.subr.mxu0 0.0
  %1884 = vmatpush1.msra.mxu0 0.0
  %1885 = vmatprep.subr.mxu0 0.0
  %1886 = vmatpush1.msra.mxu0 0.0
  %1887 = vmatprep.subr.mxu0 0.0
  %1888 = vmatpush1.msra.mxu0 0.0
  %1889 = vmatprep.subr.mxu0 0.0
  %1890 = vmatpush1.msra.mxu0 0.0
  %1891 = vmatprep.subr.mxu0 0.0
  %1892 = vmatpush1.msra.mxu0 0.0
  %1893 = vmatprep.subr.mxu0 0.0
  %1894 = vmatpush1.msra.mxu0 0.0
  %1895 = vmatprep.subr.mxu0 0.0
  %1896 = vmatpush1.msra.mxu0 0.0
  %1897 = vmatprep.mubr.f32.mxu0 0.0
  %1898 = vmatmul.mubr.f32.gmra.mrb[0].mxu0 %v1808
  %v1899 = vpop.f32.mrb[0].mxu0
  %v1900 = vadd.f32 %v1831, %v1899
  %v1901 = vpop.f32.mrb[0].mxu0
  %1902 = vmatprep.mubr.f32.mxu0 0.0
  %1903 = vmatmul.mubr.f32.gmra.mrb[0].mxu0 %v1809
  %v1904 = vpop.f32.mrb[0].mxu0
  %v1905 = vadd.f32 %v1831, %v1904
  %v1906 = vpop.f32.mrb[0].mxu0
  %1907 = vdwg.mxu0
  %v1908 = vadd.f32 %v1900, %v1706
  %v1909 = vadd.f32 %v1905, %v1707
  %v1910 = vld [vmem:[%s14] sm:$0x1]
  %v1911 = vld [vmem:[%s15] sm:$0x1]
  %v1912 = vsel %vm69, %v1908, 0.0
  %1913 = vadd.xlane.f32.xlu0 %v1912
  %v1914 = vpop.xlane.xlu0 %1913
  %v1915 = vsel %vm69, %v1909, 0.0
  %1916 = vadd.xlane.f32.xlu0 %v1915
  %v1917 = vpop.xlane.xlu0 %1916
  %v1918 = vmul.f32 %v1914, %v76
  %v1919 = vmul.f32 %v1917, %v76
  %v1920 = vsub.f32 %v1908, %v1918
  %v1921 = vsub.f32 %v1909, %v1919
  %v1922 = vmul.f32 %v1920, %v1920
  %v1923 = vmul.f32 %v1921, %v1921
  %v1924 = vsel %vm69, %v1922, 0.0
  %1925 = vadd.xlane.f32.xlu0 %v1924
  %v1926 = vpop.xlane.xlu0 %1925
  %v1927 = vsel %vm69, %v1923, 0.0
  %1928 = vadd.xlane.f32.xlu0 %v1927
  %v1929 = vpop.xlane.xlu0 %1928
  %v1930 = vmul.f32 %v1926, %v76
  %v1931 = vmul.f32 %v1929, %v76
  %v1932 = vadd.f32 %v1930, 1e-12
  %v1933 = vadd.f32 %v1931, 1e-12
  %v1934 = vrsqrt.pop %v1932
  %v1935 = vrsqrt.pop %v1933
  %v1936 = vmul.f32 %v1920, %v1934
  %v1937 = vmul.f32 %v1921, %v1935
  %v1939 = vlaneseq
  %v1940 = vshrl.u32 %v1939, 7
  %v1941 = vsub.s32 0, %v1940
  %v1942 = vrot.slane %v1910, %v1941
  %v1944 = vmul.f32 %v1936, %v1942
  %v1945 = vmul.f32 %v1937, %v1942
  %v1947 = vlaneseq
  %v1948 = vshrl.u32 %v1947, 7
  %v1949 = vsub.s32 0, %v1948
  %v1950 = vrot.slane %v1911, %v1949
  %v1952 = vadd.f32 %v1944, %v1950
  %v1953 = vadd.f32 %v1945, %v1950
  %s1954 = scalar_lea.vmem %s4, 32
  %v1955 = vld [vmem:[%s1954] sm:$0xff]
  %v1956 = vld [vmem:[%s1954 + $0x8] sm:$0xff]
  %v1957 = vld [vmem:[%s1954 + $0x10] sm:$0xff]
  %v1958 = vld [vmem:[%s1954 + $0x18] sm:$0xff]
  %s1959 = scalar_lea.vmem %s5, 1
  %v1960 = vld [vmem:[%s1959] sm:$0x1]
  %v1962 = vlaneseq
  %v1963 = vshrl.u32 %v1962, 7
  %v1964 = vsub.s32 0, %v1963
  %v1965 = vrot.slane %v1960, %v1964
  %v1968 = vsel %vm69, %v1952, 0
  %v1971 = vsel %vm69, %v1953, 0
  %1973 = vmatprep.subr.mxu0 0.0
  %1974 = vmatpush1.msra.mxu0 %v1955
  %1975 = vmatprep.subr.mxu0 0.0
  %1976 = vmatpush1.msra.mxu0 %v1956
  %1977 = vmatprep.subr.mxu0 0.0
  %1978 = vmatpush1.msra.mxu0 %v1957
  %1979 = vmatprep.subr.mxu0 0.0
  %1980 = vmatpush1.msra.mxu0 %v1958
  %1981 = vmatprep.subr.mxu0 0.0
  %1982 = vmatpush1.msra.mxu0 0.0
  %1983 = vmatprep.subr.mxu0 0.0
  %1984 = vmatpush1.msra.mxu0 0.0
  %1985 = vmatprep.subr.mxu0 0.0
  %1986 = vmatpush1.msra.mxu0 0.0
  %1987 = vmatprep.subr.mxu0 0.0
  %1988 = vmatpush1.msra.mxu0 0.0
  %1989 = vmatprep.subr.mxu0 0.0
  %1990 = vmatpush1.msra.mxu0 0.0
  %1991 = vmatprep.subr.mxu0 0.0
  %1992 = vmatpush1.msra.mxu0 0.0
  %1993 = vmatprep.subr.mxu0 0.0
  %1994 = vmatpush1.msra.mxu0 0.0
  %1995 = vmatprep.subr.mxu0 0.0
  %1996 = vmatpush1.msra.mxu0 0.0
  %1997 = vmatprep.subr.mxu0 0.0
  %1998 = vmatpush1.msra.mxu0 0.0
  %1999 = vmatprep.subr.mxu0 0.0
  %2000 = vmatpush1.msra.mxu0 0.0
  %2001 = vmatprep.subr.mxu0 0.0
  %2002 = vmatpush1.msra.mxu0 0.0
  %2003 = vmatprep.subr.mxu0 0.0
  %2004 = vmatpush1.msra.mxu0 0.0
  %2005 = vmatprep.subr.mxu0 0.0
  %2006 = vmatpush1.msra.mxu0 0.0
  %2007 = vmatprep.subr.mxu0 0.0
  %2008 = vmatpush1.msra.mxu0 0.0
  %2009 = vmatprep.subr.mxu0 0.0
  %2010 = vmatpush1.msra.mxu0 0.0
  %2011 = vmatprep.subr.mxu0 0.0
  %2012 = vmatpush1.msra.mxu0 0.0
  %2013 = vmatprep.subr.mxu0 0.0
  %2014 = vmatpush1.msra.mxu0 0.0
  %2015 = vmatprep.subr.mxu0 0.0
  %2016 = vmatpush1.msra.mxu0 0.0
  %2017 = vmatprep.subr.mxu0 0.0
  %2018 = vmatpush1.msra.mxu0 0.0
  %2019 = vmatprep.subr.mxu0 0.0
  %2020 = vmatpush1.msra.mxu0 0.0
  %2021 = vmatprep.subr.mxu0 0.0
  %2022 = vmatpush1.msra.mxu0 0.0
  %2023 = vmatprep.subr.mxu0 0.0
  %2024 = vmatpush1.msra.mxu0 0.0
  %2025 = vmatprep.subr.mxu0 0.0
  %2026 = vmatpush1.msra.mxu0 0.0
  %2027 = vmatprep.subr.mxu0 0.0
  %2028 = vmatpush1.msra.mxu0 0.0
  %2029 = vmatprep.subr.mxu0 0.0
  %2030 = vmatpush1.msra.mxu0 0.0
  %2031 = vmatprep.subr.mxu0 0.0
  %2032 = vmatpush1.msra.mxu0 0.0
  %2033 = vmatprep.subr.mxu0 0.0
  %2034 = vmatpush1.msra.mxu0 0.0
  %2035 = vmatprep.subr.mxu0 0.0
  %2036 = vmatpush1.msra.mxu0 0.0
  %2037 = vmatprep.mubr.f32.mxu0 0.0
  %2038 = vmatmul.mubr.f32.gmra.mrb[0].mxu0 %v1968
  %v2039 = vpop.f32.mrb[0].mxu0
  %v2040 = vadd.f32 %v1965, %v2039
  %v2041 = vpop.f32.mrb[0].mxu0
  %2042 = vmatprep.mubr.f32.mxu0 0.0
  %2043 = vmatmul.mubr.f32.gmra.mrb[0].mxu0 %v1971
  %v2044 = vpop.f32.mrb[0].mxu0
  %v2045 = vadd.f32 %v1965, %v2044
  %v2046 = vpop.f32.mrb[0].mxu0
  %2047 = vdwg.mxu0
  %2049 = vrot.lane.b32.xlu0 %v2040, 96
  %v2050 = vpop.permute.xlu0 %2049
  %v2051 = vsel %vm213, %v2040, 0
  %v2053 = vsel %vm213, %v2050, 0
  %2055 = vmatprep.subr.mxu0 0.0
  %2056 = vmatpush1.xpose.msra.mxu0 %v2053
  %2057 = vmatprep.subr.mxu0 0.0
  %2058 = vmatpush1.xpose.msra.mxu0 0.0
  %2059 = vmatprep.subr.mxu0 0.0
  %2060 = vmatpush1.xpose.msra.mxu0 0.0
  %2061 = vmatprep.subr.mxu0 0.0
  %2062 = vmatpush1.xpose.msra.mxu0 0.0
  %2063 = vmatprep.subr.mxu0 0.0
  %2064 = vmatpush1.xpose.msra.mxu0 0.0
  %2065 = vmatprep.subr.mxu0 0.0
  %2066 = vmatpush1.xpose.msra.mxu0 0.0
  %2067 = vmatprep.subr.mxu0 0.0
  %2068 = vmatpush1.xpose.msra.mxu0 0.0
  %2069 = vmatprep.subr.mxu0 0.0
  %2070 = vmatpush1.xpose.msra.mxu0 0.0
  %2071 = vmatprep.subr.mxu0 0.0
  %2072 = vmatpush1.xpose.msra.mxu0 0.0
  %2073 = vmatprep.subr.mxu0 0.0
  %2074 = vmatpush1.xpose.msra.mxu0 0.0
  %2075 = vmatprep.subr.mxu0 0.0
  %2076 = vmatpush1.xpose.msra.mxu0 0.0
  %2077 = vmatprep.subr.mxu0 0.0
  %2078 = vmatpush1.xpose.msra.mxu0 0.0
  %2079 = vmatprep.subr.mxu0 0.0
  %2080 = vmatpush1.xpose.msra.mxu0 0.0
  %2081 = vmatprep.subr.mxu0 0.0
  %2082 = vmatpush1.xpose.msra.mxu0 0.0
  %2083 = vmatprep.subr.mxu0 0.0
  %2084 = vmatpush1.xpose.msra.mxu0 0.0
  %2085 = vmatprep.subr.mxu0 0.0
  %2086 = vmatpush1.xpose.msra.mxu0 0.0
  %2087 = vmatprep.subr.mxu0 0.0
  %2088 = vmatpush1.xpose.msra.mxu0 0.0
  %2089 = vmatprep.subr.mxu0 0.0
  %2090 = vmatpush1.xpose.msra.mxu0 0.0
  %2091 = vmatprep.subr.mxu0 0.0
  %2092 = vmatpush1.xpose.msra.mxu0 0.0
  %2093 = vmatprep.subr.mxu0 0.0
  %2094 = vmatpush1.xpose.msra.mxu0 0.0
  %2095 = vmatprep.subr.mxu0 0.0
  %2096 = vmatpush1.xpose.msra.mxu0 0.0
  %2097 = vmatprep.subr.mxu0 0.0
  %2098 = vmatpush1.xpose.msra.mxu0 0.0
  %2099 = vmatprep.subr.mxu0 0.0
  %2100 = vmatpush1.xpose.msra.mxu0 0.0
  %2101 = vmatprep.subr.mxu0 0.0
  %2102 = vmatpush1.xpose.msra.mxu0 0.0
  %2103 = vmatprep.subr.mxu0 0.0
  %2104 = vmatpush1.xpose.msra.mxu0 0.0
  %2105 = vmatprep.subr.mxu0 0.0
  %2106 = vmatpush1.xpose.msra.mxu0 0.0
  %2107 = vmatprep.subr.mxu0 0.0
  %2108 = vmatpush1.xpose.msra.mxu0 0.0
  %2109 = vmatprep.subr.mxu0 0.0
  %2110 = vmatpush1.xpose.msra.mxu0 0.0
  %2111 = vmatprep.subr.mxu0 0.0
  %2112 = vmatpush1.xpose.msra.mxu0 0.0
  %2113 = vmatprep.subr.mxu0 0.0
  %2114 = vmatpush1.xpose.msra.mxu0 0.0
  %2115 = vmatprep.subr.mxu0 0.0
  %2116 = vmatpush1.xpose.msra.mxu0 0.0
  %2117 = vmatprep.subr.mxu0 0.0
  %2118 = vmatpush1.xpose.msra.mxu0 0.0
  %2119 = vmatprep.mubr.f32.mxu0 0.0
  %2120 = vmatmul.mubr.f32.gmra.mrb[0].mxu0 %v2051
  %v2121 = vpop.f32.mrb[0].mxu0
  %v2122 = vadd.f32 %v209, %v2121
  %v2123 = vpop.f32.mrb[0].mxu0
  %2124 = vdwg.mxu0
  %v2125 = vsel %vm213, %v2122, -inf
  %2126 = vmax.xlane.f32.xlu0 %v2125
  %v2127 = vpop.xlane.xlu0 %2126
  %v2128 = vsub.f32 %v2122, %v2127
  %v2129 = vmul.f32 %v2128, 1.442695
  %v2130 = vpow.pop %v2129
  %v2131 = vsel %vm213, %v2130, 0.0
  %2132 = vadd.xlane.f32.xlu0 %v2131
  %v2133 = vpop.xlane.xlu0 %2132
  %v2134 = vrcp.pop %v2133
  %v2135 = vmul.f32 %v2130, %v2134
  %2136 = vrot.lane.b32.xlu0 %v2040, 64
  %v2137 = vpop.permute.xlu0 %2136
  %v2140 = vsel %vm213, %v2135, 0
  %2142 = vmatprep.subr.mxu0 0.0
  %2143 = vmatpush1.msra.mxu0 %v2137
  %2144 = vmatprep.subr.mxu0 0.0
  %2145 = vmatpush1.msra.mxu0 0.0
  %2146 = vmatprep.subr.mxu0 0.0
  %2147 = vmatpush1.msra.mxu0 0.0
  %2148 = vmatprep.subr.mxu0 0.0
  %2149 = vmatpush1.msra.mxu0 0.0
  %2150 = vmatprep.subr.mxu0 0.0
  %2151 = vmatpush1.msra.mxu0 0.0
  %2152 = vmatprep.subr.mxu0 0.0
  %2153 = vmatpush1.msra.mxu0 0.0
  %2154 = vmatprep.subr.mxu0 0.0
  %2155 = vmatpush1.msra.mxu0 0.0
  %2156 = vmatprep.subr.mxu0 0.0
  %2157 = vmatpush1.msra.mxu0 0.0
  %2158 = vmatprep.subr.mxu0 0.0
  %2159 = vmatpush1.msra.mxu0 0.0
  %2160 = vmatprep.subr.mxu0 0.0
  %2161 = vmatpush1.msra.mxu0 0.0
  %2162 = vmatprep.subr.mxu0 0.0
  %2163 = vmatpush1.msra.mxu0 0.0
  %2164 = vmatprep.subr.mxu0 0.0
  %2165 = vmatpush1.msra.mxu0 0.0
  %2166 = vmatprep.subr.mxu0 0.0
  %2167 = vmatpush1.msra.mxu0 0.0
  %2168 = vmatprep.subr.mxu0 0.0
  %2169 = vmatpush1.msra.mxu0 0.0
  %2170 = vmatprep.subr.mxu0 0.0
  %2171 = vmatpush1.msra.mxu0 0.0
  %2172 = vmatprep.subr.mxu0 0.0
  %2173 = vmatpush1.msra.mxu0 0.0
  %2174 = vmatprep.subr.mxu0 0.0
  %2175 = vmatpush1.msra.mxu0 0.0
  %2176 = vmatprep.subr.mxu0 0.0
  %2177 = vmatpush1.msra.mxu0 0.0
  %2178 = vmatprep.subr.mxu0 0.0
  %2179 = vmatpush1.msra.mxu0 0.0
  %2180 = vmatprep.subr.mxu0 0.0
  %2181 = vmatpush1.msra.mxu0 0.0
  %2182 = vmatprep.subr.mxu0 0.0
  %2183 = vmatpush1.msra.mxu0 0.0
  %2184 = vmatprep.subr.mxu0 0.0
  %2185 = vmatpush1.msra.mxu0 0.0
  %2186 = vmatprep.subr.mxu0 0.0
  %2187 = vmatpush1.msra.mxu0 0.0
  %2188 = vmatprep.subr.mxu0 0.0
  %2189 = vmatpush1.msra.mxu0 0.0
  %2190 = vmatprep.subr.mxu0 0.0
  %2191 = vmatpush1.msra.mxu0 0.0
  %2192 = vmatprep.subr.mxu0 0.0
  %2193 = vmatpush1.msra.mxu0 0.0
  %2194 = vmatprep.subr.mxu0 0.0
  %2195 = vmatpush1.msra.mxu0 0.0
  %2196 = vmatprep.subr.mxu0 0.0
  %2197 = vmatpush1.msra.mxu0 0.0
  %2198 = vmatprep.subr.mxu0 0.0
  %2199 = vmatpush1.msra.mxu0 0.0
  %2200 = vmatprep.subr.mxu0 0.0
  %2201 = vmatpush1.msra.mxu0 0.0
  %2202 = vmatprep.subr.mxu0 0.0
  %2203 = vmatpush1.msra.mxu0 0.0
  %2204 = vmatprep.subr.mxu0 0.0
  %2205 = vmatpush1.msra.mxu0 0.0
  %2206 = vmatprep.mubr.f32.mxu0 0.0
  %2207 = vmatmul.mubr.f32.gmra.mrb[0].mxu0 %v2140
  %v2208 = vpop.f32.mrb[0].mxu0
  %v2209 = vadd.f32 0.0, %v2208
  %v2210 = vpop.f32.mrb[0].mxu0
  %2211 = vdwg.mxu0
  %2212 = vst.msk [vmem:[#allocation2] sm:$0xff] %vm213, %v2209
  %2213 = vrot.lane.b32.xlu0 %v2040, 120
  %v2214 = vpop.permute.xlu0 %2213
  %2215 = vrot.lane.b32.xlu0 %v2040, 88
  %v2216 = vpop.permute.xlu0 %2215
  %v2217 = vsel %vm213, %v2214, 0
  %v2219 = vsel %vm213, %v2216, 0
  %2221 = vmatprep.subr.mxu0 0.0
  %2222 = vmatpush1.xpose.msra.mxu0 %v2219
  %2223 = vmatprep.subr.mxu0 0.0
  %2224 = vmatpush1.xpose.msra.mxu0 0.0
  %2225 = vmatprep.subr.mxu0 0.0
  %2226 = vmatpush1.xpose.msra.mxu0 0.0
  %2227 = vmatprep.subr.mxu0 0.0
  %2228 = vmatpush1.xpose.msra.mxu0 0.0
  %2229 = vmatprep.subr.mxu0 0.0
  %2230 = vmatpush1.xpose.msra.mxu0 0.0
  %2231 = vmatprep.subr.mxu0 0.0
  %2232 = vmatpush1.xpose.msra.mxu0 0.0
  %2233 = vmatprep.subr.mxu0 0.0
  %2234 = vmatpush1.xpose.msra.mxu0 0.0
  %2235 = vmatprep.subr.mxu0 0.0
  %2236 = vmatpush1.xpose.msra.mxu0 0.0
  %2237 = vmatprep.subr.mxu0 0.0
  %2238 = vmatpush1.xpose.msra.mxu0 0.0
  %2239 = vmatprep.subr.mxu0 0.0
  %2240 = vmatpush1.xpose.msra.mxu0 0.0
  %2241 = vmatprep.subr.mxu0 0.0
  %2242 = vmatpush1.xpose.msra.mxu0 0.0
  %2243 = vmatprep.subr.mxu0 0.0
  %2244 = vmatpush1.xpose.msra.mxu0 0.0
  %2245 = vmatprep.subr.mxu0 0.0
  %2246 = vmatpush1.xpose.msra.mxu0 0.0
  %2247 = vmatprep.subr.mxu0 0.0
  %2248 = vmatpush1.xpose.msra.mxu0 0.0
  %2249 = vmatprep.subr.mxu0 0.0
  %2250 = vmatpush1.xpose.msra.mxu0 0.0
  %2251 = vmatprep.subr.mxu0 0.0
  %2252 = vmatpush1.xpose.msra.mxu0 0.0
  %2253 = vmatprep.subr.mxu0 0.0
  %2254 = vmatpush1.xpose.msra.mxu0 0.0
  %2255 = vmatprep.subr.mxu0 0.0
  %2256 = vmatpush1.xpose.msra.mxu0 0.0
  %2257 = vmatprep.subr.mxu0 0.0
  %2258 = vmatpush1.xpose.msra.mxu0 0.0
  %2259 = vmatprep.subr.mxu0 0.0
  %2260 = vmatpush1.xpose.msra.mxu0 0.0
  %2261 = vmatprep.subr.mxu0 0.0
  %2262 = vmatpush1.xpose.msra.mxu0 0.0
  %2263 = vmatprep.subr.mxu0 0.0
  %2264 = vmatpush1.xpose.msra.mxu0 0.0
  %2265 = vmatprep.subr.mxu0 0.0
  %2266 = vmatpush1.xpose.msra.mxu0 0.0
  %2267 = vmatprep.subr.mxu0 0.0
  %2268 = vmatpush1.xpose.msra.mxu0 0.0
  %2269 = vmatprep.subr.mxu0 0.0
  %2270 = vmatpush1.xpose.msra.mxu0 0.0
  %2271 = vmatprep.subr.mxu0 0.0
  %2272 = vmatpush1.xpose.msra.mxu0 0.0
  %2273 = vmatprep.subr.mxu0 0.0
  %2274 = vmatpush1.xpose.msra.mxu0 0.0
  %2275 = vmatprep.subr.mxu0 0.0
  %2276 = vmatpush1.xpose.msra.mxu0 0.0
  %2277 = vmatprep.subr.mxu0 0.0
  %2278 = vmatpush1.xpose.msra.mxu0 0.0
  %2279 = vmatprep.subr.mxu0 0.0
  %2280 = vmatpush1.xpose.msra.mxu0 0.0
  %2281 = vmatprep.subr.mxu0 0.0
  %2282 = vmatpush1.xpose.msra.mxu0 0.0
  %2283 = vmatprep.subr.mxu0 0.0
  %2284 = vmatpush1.xpose.msra.mxu0 0.0
  %2285 = vmatprep.mubr.f32.mxu0 0.0
  %2286 = vmatmul.mubr.f32.gmra.mrb[0].mxu0 %v2217
  %v2287 = vpop.f32.mrb[0].mxu0
  %v2288 = vadd.f32 %v209, %v2287
  %v2289 = vpop.f32.mrb[0].mxu0
  %2290 = vdwg.mxu0
  %v2291 = vsel %vm213, %v2288, -inf
  %2292 = vmax.xlane.f32.xlu0 %v2291
  %v2293 = vpop.xlane.xlu0 %2292
  %v2294 = vsub.f32 %v2288, %v2293
  %v2295 = vmul.f32 %v2294, 1.442695
  %v2296 = vpow.pop %v2295
  %v2297 = vsel %vm213, %v2296, 0.0
  %2298 = vadd.xlane.f32.xlu0 %v2297
  %v2299 = vpop.xlane.xlu0 %2298
  %v2300 = vrcp.pop %v2299
  %v2301 = vmul.f32 %v2296, %v2300
  %2302 = vrot.lane.b32.xlu0 %v2040, 56
  %v2303 = vpop.permute.xlu0 %2302
  %v2306 = vsel %vm213, %v2301, 0
  %2308 = vmatprep.subr.mxu0 0.0
  %2309 = vmatpush1.msra.mxu0 %v2303
  %2310 = vmatprep.subr.mxu0 0.0
  %2311 = vmatpush1.msra.mxu0 0.0
  %2312 = vmatprep.subr.mxu0 0.0
  %2313 = vmatpush1.msra.mxu0 0.0
  %2314 = vmatprep.subr.mxu0 0.0
  %2315 = vmatpush1.msra.mxu0 0.0
  %2316 = vmatprep.subr.mxu0 0.0
  %2317 = vmatpush1.msra.mxu0 0.0
  %2318 = vmatprep.subr.mxu0 0.0
  %2319 = vmatpush1.msra.mxu0 0.0
  %2320 = vmatprep.subr.mxu0 0.0
  %2321 = vmatpush1.msra.mxu0 0.0
  %2322 = vmatprep.subr.mxu0 0.0
  %2323 = vmatpush1.msra.mxu0 0.0
  %2324 = vmatprep.subr.mxu0 0.0
  %2325 = vmatpush1.msra.mxu0 0.0
  %2326 = vmatprep.subr.mxu0 0.0
  %2327 = vmatpush1.msra.mxu0 0.0
  %2328 = vmatprep.subr.mxu0 0.0
  %2329 = vmatpush1.msra.mxu0 0.0
  %2330 = vmatprep.subr.mxu0 0.0
  %2331 = vmatpush1.msra.mxu0 0.0
  %2332 = vmatprep.subr.mxu0 0.0
  %2333 = vmatpush1.msra.mxu0 0.0
  %2334 = vmatprep.subr.mxu0 0.0
  %2335 = vmatpush1.msra.mxu0 0.0
  %2336 = vmatprep.subr.mxu0 0.0
  %2337 = vmatpush1.msra.mxu0 0.0
  %2338 = vmatprep.subr.mxu0 0.0
  %2339 = vmatpush1.msra.mxu0 0.0
  %2340 = vmatprep.subr.mxu0 0.0
  %2341 = vmatpush1.msra.mxu0 0.0
  %2342 = vmatprep.subr.mxu0 0.0
  %2343 = vmatpush1.msra.mxu0 0.0
  %2344 = vmatprep.subr.mxu0 0.0
  %2345 = vmatpush1.msra.mxu0 0.0
  %2346 = vmatprep.subr.mxu0 0.0
  %2347 = vmatpush1.msra.mxu0 0.0
  %2348 = vmatprep.subr.mxu0 0.0
  %2349 = vmatpush1.msra.mxu0 0.0
  %2350 = vmatprep.subr.mxu0 0.0
  %2351 = vmatpush1.msra.mxu0 0.0
  %2352 = vmatprep.subr.mxu0 0.0
  %2353 = vmatpush1.msra.mxu0 0.0
  %2354 = vmatprep.subr.mxu0 0.0
  %2355 = vmatpush1.msra.mxu0 0.0
  %2356 = vmatprep.subr.mxu0 0.0
  %2357 = vmatpush1.msra.mxu0 0.0
  %2358 = vmatprep.subr.mxu0 0.0
  %2359 = vmatpush1.msra.mxu0 0.0
  %2360 = vmatprep.subr.mxu0 0.0
  %2361 = vmatpush1.msra.mxu0 0.0
  %2362 = vmatprep.subr.mxu0 0.0
  %2363 = vmatpush1.msra.mxu0 0.0
  %2364 = vmatprep.subr.mxu0 0.0
  %2365 = vmatpush1.msra.mxu0 0.0
  %2366 = vmatprep.subr.mxu0 0.0
  %2367 = vmatpush1.msra.mxu0 0.0
  %2368 = vmatprep.subr.mxu0 0.0
  %2369 = vmatpush1.msra.mxu0 0.0
  %2370 = vmatprep.subr.mxu0 0.0
  %2371 = vmatpush1.msra.mxu0 0.0
  %2372 = vmatprep.mubr.f32.mxu0 0.0
  %2373 = vmatmul.mubr.f32.gmra.mrb[0].mxu0 %v2306
  %v2374 = vpop.f32.mrb[0].mxu0
  %v2375 = vadd.f32 0.0, %v2374
  %v2376 = vpop.f32.mrb[0].mxu0
  %2377 = vdwg.mxu0
  %2379 = vrot.lane.b32.xlu0 %v2375, 8
  %v2380 = vpop.permute.xlu0 %2379
  %2382 = vst.msk [vmem:[#allocation2] sm:$0xff] %vm545, %v2380
  %2383 = vrot.lane.b32.xlu0 %v2040, 112
  %v2384 = vpop.permute.xlu0 %2383
  %2385 = vrot.lane.b32.xlu0 %v2040, 80
  %v2386 = vpop.permute.xlu0 %2385
  %v2387 = vsel %vm213, %v2384, 0
  %v2389 = vsel %vm213, %v2386, 0
  %2391 = vmatprep.subr.mxu0 0.0
  %2392 = vmatpush1.xpose.msra.mxu0 %v2389
  %2393 = vmatprep.subr.mxu0 0.0
  %2394 = vmatpush1.xpose.msra.mxu0 0.0
  %2395 = vmatprep.subr.mxu0 0.0
  %2396 = vmatpush1.xpose.msra.mxu0 0.0
  %2397 = vmatprep.subr.mxu0 0.0
  %2398 = vmatpush1.xpose.msra.mxu0 0.0
  %2399 = vmatprep.subr.mxu0 0.0
  %2400 = vmatpush1.xpose.msra.mxu0 0.0
  %2401 = vmatprep.subr.mxu0 0.0
  %2402 = vmatpush1.xpose.msra.mxu0 0.0
  %2403 = vmatprep.subr.mxu0 0.0
  %2404 = vmatpush1.xpose.msra.mxu0 0.0
  %2405 = vmatprep.subr.mxu0 0.0
  %2406 = vmatpush1.xpose.msra.mxu0 0.0
  %2407 = vmatprep.subr.mxu0 0.0
  %2408 = vmatpush1.xpose.msra.mxu0 0.0
  %2409 = vmatprep.subr.mxu0 0.0
  %2410 = vmatpush1.xpose.msra.mxu0 0.0
  %2411 = vmatprep.subr.mxu0 0.0
  %2412 = vmatpush1.xpose.msra.mxu0 0.0
  %2413 = vmatprep.subr.mxu0 0.0
  %2414 = vmatpush1.xpose.msra.mxu0 0.0
  %2415 = vmatprep.subr.mxu0 0.0
  %2416 = vmatpush1.xpose.msra.mxu0 0.0
  %2417 = vmatprep.subr.mxu0 0.0
  %2418 = vmatpush1.xpose.msra.mxu0 0.0
  %2419 = vmatprep.subr.mxu0 0.0
  %2420 = vmatpush1.xpose.msra.mxu0 0.0
  %2421 = vmatprep.subr.mxu0 0.0
  %2422 = vmatpush1.xpose.msra.mxu0 0.0
  %2423 = vmatprep.subr.mxu0 0.0
  %2424 = vmatpush1.xpose.msra.mxu0 0.0
  %2425 = vmatprep.subr.mxu0 0.0
  %2426 = vmatpush1.xpose.msra.mxu0 0.0
  %2427 = vmatprep.subr.mxu0 0.0
  %2428 = vmatpush1.xpose.msra.mxu0 0.0
  %2429 = vmatprep.subr.mxu0 0.0
  %2430 = vmatpush1.xpose.msra.mxu0 0.0
  %2431 = vmatprep.subr.mxu0 0.0
  %2432 = vmatpush1.xpose.msra.mxu0 0.0
  %2433 = vmatprep.subr.mxu0 0.0
  %2434 = vmatpush1.xpose.msra.mxu0 0.0
  %2435 = vmatprep.subr.mxu0 0.0
  %2436 = vmatpush1.xpose.msra.mxu0 0.0
  %2437 = vmatprep.subr.mxu0 0.0
  %2438 = vmatpush1.xpose.msra.mxu0 0.0
  %2439 = vmatprep.subr.mxu0 0.0
  %2440 = vmatpush1.xpose.msra.mxu0 0.0
  %2441 = vmatprep.subr.mxu0 0.0
  %2442 = vmatpush1.xpose.msra.mxu0 0.0
  %2443 = vmatprep.subr.mxu0 0.0
  %2444 = vmatpush1.xpose.msra.mxu0 0.0
  %2445 = vmatprep.subr.mxu0 0.0
  %2446 = vmatpush1.xpose.msra.mxu0 0.0
  %2447 = vmatprep.subr.mxu0 0.0
  %2448 = vmatpush1.xpose.msra.mxu0 0.0
  %2449 = vmatprep.subr.mxu0 0.0
  %2450 = vmatpush1.xpose.msra.mxu0 0.0
  %2451 = vmatprep.subr.mxu0 0.0
  %2452 = vmatpush1.xpose.msra.mxu0 0.0
  %2453 = vmatprep.subr.mxu0 0.0
  %2454 = vmatpush1.xpose.msra.mxu0 0.0
  %2455 = vmatprep.mubr.f32.mxu0 0.0
  %2456 = vmatmul.mubr.f32.gmra.mrb[0].mxu0 %v2387
  %v2457 = vpop.f32.mrb[0].mxu0
  %v2458 = vadd.f32 %v209, %v2457
  %v2459 = vpop.f32.mrb[0].mxu0
  %2460 = vdwg.mxu0
  %v2461 = vsel %vm213, %v2458, -inf
  %2462 = vmax.xlane.f32.xlu0 %v2461
  %v2463 = vpop.xlane.xlu0 %2462
  %v2464 = vsub.f32 %v2458, %v2463
  %v2465 = vmul.f32 %v2464, 1.442695
  %v2466 = vpow.pop %v2465
  %v2467 = vsel %vm213, %v2466, 0.0
  %2468 = vadd.xlane.f32.xlu0 %v2467
  %v2469 = vpop.xlane.xlu0 %2468
  %v2470 = vrcp.pop %v2469
  %v2471 = vmul.f32 %v2466, %v2470
  %2472 = vrot.lane.b32.xlu0 %v2040, 48
  %v2473 = vpop.permute.xlu0 %2472
  %v2476 = vsel %vm213, %v2471, 0
  %2478 = vmatprep.subr.mxu0 0.0
  %2479 = vmatpush1.msra.mxu0 %v2473
  %2480 = vmatprep.subr.mxu0 0.0
  %2481 = vmatpush1.msra.mxu0 0.0
  %2482 = vmatprep.subr.mxu0 0.0
  %2483 = vmatpush1.msra.mxu0 0.0
  %2484 = vmatprep.subr.mxu0 0.0
  %2485 = vmatpush1.msra.mxu0 0.0
  %2486 = vmatprep.subr.mxu0 0.0
  %2487 = vmatpush1.msra.mxu0 0.0
  %2488 = vmatprep.subr.mxu0 0.0
  %2489 = vmatpush1.msra.mxu0 0.0
  %2490 = vmatprep.subr.mxu0 0.0
  %2491 = vmatpush1.msra.mxu0 0.0
  %2492 = vmatprep.subr.mxu0 0.0
  %2493 = vmatpush1.msra.mxu0 0.0
  %2494 = vmatprep.subr.mxu0 0.0
  %2495 = vmatpush1.msra.mxu0 0.0
  %2496 = vmatprep.subr.mxu0 0.0
  %2497 = vmatpush1.msra.mxu0 0.0
  %2498 = vmatprep.subr.mxu0 0.0
  %2499 = vmatpush1.msra.mxu0 0.0
  %2500 = vmatprep.subr.mxu0 0.0
  %2501 = vmatpush1.msra.mxu0 0.0
  %2502 = vmatprep.subr.mxu0 0.0
  %2503 = vmatpush1.msra.mxu0 0.0
  %2504 = vmatprep.subr.mxu0 0.0
  %2505 = vmatpush1.msra.mxu0 0.0
  %2506 = vmatprep.subr.mxu0 0.0
  %2507 = vmatpush1.msra.mxu0 0.0
  %2508 = vmatprep.subr.mxu0 0.0
  %2509 = vmatpush1.msra.mxu0 0.0
  %2510 = vmatprep.subr.mxu0 0.0
  %2511 = vmatpush1.msra.mxu0 0.0
  %2512 = vmatprep.subr.mxu0 0.0
  %2513 = vmatpush1.msra.mxu0 0.0
  %2514 = vmatprep.subr.mxu0 0.0
  %2515 = vmatpush1.msra.mxu0 0.0
  %2516 = vmatprep.subr.mxu0 0.0
  %2517 = vmatpush1.msra.mxu0 0.0
  %2518 = vmatprep.subr.mxu0 0.0
  %2519 = vmatpush1.msra.mxu0 0.0
  %2520 = vmatprep.subr.mxu0 0.0
  %2521 = vmatpush1.msra.mxu0 0.0
  %2522 = vmatprep.subr.mxu0 0.0
  %2523 = vmatpush1.msra.mxu0 0.0
  %2524 = vmatprep.subr.mxu0 0.0
  %2525 = vmatpush1.msra.mxu0 0.0
  %2526 = vmatprep.subr.mxu0 0.0
  %2527 = vmatpush1.msra.mxu0 0.0
  %2528 = vmatprep.subr.mxu0 0.0
  %2529 = vmatpush1.msra.mxu0 0.0
  %2530 = vmatprep.subr.mxu0 0.0
  %2531 = vmatpush1.msra.mxu0 0.0
  %2532 = vmatprep.subr.mxu0 0.0
  %2533 = vmatpush1.msra.mxu0 0.0
  %2534 = vmatprep.subr.mxu0 0.0
  %2535 = vmatpush1.msra.mxu0 0.0
  %2536 = vmatprep.subr.mxu0 0.0
  %2537 = vmatpush1.msra.mxu0 0.0
  %2538 = vmatprep.subr.mxu0 0.0
  %2539 = vmatpush1.msra.mxu0 0.0
  %2540 = vmatprep.subr.mxu0 0.0
  %2541 = vmatpush1.msra.mxu0 0.0
  %2542 = vmatprep.mubr.f32.mxu0 0.0
  %2543 = vmatmul.mubr.f32.gmra.mrb[0].mxu0 %v2476
  %v2544 = vpop.f32.mrb[0].mxu0
  %v2545 = vadd.f32 0.0, %v2544
  %v2546 = vpop.f32.mrb[0].mxu0
  %2547 = vdwg.mxu0
  %2549 = vrot.lane.b32.xlu0 %v2545, 16
  %v2550 = vpop.permute.xlu0 %2549
  %2552 = vst.msk [vmem:[#allocation2] sm:$0xff] %vm716, %v2550
  %2553 = vrot.lane.b32.xlu0 %v2040, 104
  %v2554 = vpop.permute.xlu0 %2553
  %2555 = vrot.lane.b32.xlu0 %v2040, 72
  %v2556 = vpop.permute.xlu0 %2555
  %v2557 = vsel %vm213, %v2554, 0
  %v2559 = vsel %vm213, %v2556, 0
  %2561 = vmatprep.subr.mxu0 0.0
  %2562 = vmatpush1.xpose.msra.mxu0 %v2559
  %2563 = vmatprep.subr.mxu0 0.0
  %2564 = vmatpush1.xpose.msra.mxu0 0.0
  %2565 = vmatprep.subr.mxu0 0.0
  %2566 = vmatpush1.xpose.msra.mxu0 0.0
  %2567 = vmatprep.subr.mxu0 0.0
  %2568 = vmatpush1.xpose.msra.mxu0 0.0
  %2569 = vmatprep.subr.mxu0 0.0
  %2570 = vmatpush1.xpose.msra.mxu0 0.0
  %2571 = vmatprep.subr.mxu0 0.0
  %2572 = vmatpush1.xpose.msra.mxu0 0.0
  %2573 = vmatprep.subr.mxu0 0.0
  %2574 = vmatpush1.xpose.msra.mxu0 0.0
  %2575 = vmatprep.subr.mxu0 0.0
  %2576 = vmatpush1.xpose.msra.mxu0 0.0
  %2577 = vmatprep.subr.mxu0 0.0
  %2578 = vmatpush1.xpose.msra.mxu0 0.0
  %2579 = vmatprep.subr.mxu0 0.0
  %2580 = vmatpush1.xpose.msra.mxu0 0.0
  %2581 = vmatprep.subr.mxu0 0.0
  %2582 = vmatpush1.xpose.msra.mxu0 0.0
  %2583 = vmatprep.subr.mxu0 0.0
  %2584 = vmatpush1.xpose.msra.mxu0 0.0
  %2585 = vmatprep.subr.mxu0 0.0
  %2586 = vmatpush1.xpose.msra.mxu0 0.0
  %2587 = vmatprep.subr.mxu0 0.0
  %2588 = vmatpush1.xpose.msra.mxu0 0.0
  %2589 = vmatprep.subr.mxu0 0.0
  %2590 = vmatpush1.xpose.msra.mxu0 0.0
  %2591 = vmatprep.subr.mxu0 0.0
  %2592 = vmatpush1.xpose.msra.mxu0 0.0
  %2593 = vmatprep.subr.mxu0 0.0
  %2594 = vmatpush1.xpose.msra.mxu0 0.0
  %2595 = vmatprep.subr.mxu0 0.0
  %2596 = vmatpush1.xpose.msra.mxu0 0.0
  %2597 = vmatprep.subr.mxu0 0.0
  %2598 = vmatpush1.xpose.msra.mxu0 0.0
  %2599 = vmatprep.subr.mxu0 0.0
  %2600 = vmatpush1.xpose.msra.mxu0 0.0
  %2601 = vmatprep.subr.mxu0 0.0
  %2602 = vmatpush1.xpose.msra.mxu0 0.0
  %2603 = vmatprep.subr.mxu0 0.0
  %2604 = vmatpush1.xpose.msra.mxu0 0.0
  %2605 = vmatprep.subr.mxu0 0.0
  %2606 = vmatpush1.xpose.msra.mxu0 0.0
  %2607 = vmatprep.subr.mxu0 0.0
  %2608 = vmatpush1.xpose.msra.mxu0 0.0
  %2609 = vmatprep.subr.mxu0 0.0
  %2610 = vmatpush1.xpose.msra.mxu0 0.0
  %2611 = vmatprep.subr.mxu0 0.0
  %2612 = vmatpush1.xpose.msra.mxu0 0.0
  %2613 = vmatprep.subr.mxu0 0.0
  %2614 = vmatpush1.xpose.msra.mxu0 0.0
  %2615 = vmatprep.subr.mxu0 0.0
  %2616 = vmatpush1.xpose.msra.mxu0 0.0
  %2617 = vmatprep.subr.mxu0 0.0
  %2618 = vmatpush1.xpose.msra.mxu0 0.0
  %2619 = vmatprep.subr.mxu0 0.0
  %2620 = vmatpush1.xpose.msra.mxu0 0.0
  %2621 = vmatprep.subr.mxu0 0.0
  %2622 = vmatpush1.xpose.msra.mxu0 0.0
  %2623 = vmatprep.subr.mxu0 0.0
  %2624 = vmatpush1.xpose.msra.mxu0 0.0
  %2625 = vmatprep.mubr.f32.mxu0 0.0
  %2626 = vmatmul.mubr.f32.gmra.mrb[0].mxu0 %v2557
  %v2627 = vpop.f32.mrb[0].mxu0
  %v2628 = vadd.f32 %v209, %v2627
  %v2629 = vpop.f32.mrb[0].mxu0
  %2630 = vdwg.mxu0
  %v2631 = vsel %vm213, %v2628, -inf
  %2632 = vmax.xlane.f32.xlu0 %v2631
  %v2633 = vpop.xlane.xlu0 %2632
  %v2634 = vsub.f32 %v2628, %v2633
  %v2635 = vmul.f32 %v2634, 1.442695
  %v2636 = vpow.pop %v2635
  %v2637 = vsel %vm213, %v2636, 0.0
  %2638 = vadd.xlane.f32.xlu0 %v2637
  %v2639 = vpop.xlane.xlu0 %2638
  %v2640 = vrcp.pop %v2639
  %v2641 = vmul.f32 %v2636, %v2640
  %2642 = vrot.lane.b32.xlu0 %v2040, 40
  %v2643 = vpop.permute.xlu0 %2642
  %v2646 = vsel %vm213, %v2641, 0
  %2648 = vmatprep.subr.mxu0 0.0
  %2649 = vmatpush1.msra.mxu0 %v2643
  %2650 = vmatprep.subr.mxu0 0.0
  %2651 = vmatpush1.msra.mxu0 0.0
  %2652 = vmatprep.subr.mxu0 0.0
  %2653 = vmatpush1.msra.mxu0 0.0
  %2654 = vmatprep.subr.mxu0 0.0
  %2655 = vmatpush1.msra.mxu0 0.0
  %2656 = vmatprep.subr.mxu0 0.0
  %2657 = vmatpush1.msra.mxu0 0.0
  %2658 = vmatprep.subr.mxu0 0.0
  %2659 = vmatpush1.msra.mxu0 0.0
  %2660 = vmatprep.subr.mxu0 0.0
  %2661 = vmatpush1.msra.mxu0 0.0
  %2662 = vmatprep.subr.mxu0 0.0
  %2663 = vmatpush1.msra.mxu0 0.0
  %2664 = vmatprep.subr.mxu0 0.0
  %2665 = vmatpush1.msra.mxu0 0.0
  %2666 = vmatprep.subr.mxu0 0.0
  %2667 = vmatpush1.msra.mxu0 0.0
  %2668 = vmatprep.subr.mxu0 0.0
  %2669 = vmatpush1.msra.mxu0 0.0
  %2670 = vmatprep.subr.mxu0 0.0
  %2671 = vmatpush1.msra.mxu0 0.0
  %2672 = vmatprep.subr.mxu0 0.0
  %2673 = vmatpush1.msra.mxu0 0.0
  %2674 = vmatprep.subr.mxu0 0.0
  %2675 = vmatpush1.msra.mxu0 0.0
  %2676 = vmatprep.subr.mxu0 0.0
  %2677 = vmatpush1.msra.mxu0 0.0
  %2678 = vmatprep.subr.mxu0 0.0
  %2679 = vmatpush1.msra.mxu0 0.0
  %2680 = vmatprep.subr.mxu0 0.0
  %2681 = vmatpush1.msra.mxu0 0.0
  %2682 = vmatprep.subr.mxu0 0.0
  %2683 = vmatpush1.msra.mxu0 0.0
  %2684 = vmatprep.subr.mxu0 0.0
  %2685 = vmatpush1.msra.mxu0 0.0
  %2686 = vmatprep.subr.mxu0 0.0
  %2687 = vmatpush1.msra.mxu0 0.0
  %2688 = vmatprep.subr.mxu0 0.0
  %2689 = vmatpush1.msra.mxu0 0.0
  %2690 = vmatprep.subr.mxu0 0.0
  %2691 = vmatpush1.msra.mxu0 0.0
  %2692 = vmatprep.subr.mxu0 0.0
  %2693 = vmatpush1.msra.mxu0 0.0
  %2694 = vmatprep.subr.mxu0 0.0
  %2695 = vmatpush1.msra.mxu0 0.0
  %2696 = vmatprep.subr.mxu0 0.0
  %2697 = vmatpush1.msra.mxu0 0.0
  %2698 = vmatprep.subr.mxu0 0.0
  %2699 = vmatpush1.msra.mxu0 0.0
  %2700 = vmatprep.subr.mxu0 0.0
  %2701 = vmatpush1.msra.mxu0 0.0
  %2702 = vmatprep.subr.mxu0 0.0
  %2703 = vmatpush1.msra.mxu0 0.0
  %2704 = vmatprep.subr.mxu0 0.0
  %2705 = vmatpush1.msra.mxu0 0.0
  %2706 = vmatprep.subr.mxu0 0.0
  %2707 = vmatpush1.msra.mxu0 0.0
  %2708 = vmatprep.subr.mxu0 0.0
  %2709 = vmatpush1.msra.mxu0 0.0
  %2710 = vmatprep.subr.mxu0 0.0
  %2711 = vmatpush1.msra.mxu0 0.0
  %2712 = vmatprep.mubr.f32.mxu0 0.0
  %2713 = vmatmul.mubr.f32.gmra.mrb[0].mxu0 %v2646
  %v2714 = vpop.f32.mrb[0].mxu0
  %v2715 = vadd.f32 0.0, %v2714
  %v2716 = vpop.f32.mrb[0].mxu0
  %2717 = vdwg.mxu0
  %2719 = vrot.lane.b32.xlu0 %v2715, 24
  %v2720 = vpop.permute.xlu0 %2719
  %2722 = vst.msk [vmem:[#allocation2] sm:$0xff] %vm887, %v2720
  %2724 = vrot.lane.b32.xlu0 %v2045, 96
  %v2725 = vpop.permute.xlu0 %2724
  %v2726 = vsel %vm213, %v2045, 0
  %v2728 = vsel %vm213, %v2725, 0
  %2730 = vmatprep.subr.mxu0 0.0
  %2731 = vmatpush1.xpose.msra.mxu0 %v2728
  %2732 = vmatprep.subr.mxu0 0.0
  %2733 = vmatpush1.xpose.msra.mxu0 0.0
  %2734 = vmatprep.subr.mxu0 0.0
  %2735 = vmatpush1.xpose.msra.mxu0 0.0
  %2736 = vmatprep.subr.mxu0 0.0
  %2737 = vmatpush1.xpose.msra.mxu0 0.0
  %2738 = vmatprep.subr.mxu0 0.0
  %2739 = vmatpush1.xpose.msra.mxu0 0.0
  %2740 = vmatprep.subr.mxu0 0.0
  %2741 = vmatpush1.xpose.msra.mxu0 0.0
  %2742 = vmatprep.subr.mxu0 0.0
  %2743 = vmatpush1.xpose.msra.mxu0 0.0
  %2744 = vmatprep.subr.mxu0 0.0
  %2745 = vmatpush1.xpose.msra.mxu0 0.0
  %2746 = vmatprep.subr.mxu0 0.0
  %2747 = vmatpush1.xpose.msra.mxu0 0.0
  %2748 = vmatprep.subr.mxu0 0.0
  %2749 = vmatpush1.xpose.msra.mxu0 0.0
  %2750 = vmatprep.subr.mxu0 0.0
  %2751 = vmatpush1.xpose.msra.mxu0 0.0
  %2752 = vmatprep.subr.mxu0 0.0
  %2753 = vmatpush1.xpose.msra.mxu0 0.0
  %2754 = vmatprep.subr.mxu0 0.0
  %2755 = vmatpush1.xpose.msra.mxu0 0.0
  %2756 = vmatprep.subr.mxu0 0.0
  %2757 = vmatpush1.xpose.msra.mxu0 0.0
  %2758 = vmatprep.subr.mxu0 0.0
  %2759 = vmatpush1.xpose.msra.mxu0 0.0
  %2760 = vmatprep.subr.mxu0 0.0
  %2761 = vmatpush1.xpose.msra.mxu0 0.0
  %2762 = vmatprep.subr.mxu0 0.0
  %2763 = vmatpush1.xpose.msra.mxu0 0.0
  %2764 = vmatprep.subr.mxu0 0.0
  %2765 = vmatpush1.xpose.msra.mxu0 0.0
  %2766 = vmatprep.subr.mxu0 0.0
  %2767 = vmatpush1.xpose.msra.mxu0 0.0
  %2768 = vmatprep.subr.mxu0 0.0
  %2769 = vmatpush1.xpose.msra.mxu0 0.0
  %2770 = vmatprep.subr.mxu0 0.0
  %2771 = vmatpush1.xpose.msra.mxu0 0.0
  %2772 = vmatprep.subr.mxu0 0.0
  %2773 = vmatpush1.xpose.msra.mxu0 0.0
  %2774 = vmatprep.subr.mxu0 0.0
  %2775 = vmatpush1.xpose.msra.mxu0 0.0
  %2776 = vmatprep.subr.mxu0 0.0
  %2777 = vmatpush1.xpose.msra.mxu0 0.0
  %2778 = vmatprep.subr.mxu0 0.0
  %2779 = vmatpush1.xpose.msra.mxu0 0.0
  %2780 = vmatprep.subr.mxu0 0.0
  %2781 = vmatpush1.xpose.msra.mxu0 0.0
  %2782 = vmatprep.subr.mxu0 0.0
  %2783 = vmatpush1.xpose.msra.mxu0 0.0
  %2784 = vmatprep.subr.mxu0 0.0
  %2785 = vmatpush1.xpose.msra.mxu0 0.0
  %2786 = vmatprep.subr.mxu0 0.0
  %2787 = vmatpush1.xpose.msra.mxu0 0.0
  %2788 = vmatprep.subr.mxu0 0.0
  %2789 = vmatpush1.xpose.msra.mxu0 0.0
  %2790 = vmatprep.subr.mxu0 0.0
  %2791 = vmatpush1.xpose.msra.mxu0 0.0
  %2792 = vmatprep.subr.mxu0 0.0
  %2793 = vmatpush1.xpose.msra.mxu0 0.0
  %2794 = vmatprep.mubr.f32.mxu0 0.0
  %2795 = vmatmul.mubr.f32.gmra.mrb[0].mxu0 %v2726
  %v2796 = vpop.f32.mrb[0].mxu0
  %v2797 = vadd.f32 %v892, %v2796
  %v2798 = vpop.f32.mrb[0].mxu0
  %2799 = vdwg.mxu0
  %v2800 = vsel %vm213, %v2797, -inf
  %2801 = vmax.xlane.f32.xlu0 %v2800
  %v2802 = vpop.xlane.xlu0 %2801
  %v2803 = vsub.f32 %v2797, %v2802
  %v2804 = vmul.f32 %v2803, 1.442695
  %v2805 = vpow.pop %v2804
  %v2806 = vsel %vm213, %v2805, 0.0
  %2807 = vadd.xlane.f32.xlu0 %v2806
  %v2808 = vpop.xlane.xlu0 %2807
  %v2809 = vrcp.pop %v2808
  %v2810 = vmul.f32 %v2805, %v2809
  %2811 = vrot.lane.b32.xlu0 %v2045, 64
  %v2812 = vpop.permute.xlu0 %2811
  %v2815 = vsel %vm213, %v2810, 0
  %2817 = vmatprep.subr.mxu0 0.0
  %2818 = vmatpush1.msra.mxu0 %v2812
  %2819 = vmatprep.subr.mxu0 0.0
  %2820 = vmatpush1.msra.mxu0 0.0
  %2821 = vmatprep.subr.mxu0 0.0
  %2822 = vmatpush1.msra.mxu0 0.0
  %2823 = vmatprep.subr.mxu0 0.0
  %2824 = vmatpush1.msra.mxu0 0.0
  %2825 = vmatprep.subr.mxu0 0.0
  %2826 = vmatpush1.msra.mxu0 0.0
  %2827 = vmatprep.subr.mxu0 0.0
  %2828 = vmatpush1.msra.mxu0 0.0
  %2829 = vmatprep.subr.mxu0 0.0
  %2830 = vmatpush1.msra.mxu0 0.0
  %2831 = vmatprep.subr.mxu0 0.0
  %2832 = vmatpush1.msra.mxu0 0.0
  %2833 = vmatprep.subr.mxu0 0.0
  %2834 = vmatpush1.msra.mxu0 0.0
  %2835 = vmatprep.subr.mxu0 0.0
  %2836 = vmatpush1.msra.mxu0 0.0
  %2837 = vmatprep.subr.mxu0 0.0
  %2838 = vmatpush1.msra.mxu0 0.0
  %2839 = vmatprep.subr.mxu0 0.0
  %2840 = vmatpush1.msra.mxu0 0.0
  %2841 = vmatprep.subr.mxu0 0.0
  %2842 = vmatpush1.msra.mxu0 0.0
  %2843 = vmatprep.subr.mxu0 0.0
  %2844 = vmatpush1.msra.mxu0 0.0
  %2845 = vmatprep.subr.mxu0 0.0
  %2846 = vmatpush1.msra.mxu0 0.0
  %2847 = vmatprep.subr.mxu0 0.0
  %2848 = vmatpush1.msra.mxu0 0.0
  %2849 = vmatprep.subr.mxu0 0.0
  %2850 = vmatpush1.msra.mxu0 0.0
  %2851 = vmatprep.subr.mxu0 0.0
  %2852 = vmatpush1.msra.mxu0 0.0
  %2853 = vmatprep.subr.mxu0 0.0
  %2854 = vmatpush1.msra.mxu0 0.0
  %2855 = vmatprep.subr.mxu0 0.0
  %2856 = vmatpush1.msra.mxu0 0.0
  %2857 = vmatprep.subr.mxu0 0.0
  %2858 = vmatpush1.msra.mxu0 0.0
  %2859 = vmatprep.subr.mxu0 0.0
  %2860 = vmatpush1.msra.mxu0 0.0
  %2861 = vmatprep.subr.mxu0 0.0
  %2862 = vmatpush1.msra.mxu0 0.0
  %2863 = vmatprep.subr.mxu0 0.0
  %2864 = vmatpush1.msra.mxu0 0.0
  %2865 = vmatprep.subr.mxu0 0.0
  %2866 = vmatpush1.msra.mxu0 0.0
  %2867 = vmatprep.subr.mxu0 0.0
  %2868 = vmatpush1.msra.mxu0 0.0
  %2869 = vmatprep.subr.mxu0 0.0
  %2870 = vmatpush1.msra.mxu0 0.0
  %2871 = vmatprep.subr.mxu0 0.0
  %2872 = vmatpush1.msra.mxu0 0.0
  %2873 = vmatprep.subr.mxu0 0.0
  %2874 = vmatpush1.msra.mxu0 0.0
  %2875 = vmatprep.subr.mxu0 0.0
  %2876 = vmatpush1.msra.mxu0 0.0
  %2877 = vmatprep.subr.mxu0 0.0
  %2878 = vmatpush1.msra.mxu0 0.0
  %2879 = vmatprep.subr.mxu0 0.0
  %2880 = vmatpush1.msra.mxu0 0.0
  %2881 = vmatprep.mubr.f32.mxu0 0.0
  %2882 = vmatmul.mubr.f32.gmra.mrb[0].mxu0 %v2815
  %v2883 = vpop.f32.mrb[0].mxu0
  %v2884 = vadd.f32 0.0, %v2883
  %v2885 = vpop.f32.mrb[0].mxu0
  %2886 = vdwg.mxu0
  %2887 = vst.msk [vmem:[#allocation2 + $0x8] sm:$0xff] %vm213, %v2884
  %2888 = vrot.lane.b32.xlu0 %v2045, 120
  %v2889 = vpop.permute.xlu0 %2888
  %2890 = vrot.lane.b32.xlu0 %v2045, 88
  %v2891 = vpop.permute.xlu0 %2890
  %v2892 = vsel %vm213, %v2889, 0
  %v2894 = vsel %vm213, %v2891, 0
  %2896 = vmatprep.subr.mxu0 0.0
  %2897 = vmatpush1.xpose.msra.mxu0 %v2894
  %2898 = vmatprep.subr.mxu0 0.0
  %2899 = vmatpush1.xpose.msra.mxu0 0.0
  %2900 = vmatprep.subr.mxu0 0.0
  %2901 = vmatpush1.xpose.msra.mxu0 0.0
  %2902 = vmatprep.subr.mxu0 0.0
  %2903 = vmatpush1.xpose.msra.mxu0 0.0
  %2904 = vmatprep.subr.mxu0 0.0
  %2905 = vmatpush1.xpose.msra.mxu0 0.0
  %2906 = vmatprep.subr.mxu0 0.0
  %2907 = vmatpush1.xpose.msra.mxu0 0.0
  %2908 = vmatprep.subr.mxu0 0.0
  %2909 = vmatpush1.xpose.msra.mxu0 0.0
  %2910 = vmatprep.subr.mxu0 0.0
  %2911 = vmatpush1.xpose.msra.mxu0 0.0
  %2912 = vmatprep.subr.mxu0 0.0
  %2913 = vmatpush1.xpose.msra.mxu0 0.0
  %2914 = vmatprep.subr.mxu0 0.0
  %2915 = vmatpush1.xpose.msra.mxu0 0.0
  %2916 = vmatprep.subr.mxu0 0.0
  %2917 = vmatpush1.xpose.msra.mxu0 0.0
  %2918 = vmatprep.subr.mxu0 0.0
  %2919 = vmatpush1.xpose.msra.mxu0 0.0
  %2920 = vmatprep.subr.mxu0 0.0
  %2921 = vmatpush1.xpose.msra.mxu0 0.0
  %2922 = vmatprep.subr.mxu0 0.0
  %2923 = vmatpush1.xpose.msra.mxu0 0.0
  %2924 = vmatprep.subr.mxu0 0.0
  %2925 = vmatpush1.xpose.msra.mxu0 0.0
  %2926 = vmatprep.subr.mxu0 0.0
  %2927 = vmatpush1.xpose.msra.mxu0 0.0
  %2928 = vmatprep.subr.mxu0 0.0
  %2929 = vmatpush1.xpose.msra.mxu0 0.0
  %2930 = vmatprep.subr.mxu0 0.0
  %2931 = vmatpush1.xpose.msra.mxu0 0.0
  %2932 = vmatprep.subr.mxu0 0.0
  %2933 = vmatpush1.xpose.msra.mxu0 0.0
  %2934 = vmatprep.subr.mxu0 0.0
  %2935 = vmatpush1.xpose.msra.mxu0 0.0
  %2936 = vmatprep.subr.mxu0 0.0
  %2937 = vmatpush1.xpose.msra.mxu0 0.0
  %2938 = vmatprep.subr.mxu0 0.0
  %2939 = vmatpush1.xpose.msra.mxu0 0.0
  %2940 = vmatprep.subr.mxu0 0.0
  %2941 = vmatpush1.xpose.msra.mxu0 0.0
  %2942 = vmatprep.subr.mxu0 0.0
  %2943 = vmatpush1.xpose.msra.mxu0 0.0
  %2944 = vmatprep.subr.mxu0 0.0
  %2945 = vmatpush1.xpose.msra.mxu0 0.0
  %2946 = vmatprep.subr.mxu0 0.0
  %2947 = vmatpush1.xpose.msra.mxu0 0.0
  %2948 = vmatprep.subr.mxu0 0.0
  %2949 = vmatpush1.xpose.msra.mxu0 0.0
  %2950 = vmatprep.subr.mxu0 0.0
  %2951 = vmatpush1.xpose.msra.mxu0 0.0
  %2952 = vmatprep.subr.mxu0 0.0
  %2953 = vmatpush1.xpose.msra.mxu0 0.0
  %2954 = vmatprep.subr.mxu0 0.0
  %2955 = vmatpush1.xpose.msra.mxu0 0.0
  %2956 = vmatprep.subr.mxu0 0.0
  %2957 = vmatpush1.xpose.msra.mxu0 0.0
  %2958 = vmatprep.subr.mxu0 0.0
  %2959 = vmatpush1.xpose.msra.mxu0 0.0
  %2960 = vmatprep.mubr.f32.mxu0 0.0
  %2961 = vmatmul.mubr.f32.gmra.mrb[0].mxu0 %v2892
  %v2962 = vpop.f32.mrb[0].mxu0
  %v2963 = vadd.f32 %v892, %v2962
  %v2964 = vpop.f32.mrb[0].mxu0
  %2965 = vdwg.mxu0
  %v2966 = vsel %vm213, %v2963, -inf
  %2967 = vmax.xlane.f32.xlu0 %v2966
  %v2968 = vpop.xlane.xlu0 %2967
  %v2969 = vsub.f32 %v2963, %v2968
  %v2970 = vmul.f32 %v2969, 1.442695
  %v2971 = vpow.pop %v2970
  %v2972 = vsel %vm213, %v2971, 0.0
  %2973 = vadd.xlane.f32.xlu0 %v2972
  %v2974 = vpop.xlane.xlu0 %2973
  %v2975 = vrcp.pop %v2974
  %v2976 = vmul.f32 %v2971, %v2975
  %2977 = vrot.lane.b32.xlu0 %v2045, 56
  %v2978 = vpop.permute.xlu0 %2977
  %v2981 = vsel %vm213, %v2976, 0
  %2983 = vmatprep.subr.mxu0 0.0
  %2984 = vmatpush1.msra.mxu0 %v2978
  %2985 = vmatprep.subr.mxu0 0.0
  %2986 = vmatpush1.msra.mxu0 0.0
  %2987 = vmatprep.subr.mxu0 0.0
  %2988 = vmatpush1.msra.mxu0 0.0
  %2989 = vmatprep.subr.mxu0 0.0
  %2990 = vmatpush1.msra.mxu0 0.0
  %2991 = vmatprep.subr.mxu0 0.0
  %2992 = vmatpush1.msra.mxu0 0.0
  %2993 = vmatprep.subr.mxu0 0.0
  %2994 = vmatpush1.msra.mxu0 0.0
  %2995 = vmatprep.subr.mxu0 0.0
  %2996 = vmatpush1.msra.mxu0 0.0
  %2997 = vmatprep.subr.mxu0 0.0
  %2998 = vmatpush1.msra.mxu0 0.0
  %2999 = vmatprep.subr.mxu0 0.0
  %3000 = vmatpush1.msra.mxu0 0.0
  %3001 = vmatprep.subr.mxu0 0.0
  %3002 = vmatpush1.msra.mxu0 0.0
  %3003 = vmatprep.subr.mxu0 0.0
  %3004 = vmatpush1.msra.mxu0 0.0
  %3005 = vmatprep.subr.mxu0 0.0
  %3006 = vmatpush1.msra.mxu0 0.0
  %3007 = vmatprep.subr.mxu0 0.0
  %3008 = vmatpush1.msra.mxu0 0.0
  %3009 = vmatprep.subr.mxu0 0.0
  %3010 = vmatpush1.msra.mxu0 0.0
  %3011 = vmatprep.subr.mxu0 0.0
  %3012 = vmatpush1.msra.mxu0 0.0
  %3013 = vmatprep.subr.mxu0 0.0
  %3014 = vmatpush1.msra.mxu0 0.0
  %3015 = vmatprep.subr.mxu0 0.0
  %3016 = vmatpush1.msra.mxu0 0.0
  %3017 = vmatprep.subr.mxu0 0.0
  %3018 = vmatpush1.msra.mxu0 0.0
  %3019 = vmatprep.subr.mxu0 0.0
  %3020 = vmatpush1.msra.mxu0 0.0
  %3021 = vmatprep.subr.mxu0 0.0
  %3022 = vmatpush1.msra.mxu0 0.0
  %3023 = vmatprep.subr.mxu0 0.0
  %3024 = vmatpush1.msra.mxu0 0.0
  %3025 = vmatprep.subr.mxu0 0.0
  %3026 = vmatpush1.msra.mxu0 0.0
  %3027 = vmatprep.subr.mxu0 0.0
  %3028 = vmatpush1.msra.mxu0 0.0
  %3029 = vmatprep.subr.mxu0 0.0
  %3030 = vmatpush1.msra.mxu0 0.0
  %3031 = vmatprep.subr.mxu0 0.0
  %3032 = vmatpush1.msra.mxu0 0.0
  %3033 = vmatprep.subr.mxu0 0.0
  %3034 = vmatpush1.msra.mxu0 0.0
  %3035 = vmatprep.subr.mxu0 0.0
  %3036 = vmatpush1.msra.mxu0 0.0
  %3037 = vmatprep.subr.mxu0 0.0
  %3038 = vmatpush1.msra.mxu0 0.0
  %3039 = vmatprep.subr.mxu0 0.0
  %3040 = vmatpush1.msra.mxu0 0.0
  %3041 = vmatprep.subr.mxu0 0.0
  %3042 = vmatpush1.msra.mxu0 0.0
  %3043 = vmatprep.subr.mxu0 0.0
  %3044 = vmatpush1.msra.mxu0 0.0
  %3045 = vmatprep.subr.mxu0 0.0
  %3046 = vmatpush1.msra.mxu0 0.0
  %3047 = vmatprep.mubr.f32.mxu0 0.0
  %3048 = vmatmul.mubr.f32.gmra.mrb[0].mxu0 %v2981
  %v3049 = vpop.f32.mrb[0].mxu0
  %v3050 = vadd.f32 0.0, %v3049
  %v3051 = vpop.f32.mrb[0].mxu0
  %3052 = vdwg.mxu0
  %3054 = vrot.lane.b32.xlu0 %v3050, 8
  %v3055 = vpop.permute.xlu0 %3054
  %3057 = vst.msk [vmem:[#allocation2 + $0x8] sm:$0xff] %vm545, %v3055
  %3058 = vrot.lane.b32.xlu0 %v2045, 112
  %v3059 = vpop.permute.xlu0 %3058
  %3060 = vrot.lane.b32.xlu0 %v2045, 80
  %v3061 = vpop.permute.xlu0 %3060
  %v3062 = vsel %vm213, %v3059, 0
  %v3064 = vsel %vm213, %v3061, 0
  %3066 = vmatprep.subr.mxu0 0.0
  %3067 = vmatpush1.xpose.msra.mxu0 %v3064
  %3068 = vmatprep.subr.mxu0 0.0
  %3069 = vmatpush1.xpose.msra.mxu0 0.0
  %3070 = vmatprep.subr.mxu0 0.0
  %3071 = vmatpush1.xpose.msra.mxu0 0.0
  %3072 = vmatprep.subr.mxu0 0.0
  %3073 = vmatpush1.xpose.msra.mxu0 0.0
  %3074 = vmatprep.subr.mxu0 0.0
  %3075 = vmatpush1.xpose.msra.mxu0 0.0
  %3076 = vmatprep.subr.mxu0 0.0
  %3077 = vmatpush1.xpose.msra.mxu0 0.0
  %3078 = vmatprep.subr.mxu0 0.0
  %3079 = vmatpush1.xpose.msra.mxu0 0.0
  %3080 = vmatprep.subr.mxu0 0.0
  %3081 = vmatpush1.xpose.msra.mxu0 0.0
  %3082 = vmatprep.subr.mxu0 0.0
  %3083 = vmatpush1.xpose.msra.mxu0 0.0
  %3084 = vmatprep.subr.mxu0 0.0
  %3085 = vmatpush1.xpose.msra.mxu0 0.0
  %3086 = vmatprep.subr.mxu0 0.0
  %3087 = vmatpush1.xpose.msra.mxu0 0.0
  %3088 = vmatprep.subr.mxu0 0.0
  %3089 = vmatpush1.xpose.msra.mxu0 0.0
  %3090 = vmatprep.subr.mxu0 0.0
  %3091 = vmatpush1.xpose.msra.mxu0 0.0
  %3092 = vmatprep.subr.mxu0 0.0
  %3093 = vmatpush1.xpose.msra.mxu0 0.0
  %3094 = vmatprep.subr.mxu0 0.0
  %3095 = vmatpush1.xpose.msra.mxu0 0.0
  %3096 = vmatprep.subr.mxu0 0.0
  %3097 = vmatpush1.xpose.msra.mxu0 0.0
  %3098 = vmatprep.subr.mxu0 0.0
  %3099 = vmatpush1.xpose.msra.mxu0 0.0
  %3100 = vmatprep.subr.mxu0 0.0
  %3101 = vmatpush1.xpose.msra.mxu0 0.0
  %3102 = vmatprep.subr.mxu0 0.0
  %3103 = vmatpush1.xpose.msra.mxu0 0.0
  %3104 = vmatprep.subr.mxu0 0.0
  %3105 = vmatpush1.xpose.msra.mxu0 0.0
  %3106 = vmatprep.subr.mxu0 0.0
  %3107 = vmatpush1.xpose.msra.mxu0 0.0
  %3108 = vmatprep.subr.mxu0 0.0
  %3109 = vmatpush1.xpose.msra.mxu0 0.0
  %3110 = vmatprep.subr.mxu0 0.0
  %3111 = vmatpush1.xpose.msra.mxu0 0.0
  %3112 = vmatprep.subr.mxu0 0.0
  %3113 = vmatpush1.xpose.msra.mxu0 0.0
  %3114 = vmatprep.subr.mxu0 0.0
  %3115 = vmatpush1.xpose.msra.mxu0 0.0
  %3116 = vmatprep.subr.mxu0 0.0
  %3117 = vmatpush1.xpose.msra.mxu0 0.0
  %3118 = vmatprep.subr.mxu0 0.0
  %3119 = vmatpush1.xpose.msra.mxu0 0.0
  %3120 = vmatprep.subr.mxu0 0.0
  %3121 = vmatpush1.xpose.msra.mxu0 0.0
  %3122 = vmatprep.subr.mxu0 0.0
  %3123 = vmatpush1.xpose.msra.mxu0 0.0
  %3124 = vmatprep.subr.mxu0 0.0
  %3125 = vmatpush1.xpose.msra.mxu0 0.0
  %3126 = vmatprep.subr.mxu0 0.0
  %3127 = vmatpush1.xpose.msra.mxu0 0.0
  %3128 = vmatprep.subr.mxu0 0.0
  %3129 = vmatpush1.xpose.msra.mxu0 0.0
  %3130 = vmatprep.mubr.f32.mxu0 0.0
  %3131 = vmatmul.mubr.f32.gmra.mrb[0].mxu0 %v3062
  %v3132 = vpop.f32.mrb[0].mxu0
  %v3133 = vadd.f32 %v892, %v3132
  %v3134 = vpop.f32.mrb[0].mxu0
  %3135 = vdwg.mxu0
  %v3136 = vsel %vm213, %v3133, -inf
  %3137 = vmax.xlane.f32.xlu0 %v3136
  %v3138 = vpop.xlane.xlu0 %3137
  %v3139 = vsub.f32 %v3133, %v3138
  %v3140 = vmul.f32 %v3139, 1.442695
  %v3141 = vpow.pop %v3140
  %v3142 = vsel %vm213, %v3141, 0.0
  %3143 = vadd.xlane.f32.xlu0 %v3142
  %v3144 = vpop.xlane.xlu0 %3143
  %v3145 = vrcp.pop %v3144
  %v3146 = vmul.f32 %v3141, %v3145
  %3147 = vrot.lane.b32.xlu0 %v2045, 48
  %v3148 = vpop.permute.xlu0 %3147
  %v3151 = vsel %vm213, %v3146, 0
  %3153 = vmatprep.subr.mxu0 0.0
  %3154 = vmatpush1.msra.mxu0 %v3148
  %3155 = vmatprep.subr.mxu0 0.0
  %3156 = vmatpush1.msra.mxu0 0.0
  %3157 = vmatprep.subr.mxu0 0.0
  %3158 = vmatpush1.msra.mxu0 0.0
  %3159 = vmatprep.subr.mxu0 0.0
  %3160 = vmatpush1.msra.mxu0 0.0
  %3161 = vmatprep.subr.mxu0 0.0
  %3162 = vmatpush1.msra.mxu0 0.0
  %3163 = vmatprep.subr.mxu0 0.0
  %3164 = vmatpush1.msra.mxu0 0.0
  %3165 = vmatprep.subr.mxu0 0.0
  %3166 = vmatpush1.msra.mxu0 0.0
  %3167 = vmatprep.subr.mxu0 0.0
  %3168 = vmatpush1.msra.mxu0 0.0
  %3169 = vmatprep.subr.mxu0 0.0
  %3170 = vmatpush1.msra.mxu0 0.0
  %3171 = vmatprep.subr.mxu0 0.0
  %3172 = vmatpush1.msra.mxu0 0.0
  %3173 = vmatprep.subr.mxu0 0.0
  %3174 = vmatpush1.msra.mxu0 0.0
  %3175 = vmatprep.subr.mxu0 0.0
  %3176 = vmatpush1.msra.mxu0 0.0
  %3177 = vmatprep.subr.mxu0 0.0
  %3178 = vmatpush1.msra.mxu0 0.0
  %3179 = vmatprep.subr.mxu0 0.0
  %3180 = vmatpush1.msra.mxu0 0.0
  %3181 = vmatprep.subr.mxu0 0.0
  %3182 = vmatpush1.msra.mxu0 0.0
  %3183 = vmatprep.subr.mxu0 0.0
  %3184 = vmatpush1.msra.mxu0 0.0
  %3185 = vmatprep.subr.mxu0 0.0
  %3186 = vmatpush1.msra.mxu0 0.0
  %3187 = vmatprep.subr.mxu0 0.0
  %3188 = vmatpush1.msra.mxu0 0.0
  %3189 = vmatprep.subr.mxu0 0.0
  %3190 = vmatpush1.msra.mxu0 0.0
  %3191 = vmatprep.subr.mxu0 0.0
  %3192 = vmatpush1.msra.mxu0 0.0
  %3193 = vmatprep.subr.mxu0 0.0
  %3194 = vmatpush1.msra.mxu0 0.0
  %3195 = vmatprep.subr.mxu0 0.0
  %3196 = vmatpush1.msra.mxu0 0.0
  %3197 = vmatprep.subr.mxu0 0.0
  %3198 = vmatpush1.msra.mxu0 0.0
  %3199 = vmatprep.subr.mxu0 0.0
  %3200 = vmatpush1.msra.mxu0 0.0
  %3201 = vmatprep.subr.mxu0 0.0
  %3202 = vmatpush1.msra.mxu0 0.0
  %3203 = vmatprep.subr.mxu0 0.0
  %3204 = vmatpush1.msra.mxu0 0.0
  %3205 = vmatprep.subr.mxu0 0.0
  %3206 = vmatpush1.msra.mxu0 0.0
  %3207 = vmatprep.subr.mxu0 0.0
  %3208 = vmatpush1.msra.mxu0 0.0
  %3209 = vmatprep.subr.mxu0 0.0
  %3210 = vmatpush1.msra.mxu0 0.0
  %3211 = vmatprep.subr.mxu0 0.0
  %3212 = vmatpush1.msra.mxu0 0.0
  %3213 = vmatprep.subr.mxu0 0.0
  %3214 = vmatpush1.msra.mxu0 0.0
  %3215 = vmatprep.subr.mxu0 0.0
  %3216 = vmatpush1.msra.mxu0 0.0
  %3217 = vmatprep.mubr.f32.mxu0 0.0
  %3218 = vmatmul.mubr.f32.gmra.mrb[0].mxu0 %v3151
  %v3219 = vpop.f32.mrb[0].mxu0
  %v3220 = vadd.f32 0.0, %v3219
  %v3221 = vpop.f32.mrb[0].mxu0
  %3222 = vdwg.mxu0
  %3224 = vrot.lane.b32.xlu0 %v3220, 16
  %v3225 = vpop.permute.xlu0 %3224
  %3227 = vst.msk [vmem:[#allocation2 + $0x8] sm:$0xff] %vm716, %v3225
  %3228 = vrot.lane.b32.xlu0 %v2045, 104
  %v3229 = vpop.permute.xlu0 %3228
  %3230 = vrot.lane.b32.xlu0 %v2045, 72
  %v3231 = vpop.permute.xlu0 %3230
  %v3232 = vsel %vm213, %v3229, 0
  %v3234 = vsel %vm213, %v3231, 0
  %3236 = vmatprep.subr.mxu0 0.0
  %3237 = vmatpush1.xpose.msra.mxu0 %v3234
  %3238 = vmatprep.subr.mxu0 0.0
  %3239 = vmatpush1.xpose.msra.mxu0 0.0
  %3240 = vmatprep.subr.mxu0 0.0
  %3241 = vmatpush1.xpose.msra.mxu0 0.0
  %3242 = vmatprep.subr.mxu0 0.0
  %3243 = vmatpush1.xpose.msra.mxu0 0.0
  %3244 = vmatprep.subr.mxu0 0.0
  %3245 = vmatpush1.xpose.msra.mxu0 0.0
  %3246 = vmatprep.subr.mxu0 0.0
  %3247 = vmatpush1.xpose.msra.mxu0 0.0
  %3248 = vmatprep.subr.mxu0 0.0
  %3249 = vmatpush1.xpose.msra.mxu0 0.0
  %3250 = vmatprep.subr.mxu0 0.0
  %3251 = vmatpush1.xpose.msra.mxu0 0.0
  %3252 = vmatprep.subr.mxu0 0.0
  %3253 = vmatpush1.xpose.msra.mxu0 0.0
  %3254 = vmatprep.subr.mxu0 0.0
  %3255 = vmatpush1.xpose.msra.mxu0 0.0
  %3256 = vmatprep.subr.mxu0 0.0
  %3257 = vmatpush1.xpose.msra.mxu0 0.0
  %3258 = vmatprep.subr.mxu0 0.0
  %3259 = vmatpush1.xpose.msra.mxu0 0.0
  %3260 = vmatprep.subr.mxu0 0.0
  %3261 = vmatpush1.xpose.msra.mxu0 0.0
  %3262 = vmatprep.subr.mxu0 0.0
  %3263 = vmatpush1.xpose.msra.mxu0 0.0
  %3264 = vmatprep.subr.mxu0 0.0
  %3265 = vmatpush1.xpose.msra.mxu0 0.0
  %3266 = vmatprep.subr.mxu0 0.0
  %3267 = vmatpush1.xpose.msra.mxu0 0.0
  %3268 = vmatprep.subr.mxu0 0.0
  %3269 = vmatpush1.xpose.msra.mxu0 0.0
  %3270 = vmatprep.subr.mxu0 0.0
  %3271 = vmatpush1.xpose.msra.mxu0 0.0
  %3272 = vmatprep.subr.mxu0 0.0
  %3273 = vmatpush1.xpose.msra.mxu0 0.0
  %3274 = vmatprep.subr.mxu0 0.0
  %3275 = vmatpush1.xpose.msra.mxu0 0.0
  %3276 = vmatprep.subr.mxu0 0.0
  %3277 = vmatpush1.xpose.msra.mxu0 0.0
  %3278 = vmatprep.subr.mxu0 0.0
  %3279 = vmatpush1.xpose.msra.mxu0 0.0
  %3280 = vmatprep.subr.mxu0 0.0
  %3281 = vmatpush1.xpose.msra.mxu0 0.0
  %3282 = vmatprep.subr.mxu0 0.0
  %3283 = vmatpush1.xpose.msra.mxu0 0.0
  %3284 = vmatprep.subr.mxu0 0.0
  %3285 = vmatpush1.xpose.msra.mxu0 0.0
  %3286 = vmatprep.subr.mxu0 0.0
  %3287 = vmatpush1.xpose.msra.mxu0 0.0
  %3288 = vmatprep.subr.mxu0 0.0
  %3289 = vmatpush1.xpose.msra.mxu0 0.0
  %3290 = vmatprep.subr.mxu0 0.0
  %3291 = vmatpush1.xpose.msra.mxu0 0.0
  %3292 = vmatprep.subr.mxu0 0.0
  %3293 = vmatpush1.xpose.msra.mxu0 0.0
  %3294 = vmatprep.subr.mxu0 0.0
  %3295 = vmatpush1.xpose.msra.mxu0 0.0
  %3296 = vmatprep.subr.mxu0 0.0
  %3297 = vmatpush1.xpose.msra.mxu0 0.0
  %3298 = vmatprep.subr.mxu0 0.0
  %3299 = vmatpush1.xpose.msra.mxu0 0.0
  %3300 = vmatprep.mubr.f32.mxu0 0.0
  %3301 = vmatmul.mubr.f32.gmra.mrb[0].mxu0 %v3232
  %v3302 = vpop.f32.mrb[0].mxu0
  %v3303 = vadd.f32 %v892, %v3302
  %v3304 = vpop.f32.mrb[0].mxu0
  %3305 = vdwg.mxu0
  %v3306 = vsel %vm213, %v3303, -inf
  %3307 = vmax.xlane.f32.xlu0 %v3306
  %v3308 = vpop.xlane.xlu0 %3307
  %v3309 = vsub.f32 %v3303, %v3308
  %v3310 = vmul.f32 %v3309, 1.442695
  %v3311 = vpow.pop %v3310
  %v3312 = vsel %vm213, %v3311, 0.0
  %3313 = vadd.xlane.f32.xlu0 %v3312
  %v3314 = vpop.xlane.xlu0 %3313
  %v3315 = vrcp.pop %v3314
  %v3316 = vmul.f32 %v3311, %v3315
  %3317 = vrot.lane.b32.xlu0 %v2045, 40
  %v3318 = vpop.permute.xlu0 %3317
  %v3321 = vsel %vm213, %v3316, 0
  %3323 = vmatprep.subr.mxu0 0.0
  %3324 = vmatpush1.msra.mxu0 %v3318
  %3325 = vmatprep.subr.mxu0 0.0
  %3326 = vmatpush1.msra.mxu0 0.0
  %3327 = vmatprep.subr.mxu0 0.0
  %3328 = vmatpush1.msra.mxu0 0.0
  %3329 = vmatprep.subr.mxu0 0.0
  %3330 = vmatpush1.msra.mxu0 0.0
  %3331 = vmatprep.subr.mxu0 0.0
  %3332 = vmatpush1.msra.mxu0 0.0
  %3333 = vmatprep.subr.mxu0 0.0
  %3334 = vmatpush1.msra.mxu0 0.0
  %3335 = vmatprep.subr.mxu0 0.0
  %3336 = vmatpush1.msra.mxu0 0.0
  %3337 = vmatprep.subr.mxu0 0.0
  %3338 = vmatpush1.msra.mxu0 0.0
  %3339 = vmatprep.subr.mxu0 0.0
  %3340 = vmatpush1.msra.mxu0 0.0
  %3341 = vmatprep.subr.mxu0 0.0
  %3342 = vmatpush1.msra.mxu0 0.0
  %3343 = vmatprep.subr.mxu0 0.0
  %3344 = vmatpush1.msra.mxu0 0.0
  %3345 = vmatprep.subr.mxu0 0.0
  %3346 = vmatpush1.msra.mxu0 0.0
  %3347 = vmatprep.subr.mxu0 0.0
  %3348 = vmatpush1.msra.mxu0 0.0
  %3349 = vmatprep.subr.mxu0 0.0
  %3350 = vmatpush1.msra.mxu0 0.0
  %3351 = vmatprep.subr.mxu0 0.0
  %3352 = vmatpush1.msra.mxu0 0.0
  %3353 = vmatprep.subr.mxu0 0.0
  %3354 = vmatpush1.msra.mxu0 0.0
  %3355 = vmatprep.subr.mxu0 0.0
  %3356 = vmatpush1.msra.mxu0 0.0
  %3357 = vmatprep.subr.mxu0 0.0
  %3358 = vmatpush1.msra.mxu0 0.0
  %3359 = vmatprep.subr.mxu0 0.0
  %3360 = vmatpush1.msra.mxu0 0.0
  %3361 = vmatprep.subr.mxu0 0.0
  %3362 = vmatpush1.msra.mxu0 0.0
  %3363 = vmatprep.subr.mxu0 0.0
  %3364 = vmatpush1.msra.mxu0 0.0
  %3365 = vmatprep.subr.mxu0 0.0
  %3366 = vmatpush1.msra.mxu0 0.0
  %3367 = vmatprep.subr.mxu0 0.0
  %3368 = vmatpush1.msra.mxu0 0.0
  %3369 = vmatprep.subr.mxu0 0.0
  %3370 = vmatpush1.msra.mxu0 0.0
  %3371 = vmatprep.subr.mxu0 0.0
  %3372 = vmatpush1.msra.mxu0 0.0
  %3373 = vmatprep.subr.mxu0 0.0
  %3374 = vmatpush1.msra.mxu0 0.0
  %3375 = vmatprep.subr.mxu0 0.0
  %3376 = vmatpush1.msra.mxu0 0.0
  %3377 = vmatprep.subr.mxu0 0.0
  %3378 = vmatpush1.msra.mxu0 0.0
  %3379 = vmatprep.subr.mxu0 0.0
  %3380 = vmatpush1.msra.mxu0 0.0
  %3381 = vmatprep.subr.mxu0 0.0
  %3382 = vmatpush1.msra.mxu0 0.0
  %3383 = vmatprep.subr.mxu0 0.0
  %3384 = vmatpush1.msra.mxu0 0.0
  %3385 = vmatprep.subr.mxu0 0.0
  %3386 = vmatpush1.msra.mxu0 0.0
  %3387 = vmatprep.mubr.f32.mxu0 0.0
  %3388 = vmatmul.mubr.f32.gmra.mrb[0].mxu0 %v3321
  %v3389 = vpop.f32.mrb[0].mxu0
  %v3390 = vadd.f32 0.0, %v3389
  %v3391 = vpop.f32.mrb[0].mxu0
  %3392 = vdwg.mxu0
  %3394 = vrot.lane.b32.xlu0 %v3390, 24
  %v3395 = vpop.permute.xlu0 %3394
  %3397 = vst.msk [vmem:[#allocation2 + $0x8] sm:$0xff] %vm887, %v3395
  %v3398 = vld [vmem:[#allocation2] sm:$0xff]
  %v3399 = vld [vmem:[#allocation2 + $0x8] sm:$0xff]
  %s3400 = scalar_lea.vmem %s6, 32
  %v3401 = vld [vmem:[%s3400] sm:$0xff]
  %v3402 = vld [vmem:[%s3400 + $0x8] sm:$0xff]
  %v3403 = vld [vmem:[%s3400 + $0x10] sm:$0xff]
  %v3404 = vld [vmem:[%s3400 + $0x18] sm:$0xff]
  %s3405 = scalar_lea.vmem %s7, 1
  %v3406 = vld [vmem:[%s3405] sm:$0x1]
  %v3408 = vlaneseq
  %v3409 = vshrl.u32 %v3408, 7
  %v3410 = vsub.s32 0, %v3409
  %v3411 = vrot.slane %v3406, %v3410
  %v3414 = vsel %vm69, %v3398, 0
  %v3417 = vsel %vm69, %v3399, 0
  %3419 = vmatprep.subr.mxu0 0.0
  %3420 = vmatpush1.msra.mxu0 %v3401
  %3421 = vmatprep.subr.mxu0 0.0
  %3422 = vmatpush1.msra.mxu0 %v3402
  %3423 = vmatprep.subr.mxu0 0.0
  %3424 = vmatpush1.msra.mxu0 %v3403
  %3425 = vmatprep.subr.mxu0 0.0
  %3426 = vmatpush1.msra.mxu0 %v3404
  %3427 = vmatprep.subr.mxu0 0.0
  %3428 = vmatpush1.msra.mxu0 0.0
  %3429 = vmatprep.subr.mxu0 0.0
  %3430 = vmatpush1.msra.mxu0 0.0
  %3431 = vmatprep.subr.mxu0 0.0
  %3432 = vmatpush1.msra.mxu0 0.0
  %3433 = vmatprep.subr.mxu0 0.0
  %3434 = vmatpush1.msra.mxu0 0.0
  %3435 = vmatprep.subr.mxu0 0.0
  %3436 = vmatpush1.msra.mxu0 0.0
  %3437 = vmatprep.subr.mxu0 0.0
  %3438 = vmatpush1.msra.mxu0 0.0
  %3439 = vmatprep.subr.mxu0 0.0
  %3440 = vmatpush1.msra.mxu0 0.0
  %3441 = vmatprep.subr.mxu0 0.0
  %3442 = vmatpush1.msra.mxu0 0.0
  %3443 = vmatprep.subr.mxu0 0.0
  %3444 = vmatpush1.msra.mxu0 0.0
  %3445 = vmatprep.subr.mxu0 0.0
  %3446 = vmatpush1.msra.mxu0 0.0
  %3447 = vmatprep.subr.mxu0 0.0
  %3448 = vmatpush1.msra.mxu0 0.0
  %3449 = vmatprep.subr.mxu0 0.0
  %3450 = vmatpush1.msra.mxu0 0.0
  %3451 = vmatprep.subr.mxu0 0.0
  %3452 = vmatpush1.msra.mxu0 0.0
  %3453 = vmatprep.subr.mxu0 0.0
  %3454 = vmatpush1.msra.mxu0 0.0
  %3455 = vmatprep.subr.mxu0 0.0
  %3456 = vmatpush1.msra.mxu0 0.0
  %3457 = vmatprep.subr.mxu0 0.0
  %3458 = vmatpush1.msra.mxu0 0.0
  %3459 = vmatprep.subr.mxu0 0.0
  %3460 = vmatpush1.msra.mxu0 0.0
  %3461 = vmatprep.subr.mxu0 0.0
  %3462 = vmatpush1.msra.mxu0 0.0
  %3463 = vmatprep.subr.mxu0 0.0
  %3464 = vmatpush1.msra.mxu0 0.0
  %3465 = vmatprep.subr.mxu0 0.0
  %3466 = vmatpush1.msra.mxu0 0.0
  %3467 = vmatprep.subr.mxu0 0.0
  %3468 = vmatpush1.msra.mxu0 0.0
  %3469 = vmatprep.subr.mxu0 0.0
  %3470 = vmatpush1.msra.mxu0 0.0
  %3471 = vmatprep.subr.mxu0 0.0
  %3472 = vmatpush1.msra.mxu0 0.0
  %3473 = vmatprep.subr.mxu0 0.0
  %3474 = vmatpush1.msra.mxu0 0.0
  %3475 = vmatprep.subr.mxu0 0.0
  %3476 = vmatpush1.msra.mxu0 0.0
  %3477 = vmatprep.subr.mxu0 0.0
  %3478 = vmatpush1.msra.mxu0 0.0
  %3479 = vmatprep.subr.mxu0 0.0
  %3480 = vmatpush1.msra.mxu0 0.0
  %3481 = vmatprep.subr.mxu0 0.0
  %3482 = vmatpush1.msra.mxu0 0.0
  %3483 = vmatprep.mubr.f32.mxu0 0.0
  %3484 = vmatmul.mubr.f32.gmra.mrb[0].mxu0 %v3414
  %v3485 = vpop.f32.mrb[0].mxu0
  %v3486 = vadd.f32 %v3411, %v3485
  %v3487 = vpop.f32.mrb[0].mxu0
  %3488 = vmatprep.mubr.f32.mxu0 0.0
  %3489 = vmatmul.mubr.f32.gmra.mrb[0].mxu0 %v3417
  %v3490 = vpop.f32.mrb[0].mxu0
  %v3491 = vadd.f32 %v3411, %v3490
  %v3492 = vpop.f32.mrb[0].mxu0
  %3493 = vdwg.mxu0
  %v3494 = vadd.f32 %v3486, %v1952
  %v3495 = vadd.f32 %v3491, %v1953
  %s3496 = scalar_lea.vmem %s8, 1
  %v3497 = vld [vmem:[%s3496] sm:$0x1]
  %s3498 = scalar_lea.vmem %s9, 1
  %v3499 = vld [vmem:[%s3498] sm:$0x1]
  %v3500 = vsel %vm69, %v3494, 0.0
  %3501 = vadd.xlane.f32.xlu0 %v3500
  %v3502 = vpop.xlane.xlu0 %3501
  %v3503 = vsel %vm69, %v3495, 0.0
  %3504 = vadd.xlane.f32.xlu0 %v3503
  %v3505 = vpop.xlane.xlu0 %3504
  %v3506 = vmul.f32 %v3502, %v76
  %v3507 = vmul.f32 %v3505, %v76
  %v3508 = vsub.f32 %v3494, %v3506
  %v3509 = vsub.f32 %v3495, %v3507
  %v3510 = vmul.f32 %v3508, %v3508
  %v3511 = vmul.f32 %v3509, %v3509
  %v3512 = vsel %vm69, %v3510, 0.0
  %3513 = vadd.xlane.f32.xlu0 %v3512
  %v3514 = vpop.xlane.xlu0 %3513
  %v3515 = vsel %vm69, %v3511, 0.0
  %3516 = vadd.xlane.f32.xlu0 %v3515
  %v3517 = vpop.xlane.xlu0 %3516
  %v3518 = vmul.f32 %v3514, %v76
  %v3519 = vmul.f32 %v3517, %v76
  %v3520 = vadd.f32 %v3518, 1e-12
  %v3521 = vadd.f32 %v3519, 1e-12
  %v3522 = vrsqrt.pop %v3520
  %v3523 = vrsqrt.pop %v3521
  %v3524 = vmul.f32 %v3508, %v3522
  %v3525 = vmul.f32 %v3509, %v3523
  %v3527 = vlaneseq
  %v3528 = vshrl.u32 %v3527, 7
  %v3529 = vsub.s32 0, %v3528
  %v3530 = vrot.slane %v3497, %v3529
  %v3532 = vmul.f32 %v3524, %v3530
  %v3533 = vmul.f32 %v3525, %v3530
  %v3535 = vlaneseq
  %v3536 = vshrl.u32 %v3535, 7
  %v3537 = vsub.s32 0, %v3536
  %v3538 = vrot.slane %v3499, %v3537
  %v3540 = vadd.f32 %v3532, %v3538
  %v3541 = vadd.f32 %v3533, %v3538
  %s3542 = scalar_lea.vmem %s10, 32
  %v3543 = vld [vmem:[%s3542] sm:$0xff]
  %v3544 = vld [vmem:[%s3542 + $0x8] sm:$0xff]
  %v3545 = vld [vmem:[%s3542 + $0x10] sm:$0xff]
  %v3546 = vld [vmem:[%s3542 + $0x18] sm:$0xff]
  %s3547 = scalar_lea.vmem %s11, 1
  %v3548 = vld [vmem:[%s3547] sm:$0x1]
  %v3550 = vlaneseq
  %v3551 = vshrl.u32 %v3550, 7
  %v3552 = vsub.s32 0, %v3551
  %v3553 = vrot.slane %v3548, %v3552
  %v3556 = vsel %vm69, %v3540, 0
  %v3559 = vsel %vm69, %v3541, 0
  %3561 = vmatprep.subr.mxu0 0.0
  %3562 = vmatpush1.msra.mxu0 %v3543
  %3563 = vmatprep.subr.mxu0 0.0
  %3564 = vmatpush1.msra.mxu0 %v3544
  %3565 = vmatprep.subr.mxu0 0.0
  %3566 = vmatpush1.msra.mxu0 %v3545
  %3567 = vmatprep.subr.mxu0 0.0
  %3568 = vmatpush1.msra.mxu0 %v3546
  %3569 = vmatprep.subr.mxu0 0.0
  %3570 = vmatpush1.msra.mxu0 0.0
  %3571 = vmatprep.subr.mxu0 0.0
  %3572 = vmatpush1.msra.mxu0 0.0
  %3573 = vmatprep.subr.mxu0 0.0
  %3574 = vmatpush1.msra.mxu0 0.0
  %3575 = vmatprep.subr.mxu0 0.0
  %3576 = vmatpush1.msra.mxu0 0.0
  %3577 = vmatprep.subr.mxu0 0.0
  %3578 = vmatpush1.msra.mxu0 0.0
  %3579 = vmatprep.subr.mxu0 0.0
  %3580 = vmatpush1.msra.mxu0 0.0
  %3581 = vmatprep.subr.mxu0 0.0
  %3582 = vmatpush1.msra.mxu0 0.0
  %3583 = vmatprep.subr.mxu0 0.0
  %3584 = vmatpush1.msra.mxu0 0.0
  %3585 = vmatprep.subr.mxu0 0.0
  %3586 = vmatpush1.msra.mxu0 0.0
  %3587 = vmatprep.subr.mxu0 0.0
  %3588 = vmatpush1.msra.mxu0 0.0
  %3589 = vmatprep.subr.mxu0 0.0
  %3590 = vmatpush1.msra.mxu0 0.0
  %3591 = vmatprep.subr.mxu0 0.0
  %3592 = vmatpush1.msra.mxu0 0.0
  %3593 = vmatprep.subr.mxu0 0.0
  %3594 = vmatpush1.msra.mxu0 0.0
  %3595 = vmatprep.subr.mxu0 0.0
  %3596 = vmatpush1.msra.mxu0 0.0
  %3597 = vmatprep.subr.mxu0 0.0
  %3598 = vmatpush1.msra.mxu0 0.0
  %3599 = vmatprep.subr.mxu0 0.0
  %3600 = vmatpush1.msra.mxu0 0.0
  %3601 = vmatprep.subr.mxu0 0.0
  %3602 = vmatpush1.msra.mxu0 0.0
  %3603 = vmatprep.subr.mxu0 0.0
  %3604 = vmatpush1.msra.mxu0 0.0
  %3605 = vmatprep.subr.mxu0 0.0
  %3606 = vmatpush1.msra.mxu0 0.0
  %3607 = vmatprep.subr.mxu0 0.0
  %3608 = vmatpush1.msra.mxu0 0.0
  %3609 = vmatprep.subr.mxu0 0.0
  %3610 = vmatpush1.msra.mxu0 0.0
  %3611 = vmatprep.subr.mxu0 0.0
  %3612 = vmatpush1.msra.mxu0 0.0
  %3613 = vmatprep.subr.mxu0 0.0
  %3614 = vmatpush1.msra.mxu0 0.0
  %3615 = vmatprep.subr.mxu0 0.0
  %3616 = vmatpush1.msra.mxu0 0.0
  %3617 = vmatprep.subr.mxu0 0.0
  %3618 = vmatpush1.msra.mxu0 0.0
  %3619 = vmatprep.subr.mxu0 0.0
  %3620 = vmatpush1.msra.mxu0 0.0
  %3621 = vmatprep.subr.mxu0 0.0
  %3622 = vmatpush1.msra.mxu0 0.0
  %3623 = vmatprep.subr.mxu0 0.0
  %3624 = vmatpush1.msra.mxu0 0.0
  %3625 = vmatprep.mubr.f32.mxu0 0.0
  %3626 = vmatmul.mubr.f32.gmra.mrb[0].mxu0 %v3556
  %v3627 = vpop.f32.mrb[0].mxu0
  %v3628 = vadd.f32 %v3553, %v3627
  %v3629 = vpop.f32.mrb[0].mxu0
  %3630 = vmatprep.mubr.f32.mxu0 0.0
  %3631 = vmatmul.mubr.f32.gmra.mrb[0].mxu0 %v3559
  %v3632 = vpop.f32.mrb[0].mxu0
  %v3633 = vadd.f32 %v3553, %v3632
  %v3634 = vpop.f32.mrb[0].mxu0
  %3635 = vdwg.mxu0
  %v3636 = vmul.f32 %v3628, 0.5
  %v3637 = vmul.f32 %v3633, 0.5
  %v3638 = vmul.f32 %v3628, 0.70710677
  %v3639 = vmul.f32 %v3633, 0.70710677
  %v3640 = verf.f32.pop %v3638
  %v3641 = verf.f32.pop %v3639
  %v3642 = vadd.f32 %v3640, 1.0
  %v3643 = vadd.f32 %v3641, 1.0
  %v3644 = vmul.f32 %v3636, %v3642
  %v3645 = vmul.f32 %v3637, %v3643
  %s3646 = scalar_lea.vmem %s12, 128
  %v3647 = vld [vmem:[%s3646] sm:$0xff]
  %v3648 = vld [vmem:[%s3646 + $0x8] sm:$0xff]
  %v3649 = vld [vmem:[%s3646 + $0x10] sm:$0xff]
  %v3650 = vld [vmem:[%s3646 + $0x18] sm:$0xff]
  %v3651 = vld [vmem:[%s3646 + $0x20] sm:$0xff]
  %v3652 = vld [vmem:[%s3646 + $0x28] sm:$0xff]
  %v3653 = vld [vmem:[%s3646 + $0x30] sm:$0xff]
  %v3654 = vld [vmem:[%s3646 + $0x38] sm:$0xff]
  %v3655 = vld [vmem:[%s3646 + $0x40] sm:$0xff]
  %v3656 = vld [vmem:[%s3646 + $0x48] sm:$0xff]
  %v3657 = vld [vmem:[%s3646 + $0x50] sm:$0xff]
  %v3658 = vld [vmem:[%s3646 + $0x58] sm:$0xff]
  %v3659 = vld [vmem:[%s3646 + $0x60] sm:$0xff]
  %v3660 = vld [vmem:[%s3646 + $0x68] sm:$0xff]
  %v3661 = vld [vmem:[%s3646 + $0x70] sm:$0xff]
  %v3662 = vld [vmem:[%s3646 + $0x78] sm:$0xff]
  %s3663 = scalar_lea.vmem %s13, 1
  %v3664 = vld [vmem:[%s3663] sm:$0x1]
  %v3666 = vlaneseq
  %v3667 = vshrl.u32 %v3666, 7
  %v3668 = vsub.s32 0, %v3667
  %v3669 = vrot.slane %v3664, %v3668
  %3671 = vmatprep.subr.mxu0 0.0
  %3672 = vmatpush1.msra.mxu0 %v3647
  %3673 = vmatprep.subr.mxu0 0.0
  %3674 = vmatpush1.msra.mxu0 %v3648
  %3675 = vmatprep.subr.mxu0 0.0
  %3676 = vmatpush1.msra.mxu0 %v3649
  %3677 = vmatprep.subr.mxu0 0.0
  %3678 = vmatpush1.msra.mxu0 %v3650
  %3679 = vmatprep.subr.mxu0 0.0
  %3680 = vmatpush1.msra.mxu0 %v3651
  %3681 = vmatprep.subr.mxu0 0.0
  %3682 = vmatpush1.msra.mxu0 %v3652
  %3683 = vmatprep.subr.mxu0 0.0
  %3684 = vmatpush1.msra.mxu0 %v3653
  %3685 = vmatprep.subr.mxu0 0.0
  %3686 = vmatpush1.msra.mxu0 %v3654
  %3687 = vmatprep.subr.mxu0 0.0
  %3688 = vmatpush1.msra.mxu0 %v3655
  %3689 = vmatprep.subr.mxu0 0.0
  %3690 = vmatpush1.msra.mxu0 %v3656
  %3691 = vmatprep.subr.mxu0 0.0
  %3692 = vmatpush1.msra.mxu0 %v3657
  %3693 = vmatprep.subr.mxu0 0.0
  %3694 = vmatpush1.msra.mxu0 %v3658
  %3695 = vmatprep.subr.mxu0 0.0
  %3696 = vmatpush1.msra.mxu0 %v3659
  %3697 = vmatprep.subr.mxu0 0.0
  %3698 = vmatpush1.msra.mxu0 %v3660
  %3699 = vmatprep.subr.mxu0 0.0
  %3700 = vmatpush1.msra.mxu0 %v3661
  %3701 = vmatprep.subr.mxu0 0.0
  %3702 = vmatpush1.msra.mxu0 %v3662
  %3703 = vmatprep.subr.mxu0 0.0
  %3704 = vmatpush1.msra.mxu0 0.0
  %3705 = vmatprep.subr.mxu0 0.0
  %3706 = vmatpush1.msra.mxu0 0.0
  %3707 = vmatprep.subr.mxu0 0.0
  %3708 = vmatpush1.msra.mxu0 0.0
  %3709 = vmatprep.subr.mxu0 0.0
  %3710 = vmatpush1.msra.mxu0 0.0
  %3711 = vmatprep.subr.mxu0 0.0
  %3712 = vmatpush1.msra.mxu0 0.0
  %3713 = vmatprep.subr.mxu0 0.0
  %3714 = vmatpush1.msra.mxu0 0.0
  %3715 = vmatprep.subr.mxu0 0.0
  %3716 = vmatpush1.msra.mxu0 0.0
  %3717 = vmatprep.subr.mxu0 0.0
  %3718 = vmatpush1.msra.mxu0 0.0
  %3719 = vmatprep.subr.mxu0 0.0
  %3720 = vmatpush1.msra.mxu0 0.0
  %3721 = vmatprep.subr.mxu0 0.0
  %3722 = vmatpush1.msra.mxu0 0.0
  %3723 = vmatprep.subr.mxu0 0.0
  %3724 = vmatpush1.msra.mxu0 0.0
  %3725 = vmatprep.subr.mxu0 0.0
  %3726 = vmatpush1.msra.mxu0 0.0
  %3727 = vmatprep.subr.mxu0 0.0
  %3728 = vmatpush1.msra.mxu0 0.0
  %3729 = vmatprep.subr.mxu0 0.0
  %3730 = vmatpush1.msra.mxu0 0.0
  %3731 = vmatprep.subr.mxu0 0.0
  %3732 = vmatpush1.msra.mxu0 0.0
  %3733 = vmatprep.subr.mxu0 0.0
  %3734 = vmatpush1.msra.mxu0 0.0
  %3735 = vmatprep.mubr.f32.mxu0 0.0
  %3736 = vmatmul.mubr.f32.gmra.mrb[0].mxu0 %v3644
  %v3737 = vpop.f32.mrb[0].mxu0
  %v3738 = vadd.f32 %v3669, %v3737
  %v3739 = vpop.f32.mrb[0].mxu0
  %3740 = vmatprep.mubr.f32.mxu0 0.0
  %3741 = vmatmul.mubr.f32.gmra.mrb[0].mxu0 %v3645
  %v3742 = vpop.f32.mrb[0].mxu0
  %v3743 = vadd.f32 %v3669, %v3742
  %v3744 = vpop.f32.mrb[0].mxu0
  %3745 = vdwg.mxu0
  %v3746 = vadd.f32 %v3738, %v3540
  %v3747 = vadd.f32 %v3743, %v3541
  %s3748 = scalar_lea.vmem %s14, 1
  %v3749 = vld [vmem:[%s3748] sm:$0x1]
  %s3750 = scalar_lea.vmem %s15, 1
  %v3751 = vld [vmem:[%s3750] sm:$0x1]
  %v3752 = vsel %vm69, %v3746, 0.0
  %3753 = vadd.xlane.f32.xlu0 %v3752
  %v3754 = vpop.xlane.xlu0 %3753
  %v3755 = vsel %vm69, %v3747, 0.0
  %3756 = vadd.xlane.f32.xlu0 %v3755
  %v3757 = vpop.xlane.xlu0 %3756
  %v3758 = vmul.f32 %v3754, %v76
  %v3759 = vmul.f32 %v3757, %v76
  %v3760 = vsub.f32 %v3746, %v3758
  %v3761 = vsub.f32 %v3747, %v3759
  %v3762 = vmul.f32 %v3760, %v3760
  %v3763 = vmul.f32 %v3761, %v3761
  %v3764 = vsel %vm69, %v3762, 0.0
  %3765 = vadd.xlane.f32.xlu0 %v3764
  %v3766 = vpop.xlane.xlu0 %3765
  %v3767 = vsel %vm69, %v3763, 0.0
  %3768 = vadd.xlane.f32.xlu0 %v3767
  %v3769 = vpop.xlane.xlu0 %3768
  %v3770 = vmul.f32 %v3766, %v76
  %v3771 = vmul.f32 %v3769, %v76
  %v3772 = vadd.f32 %v3770, 1e-12
  %v3773 = vadd.f32 %v3771, 1e-12
  %v3774 = vrsqrt.pop %v3772
  %v3775 = vrsqrt.pop %v3773
  %v3776 = vmul.f32 %v3760, %v3774
  %v3777 = vmul.f32 %v3761, %v3775
  %v3779 = vlaneseq
  %v3780 = vshrl.u32 %v3779, 7
  %v3781 = vsub.s32 0, %v3780
  %v3782 = vrot.slane %v3749, %v3781
  %v3784 = vmul.f32 %v3776, %v3782
  %v3785 = vmul.f32 %v3777, %v3782
  %v3787 = vlaneseq
  %v3788 = vshrl.u32 %v3787, 7
  %v3789 = vsub.s32 0, %v3788
  %v3790 = vrot.slane %v3751, %v3789
  %v3792 = vadd.f32 %v3784, %v3790
  %v3793 = vadd.f32 %v3785, %v3790
  %v3795 = vrot.slane %v3793, 7
  %vm3797 = vcmask 1040384
  %v3798 = vsel %vm3797, %v3792, %v3795
  %v3799 = vld [vmem:[%s16] sm:$0xff]
  %v3800 = vld [vmem:[%s16 + $0x8] sm:$0xff]
  %v3801 = vld [vmem:[%s16 + $0x10] sm:$0xff]
  %v3802 = vld [vmem:[%s16 + $0x18] sm:$0xff]
  %v3803 = vld [vmem:[%s17] sm:$0x1]
  %v3805 = vlaneseq
  %v3806 = vshrl.u32 %v3805, 7
  %v3807 = vsub.s32 0, %v3806
  %v3808 = vrot.slane %v3803, %v3807
  %v3811 = vsel %vm69, %v3798, 0
  %3813 = vmatprep.subr.mxu0 0.0
  %3814 = vmatpush1.msra.mxu0 %v3799
  %3815 = vmatprep.subr.mxu0 0.0
  %3816 = vmatpush1.msra.mxu0 %v3800
  %3817 = vmatprep.subr.mxu0 0.0
  %3818 = vmatpush1.msra.mxu0 %v3801
  %3819 = vmatprep.subr.mxu0 0.0
  %3820 = vmatpush1.msra.mxu0 %v3802
  %3821 = vmatprep.subr.mxu0 0.0
  %3822 = vmatpush1.msra.mxu0 0.0
  %3823 = vmatprep.subr.mxu0 0.0
  %3824 = vmatpush1.msra.mxu0 0.0
  %3825 = vmatprep.subr.mxu0 0.0
  %3826 = vmatpush1.msra.mxu0 0.0
  %3827 = vmatprep.subr.mxu0 0.0
  %3828 = vmatpush1.msra.mxu0 0.0
  %3829 = vmatprep.subr.mxu0 0.0
  %3830 = vmatpush1.msra.mxu0 0.0
  %3831 = vmatprep.subr.mxu0 0.0
  %3832 = vmatpush1.msra.mxu0 0.0
  %3833 = vmatprep.subr.mxu0 0.0
  %3834 = vmatpush1.msra.mxu0 0.0
  %3835 = vmatprep.subr.mxu0 0.0
  %3836 = vmatpush1.msra.mxu0 0.0
  %3837 = vmatprep.subr.mxu0 0.0
  %3838 = vmatpush1.msra.mxu0 0.0
  %3839 = vmatprep.subr.mxu0 0.0
  %3840 = vmatpush1.msra.mxu0 0.0
  %3841 = vmatprep.subr.mxu0 0.0
  %3842 = vmatpush1.msra.mxu0 0.0
  %3843 = vmatprep.subr.mxu0 0.0
  %3844 = vmatpush1.msra.mxu0 0.0
  %3845 = vmatprep.subr.mxu0 0.0
  %3846 = vmatpush1.msra.mxu0 0.0
  %3847 = vmatprep.subr.mxu0 0.0
  %3848 = vmatpush1.msra.mxu0 0.0
  %3849 = vmatprep.subr.mxu0 0.0
  %3850 = vmatpush1.msra.mxu0 0.0
  %3851 = vmatprep.subr.mxu0 0.0
  %3852 = vmatpush1.msra.mxu0 0.0
  %3853 = vmatprep.subr.mxu0 0.0
  %3854 = vmatpush1.msra.mxu0 0.0
  %3855 = vmatprep.subr.mxu0 0.0
  %3856 = vmatpush1.msra.mxu0 0.0
  %3857 = vmatprep.subr.mxu0 0.0
  %3858 = vmatpush1.msra.mxu0 0.0
  %3859 = vmatprep.subr.mxu0 0.0
  %3860 = vmatpush1.msra.mxu0 0.0
  %3861 = vmatprep.subr.mxu0 0.0
  %3862 = vmatpush1.msra.mxu0 0.0
  %3863 = vmatprep.subr.mxu0 0.0
  %3864 = vmatpush1.msra.mxu0 0.0
  %3865 = vmatprep.subr.mxu0 0.0
  %3866 = vmatpush1.msra.mxu0 0.0
  %3867 = vmatprep.subr.mxu0 0.0
  %3868 = vmatpush1.msra.mxu0 0.0
  %3869 = vmatprep.subr.mxu0 0.0
  %3870 = vmatpush1.msra.mxu0 0.0
  %3871 = vmatprep.subr.mxu0 0.0
  %3872 = vmatpush1.msra.mxu0 0.0
  %3873 = vmatprep.subr.mxu0 0.0
  %3874 = vmatpush1.msra.mxu0 0.0
  %3875 = vmatprep.subr.mxu0 0.0
  %3876 = vmatpush1.msra.mxu0 0.0
  %3877 = vmatprep.mubr.f32.mxu0 0.0
  %3878 = vmatmul.mubr.f32.gmra.mrb[0].mxu0 %v3811
  %v3879 = vpop.f32.mrb[0].mxu0
  %v3880 = vadd.f32 %v3808, %v3879
  %v3881 = vpop.f32.mrb[0].mxu0
  %3882 = vdwg.mxu0
  %v3883 = vtanh.pop %v3880
  %v3884 = vld [vmem:[%s18] sm:$0xff]
  %v3885 = vld [vmem:[%s18 + $0x8] sm:$0xff]
  %v3886 = vld [vmem:[%s18 + $0x10] sm:$0xff]
  %v3887 = vld [vmem:[%s18 + $0x18] sm:$0xff]
  %v3888 = vld [vmem:[%s19] sm:$0x1]
  %v3890 = vlaneseq
  %v3891 = vshrl.u32 %v3890, 7
  %v3892 = vsub.s32 0, %v3891
  %v3893 = vrot.slane %v3888, %v3892
  %v3896 = vsel %vm69, %v3883, 0
  %3898 = vmatprep.subr.mxu0 0.0
  %3899 = vmatpush1.msra.mxu0 %v3884
  %3900 = vmatprep.subr.mxu0 0.0
  %3901 = vmatpush1.msra.mxu0 %v3885
  %3902 = vmatprep.subr.mxu0 0.0
  %3903 = vmatpush1.msra.mxu0 %v3886
  %3904 = vmatprep.subr.mxu0 0.0
  %3905 = vmatpush1.msra.mxu0 %v3887
  %3906 = vmatprep.subr.mxu0 0.0
  %3907 = vmatpush1.msra.mxu0 0.0
  %3908 = vmatprep.subr.mxu0 0.0
  %3909 = vmatpush1.msra.mxu0 0.0
  %3910 = vmatprep.subr.mxu0 0.0
  %3911 = vmatpush1.msra.mxu0 0.0
  %3912 = vmatprep.subr.mxu0 0.0
  %3913 = vmatpush1.msra.mxu0 0.0
  %3914 = vmatprep.subr.mxu0 0.0
  %3915 = vmatpush1.msra.mxu0 0.0
  %3916 = vmatprep.subr.mxu0 0.0
  %3917 = vmatpush1.msra.mxu0 0.0
  %3918 = vmatprep.subr.mxu0 0.0
  %3919 = vmatpush1.msra.mxu0 0.0
  %3920 = vmatprep.subr.mxu0 0.0
  %3921 = vmatpush1.msra.mxu0 0.0
  %3922 = vmatprep.subr.mxu0 0.0
  %3923 = vmatpush1.msra.mxu0 0.0
  %3924 = vmatprep.subr.mxu0 0.0
  %3925 = vmatpush1.msra.mxu0 0.0
  %3926 = vmatprep.subr.mxu0 0.0
  %3927 = vmatpush1.msra.mxu0 0.0
  %3928 = vmatprep.subr.mxu0 0.0
  %3929 = vmatpush1.msra.mxu0 0.0
  %3930 = vmatprep.subr.mxu0 0.0
  %3931 = vmatpush1.msra.mxu0 0.0
  %3932 = vmatprep.subr.mxu0 0.0
  %3933 = vmatpush1.msra.mxu0 0.0
  %3934 = vmatprep.subr.mxu0 0.0
  %3935 = vmatpush1.msra.mxu0 0.0
  %3936 = vmatprep.subr.mxu0 0.0
  %3937 = vmatpush1.msra.mxu0 0.0
  %3938 = vmatprep.subr.mxu0 0.0
  %3939 = vmatpush1.msra.mxu0 0.0
  %3940 = vmatprep.subr.mxu0 0.0
  %3941 = vmatpush1.msra.mxu0 0.0
  %3942 = vmatprep.subr.mxu0 0.0
  %3943 = vmatpush1.msra.mxu0 0.0
  %3944 = vmatprep.subr.mxu0 0.0
  %3945 = vmatpush1.msra.mxu0 0.0
  %3946 = vmatprep.subr.mxu0 0.0
  %3947 = vmatpush1.msra.mxu0 0.0
  %3948 = vmatprep.subr.mxu0 0.0
  %3949 = vmatpush1.msra.mxu0 0.0
  %3950 = vmatprep.subr.mxu0 0.0
  %3951 = vmatpush1.msra.mxu0 0.0
  %3952 = vmatprep.subr.mxu0 0.0
  %3953 = vmatpush1.msra.mxu0 0.0
  %3954 = vmatprep.subr.mxu0 0.0
  %3955 = vmatpush1.msra.mxu0 0.0
  %3956 = vmatprep.subr.mxu0 0.0
  %3957 = vmatpush1.msra.mxu0 0.0
  %3958 = vmatprep.subr.mxu0 0.0
  %3959 = vmatpush1.msra.mxu0 0.0
  %3960 = vmatprep.subr.mxu0 0.0
  %3961 = vmatpush1.msra.mxu0 0.0
  %3962 = vmatprep.mubr.f32.mxu0 0.0
  %3963 = vmatmul.mubr.f32.gmra.mrb[0].mxu0 %v3896
  %v3964 = vpop.f32.mrb[0].mxu0
  %v3965 = vadd.f32 %v3893, %v3964
  %v3966 = vpop.f32.mrb[0].mxu0
  %3967 = vdwg.mxu0
  %3968 = vst [vmem:[%s20] sm:$0x3] %v3965
  // Predicated region
  $region82: #{bert_classifier_forward.1} parent=0 // pred_check
    _
  $region83: #{bert_classifier_forward.1} parent=0 // pred_check_branch
    %3970 = sbr.rel (0) target = $region85
  $region84: #{bert_classifier_forward.1} parent=0 // pred_region
    _
  $region85: #{bert_classifier_forward.1} parent=0 // pred_fallthru
    _
  // Predicated region
  $region86: #{bert_classifier_forward.1} parent=0 // pred_check
    _
  $region87: #{bert_classifier_forward.1} parent=0 // pred_check_branch
    %3972 = sbr.rel (0) target = $region89
  $region88: #{bert_classifier_forward.1} parent=0 // pred_region
    _
  $region89: #{bert_classifier_forward.1} parent=0 // pred_fallthru
    _

</llo_original>
